<compile_context>
chip_gen: v5e
topology: v5e:2x2
jax: 0.10.0
libtpu: 0.0.40
codegen_flags: <defaults>
</compile_context>

<pallas_src>
import jax
import jax.numpy as jnp
import numpy as np
from jax.experimental import pallas as pl
from jax.experimental.pallas import tpu as pltpu

FEAT = 1024  # global feature width


def _backbone_kernel(x_ref,
                     w1_ref, b1_ref, w2_ref, b2_ref, w3_ref, b3_ref,
                     wg_ref,
                     out_ref):
    """Per-point MLP 3->64->128->256->1024 (no final bias) + running max.

    out_ref is the (8, FEAT) partial-max accumulator for this (batch, split)
    slice; it stays VMEM-resident across the reduction axis (constant output
    block index along n)."""
    n = pl.program_id(2)

    x = x_ref[...]                                                    # (TN, 8) bf16
    h = jnp.dot(x, w1_ref[...], preferred_element_type=jnp.float32) + b1_ref[...]
    h = jnp.maximum(h.astype(jnp.bfloat16), 0)                        # (TN, 64)
    h = jnp.dot(h, w2_ref[...], preferred_element_type=jnp.float32) + b2_ref[...]
    h = jnp.maximum(h.astype(jnp.bfloat16), 0)                        # (TN, 128)
    h = jnp.dot(h, w3_ref[...], preferred_element_type=jnp.float32) + b3_ref[...]
    h = jnp.maximum(h.astype(jnp.bfloat16), 0)                        # (TN, 256)
    g = jnp.dot(h, wg_ref[...], preferred_element_type=jnp.float32)   # (TN, 1024) f32

    # Sublane-aligned partial max: (TN//8, 8, 1024) reduced over axis 0 is a
    # pure VPU elementwise max (same sublane position across vregs).
    tn = g.shape[0]
    tile_max = jnp.max(g.reshape(tn // 8, 8, FEAT), axis=0)           # (8, 1024)

    @pl.when(n == 0)
    def _():
        out_ref[...] = tile_max

    @pl.when(n > 0)
    def _():
        out_ref[...] = jnp.maximum(out_ref[...], tile_max)


def pointnetpp_forward(x, params, *, tn=512, splits=2):
    """x: (B, N, 3) float32.  params: dict from make_params.
    Returns logits (B, num_classes)."""
    B, N, C = x.shape
    assert C == 3 and tn % 8 == 0 and N % (splits * tn) == 0
    npb = N // (splits * tn)  # point tiles per core-split

    # Zero-pad xyz -> 8 channels (avoid a K=3 MXU pass) and cast to bf16 in
    # the wrapper so the kernel streams half the bytes and does no casts.
    x_pad = jnp.concatenate(
        [x, jnp.zeros((B, N, 8 - C), x.dtype)], axis=-1).astype(jnp.bfloat16)

    # Backbone weights in bf16 (MXU operands); biases stay f32.  w1 is padded
    # with zero rows to match the 8-channel input (mathematically identical).
    w1 = jnp.concatenate(
        [params["w1"],
         jnp.zeros((8 - C, params["w1"].shape[1]), params["w1"].dtype)],
        axis=0).astype(jnp.bfloat16)
    w2 = params["w2"].astype(jnp.bfloat16)
    w3 = params["w3"].astype(jnp.bfloat16)
    wg = params["wg"].astype(jnp.bfloat16)
    b1, b2, b3 = params["b1"], params["b2"], params["b3"]
    weight_args = [w1, b1, w2, b2, w3, b3, wg]   # bg hoisted past the max pool

    def full_spec(arr):
        # Grid-invariant: constant block index => tile DMA'd once, resident.
        nd = arr.ndim
        return pl.BlockSpec(arr.shape, lambda b, s, n, _nd=nd: (0,) * _nd)

    in_specs = [pl.BlockSpec((None, tn, 8),
                             lambda b, s, n, _npb=npb: (b, s * _npb + n, 0))] + \
               [full_spec(a) for a in weight_args]

    partial = pl.pallas_call(
        _backbone_kernel,
        out_shape=jax.ShapeDtypeStruct((B, splits, 8, FEAT), jnp.float32),
        grid_spec=pltpu.PrefetchScalarGridSpec(
            num_scalar_prefetch=0,
            grid=(B, splits, npb),    # B and split axes "parallel" -> megacore
            in_specs=in_specs,
            out_specs=pl.BlockSpec((None, None, 8, FEAT),
                                   lambda b, s, n: (b, s, 0, 0)),
        ),
        compiler_params=pltpu.CompilerParams(
            dimension_semantics=("parallel", "parallel", "arbitrary"),
        ),
    )(x_pad, *weight_args)

    # Final reduce over (split, sublane) partial maxes + hoisted bias (exact:
    # max(g + b) == max(g) + b), then the classifier head as batched XLA
    # matmuls (M = B fills MXU rows).  Dropout = identity (eval mode).
    pooled = jnp.max(partial, axis=(1, 2)) + params["bg"]             # (B, 1024)
    f = jax.nn.relu(pooled @ params["wf1"] + params["bf1"])
    f = jax.nn.relu(f @ params["wf2"] + params["bf2"])
    return f @ params["wf3"] + params["bf3"]


def make_params(key, num_classes):
    """Deterministic synthetic parameters with the shapes implied by __init__.
    Weights are stored transposed vs. PyTorch (C_in, C_out) so the kernel can
    right-multiply; biases stored as (1, C_out)."""
    dims = [
        ("w1", (3, 64)), ("b1", (1, 64)),
        ("w2", (64, 128)), ("b2", (1, 128)),
        ("w3", (128, 256)), ("b3", (1, 256)),
        ("wg", (256, 1024)), ("bg", (1, 1024)),
        ("wf1", (1024, 512)), ("bf1", (1, 512)),
        ("wf2", (512, 256)), ("bf2", (1, 256)),
        ("wf3", (256, num_classes)), ("bf3", (1, num_classes)),
    ]
    params = {}
    keys = jax.random.split(key, len(dims))
    for (name, shape), k in zip(dims, keys):
        fan_in = shape[0] if name.startswith("w") else 1
        scale = 1.0 / np.sqrt(fan_in)
        params[name] = (scale * jax.random.normal(k, shape)).astype(jnp.float32)
    return params


def reference_forward(x, p, *, matmul_dtype=jnp.float32):
    """Pure-JAX reference of the PyTorch forward (eval mode).
    matmul_dtype=jnp.bfloat16 mirrors the kernel's precision scheme
    (bf16 matmul operands, f32 accumulation) for a tight structural check."""
    c = lambda a: a.astype(matmul_dtype)
    mm = lambda a, w: jnp.dot(c(a), c(w), preferred_element_type=jnp.float32)
    h = jax.nn.relu(mm(x, p["w1"]) + p["b1"])
    h = jax.nn.relu(mm(h, p["w2"]) + p["b2"])
    h = jax.nn.relu(mm(h, p["w3"]) + p["b3"])
    g = mm(h, p["wg"]) + p["bg"]
    f = jnp.max(g, axis=1)                        # max over points
    f = jax.nn.relu(f @ p["wf1"] + p["bf1"])
    f = jax.nn.relu(f @ p["wf2"] + p["bf2"])
    return f @ p["wf3"] + p["bf3"]


if __name__ == "__main__":
    key = jax.random.PRNGKey(0)
    k_x, k_p = jax.random.split(key)

    B, N, num_classes = 2, 2048, 16
    x = jax.random.normal(k_x, (B, N, 3), dtype=jnp.float32)
    params = make_params(k_p, num_classes)

    out = jax.block_until_ready(pointnetpp_forward(x, params, tn=512, splits=2))
    assert out.shape == (B, num_classes)

    # Tight check vs. a reference that mirrors the kernel's bf16-operand /
    # f32-accumulation scheme (validates fusion / tiling / max-pool / bias
    # hoist logic).
    ref_matched = jax.block_until_ready(
        reference_forward(x, params, matmul_dtype=jnp.bfloat16))
    np.testing.assert_allclose(np.asarray(out), np.asarray(ref_matched),
                               rtol=2e-2, atol=2e-2)

    # Loose sanity check vs. the full-f32 reference (bounds bf16 rounding drift).
    ref_f32 = jax.block_until_ready(reference_forward(x, params))
    np.testing.assert_allclose(np.asarray(out), np.asarray(ref_f32),
                               rtol=1.5e-1, atol=1.5e-1)

    print("KERNEL_OK")
</pallas_src>

<mosaic_0001>
module attributes {stable_mosaic.version = 11 : i64} {
  func.func @_backbone_kernel(%arg0: i32, %arg1: i32, %arg2: i32, %arg3: memref<1x512x8xbf16, #tpu.memory_space<vmem>>, %arg4: memref<8x64xbf16, #tpu.memory_space<vmem>>, %arg5: memref<1x64xf32, #tpu.memory_space<vmem>>, %arg6: memref<64x128xbf16, #tpu.memory_space<vmem>>, %arg7: memref<1x128xf32, #tpu.memory_space<vmem>>, %arg8: memref<128x256xbf16, #tpu.memory_space<vmem>>, %arg9: memref<1x256xf32, #tpu.memory_space<vmem>>, %arg10: memref<256x1024xbf16, #tpu.memory_space<vmem>>, %arg11: memref<1x1x8x1024xf32, #tpu.memory_space<vmem>>) attributes {dimension_semantics = [#tpu.dimension_semantics<parallel>, #tpu.dimension_semantics<parallel>, #tpu.dimension_semantics<arbitrary>], iteration_bounds = array<i64: 2, 2, 2>, scalar_prefetch = 0 : i64, scratch_operands = 0 : i64, tpu.core_type = #tpu.core_type<tc>, window_params = [{transform_indices = @transform_0, window_bounds = array<i64: 1, 512, 8>}, {pipeline_mode = #tpu.pipeline_mode<synchronous>, transform_indices = @transform_1, window_bounds = array<i64: 8, 64>}, {pipeline_mode = #tpu.pipeline_mode<synchronous>, transform_indices = @transform_2, window_bounds = array<i64: 1, 64>}, {pipeline_mode = #tpu.pipeline_mode<synchronous>, transform_indices = @transform_3, window_bounds = array<i64: 64, 128>}, {pipeline_mode = #tpu.pipeline_mode<synchronous>, transform_indices = @transform_4, window_bounds = array<i64: 1, 128>}, {pipeline_mode = #tpu.pipeline_mode<synchronous>, transform_indices = @transform_5, window_bounds = array<i64: 128, 256>}, {pipeline_mode = #tpu.pipeline_mode<synchronous>, transform_indices = @transform_6, window_bounds = array<i64: 1, 256>}, {pipeline_mode = #tpu.pipeline_mode<synchronous>, transform_indices = @transform_7, window_bounds = array<i64: 256, 1024>}, {transform_indices = @transform_8, window_bounds = array<i64: 1, 1, 8, 1024>}]} {
    %c0 = arith.constant 0 : index
    %c0_0 = arith.constant 0 : index
    %c0_1 = arith.constant 0 : index
    %0 = vector.load %arg3[%c0, %c0_0, %c0_1] : memref<1x512x8xbf16, #tpu.memory_space<vmem>>, vector<1x512x8xbf16>
    %1 = vector.shape_cast %0 : vector<1x512x8xbf16> to vector<512x8xbf16>
    %c0_2 = arith.constant 0 : index
    %c0_3 = arith.constant 0 : index
    %2 = vector.load %arg4[%c0_2, %c0_3] : memref<8x64xbf16, #tpu.memory_space<vmem>>, vector<8x64xbf16>
    %cst = arith.constant dense<0.000000e+00> : vector<512x64xf32>
    %3 = tpu.matmul %1, %2, %cst {dimension_numbers = #tpu.dot_dimension_numbers<[1], [0], [0], [1], [0, 0, 1, 1], [], []>} : vector<512x8xbf16>, vector<8x64xbf16>, vector<512x64xf32> -> vector<512x64xf32>
    %c0_4 = arith.constant 0 : index
    %c0_5 = arith.constant 0 : index
    %4 = vector.load %arg5[%c0_4, %c0_5] : memref<1x64xf32, #tpu.memory_space<vmem>>, vector<1x64xf32>
    %5 = vector.broadcast %4 : vector<1x64xf32> to vector<512x64xf32>
    %6 = arith.addf %3, %5 : vector<512x64xf32>
    %7 = arith.truncf %6 : vector<512x64xf32> to vector<512x64xbf16>
    %cst_6 = arith.constant 0.000000e+00 : bf16
    %8 = vector.broadcast %cst_6 : bf16 to vector<512x64xbf16>
    %9 = arith.maximumf %7, %8 : vector<512x64xbf16>
    %c0_7 = arith.constant 0 : index
    %c0_8 = arith.constant 0 : index
    %10 = vector.load %arg6[%c0_7, %c0_8] : memref<64x128xbf16, #tpu.memory_space<vmem>>, vector<64x128xbf16>
    %cst_9 = arith.constant dense<0.000000e+00> : vector<512x128xf32>
    %11 = tpu.matmul %9, %10, %cst_9 {dimension_numbers = #tpu.dot_dimension_numbers<[1], [0], [0], [1], [0, 0, 1, 1], [], []>} : vector<512x64xbf16>, vector<64x128xbf16>, vector<512x128xf32> -> vector<512x128xf32>
    %c0_10 = arith.constant 0 : index
    %c0_11 = arith.constant 0 : index
    %12 = vector.load %arg7[%c0_10, %c0_11] : memref<1x128xf32, #tpu.memory_space<vmem>>, vector<1x128xf32>
    %13 = vector.broadcast %12 : vector<1x128xf32> to vector<512x128xf32>
    %14 = arith.addf %11, %13 : vector<512x128xf32>
    %15 = arith.truncf %14 : vector<512x128xf32> to vector<512x128xbf16>
    %cst_12 = arith.constant 0.000000e+00 : bf16
    %16 = vector.broadcast %cst_12 : bf16 to vector<512x128xbf16>
    %17 = arith.maximumf %15, %16 : vector<512x128xbf16>
    %c0_13 = arith.constant 0 : index
    %c0_14 = arith.constant 0 : index
    %18 = vector.load %arg8[%c0_13, %c0_14] : memref<128x256xbf16, #tpu.memory_space<vmem>>, vector<128x256xbf16>
    %cst_15 = arith.constant dense<0.000000e+00> : vector<512x256xf32>
    %19 = tpu.matmul %17, %18, %cst_15 {dimension_numbers = #tpu.dot_dimension_numbers<[1], [0], [0], [1], [0, 0, 1, 1], [], []>} : vector<512x128xbf16>, vector<128x256xbf16>, vector<512x256xf32> -> vector<512x256xf32>
    %c0_16 = arith.constant 0 : index
    %c0_17 = arith.constant 0 : index
    %20 = vector.load %arg9[%c0_16, %c0_17] : memref<1x256xf32, #tpu.memory_space<vmem>>, vector<1x256xf32>
    %21 = vector.broadcast %20 : vector<1x256xf32> to vector<512x256xf32>
    %22 = arith.addf %19, %21 : vector<512x256xf32>
    %23 = arith.truncf %22 : vector<512x256xf32> to vector<512x256xbf16>
    %cst_18 = arith.constant 0.000000e+00 : bf16
    %24 = vector.broadcast %cst_18 : bf16 to vector<512x256xbf16>
    %25 = arith.maximumf %23, %24 : vector<512x256xbf16>
    %c0_19 = arith.constant 0 : index
    %c0_20 = arith.constant 0 : index
    %26 = vector.load %arg10[%c0_19, %c0_20] : memref<256x1024xbf16, #tpu.memory_space<vmem>>, vector<256x1024xbf16>
    %cst_21 = arith.constant dense<0.000000e+00> : vector<512x1024xf32>
    %27 = tpu.matmul %25, %26, %cst_21 {dimension_numbers = #tpu.dot_dimension_numbers<[1], [0], [0], [1], [0, 0, 1, 1], [], []>} : vector<512x256xbf16>, vector<256x1024xbf16>, vector<512x1024xf32> -> vector<512x1024xf32>
    %28 = vector.shape_cast %27 : vector<512x1024xf32> to vector<64x8x1024xf32>
    %cst_22 = arith.constant dense<0xFF800000> : vector<8x1024xf32>
    %29 = vector.multi_reduction <maximumf>, %28, %cst_22 [0] : vector<64x8x1024xf32> to vector<8x1024xf32>
    %c0_i32 = arith.constant 0 : i32
    %30 = arith.cmpi eq, %arg2, %c0_i32 : i32
    %31 = arith.extui %30 : i1 to i32
    %c0_i32_23 = arith.constant 0 : i32
    %32 = arith.cmpi ne, %31, %c0_i32_23 : i32
    scf.if %32 {
      %c0_26 = arith.constant 0 : index
      %c0_27 = arith.constant 0 : index
      %c0_28 = arith.constant 0 : index
      %c0_29 = arith.constant 0 : index
      %36 = vector.load %arg11[%c0_26, %c0_27, %c0_28, %c0_29] : memref<1x1x8x1024xf32, #tpu.memory_space<vmem>>, vector<1x1x8x1024xf32>
      %37 = vector.shape_cast %36 : vector<1x1x8x1024xf32> to vector<8x1024xf32>
      %38 = vector.shape_cast %29 : vector<8x1024xf32> to vector<1x1x8x1024xf32>
      tpu.vector_store %arg11[%c0_26, %c0_27, %c0_28, %c0_29], %38 {strides = array<i32>} : memref<1x1x8x1024xf32, #tpu.memory_space<vmem>>, vector<1x1x8x1024xf32>,
    } else {
    }
    %c0_i32_24 = arith.constant 0 : i32
    %33 = arith.cmpi sgt, %arg2, %c0_i32_24 : i32
    %34 = arith.extui %33 : i1 to i32
    %c0_i32_25 = arith.constant 0 : i32
    %35 = arith.cmpi ne, %34, %c0_i32_25 : i32
    scf.if %35 {
      %c0_26 = arith.constant 0 : index
      %c0_27 = arith.constant 0 : index
      %c0_28 = arith.constant 0 : index
      %c0_29 = arith.constant 0 : index
      %36 = vector.load %arg11[%c0_26, %c0_27, %c0_28, %c0_29] : memref<1x1x8x1024xf32, #tpu.memory_space<vmem>>, vector<1x1x8x1024xf32>
      %37 = vector.shape_cast %36 : vector<1x1x8x1024xf32> to vector<8x1024xf32>
      %38 = arith.maximumf %37, %29 : vector<8x1024xf32>
      %c0_30 = arith.constant 0 : index
      %c0_31 = arith.constant 0 : index
      %c0_32 = arith.constant 0 : index
      %c0_33 = arith.constant 0 : index
      %39 = vector.load %arg11[%c0_30, %c0_31, %c0_32, %c0_33] : memref<1x1x8x1024xf32, #tpu.memory_space<vmem>>, vector<1x1x8x1024xf32>
      %40 = vector.shape_cast %39 : vector<1x1x8x1024xf32> to vector<8x1024xf32>
      %41 = vector.shape_cast %38 : vector<8x1024xf32> to vector<1x1x8x1024xf32>
      tpu.vector_store %arg11[%c0_30, %c0_31, %c0_32, %c0_33], %41 {strides = array<i32>} : memref<1x1x8x1024xf32, #tpu.memory_space<vmem>>, vector<1x1x8x1024xf32>,
    } else {
    }
    return
  }
  func.func @transform_0(%arg0: i32, %arg1: i32, %arg2: i32) -> (i32, i32, i32) {
    %c2_i32 = arith.constant 2 : i32
    %0 = arith.muli %arg1, %c2_i32 : i32
    %1 = arith.addi %0, %arg2 : i32
    %c0_i32 = arith.constant 0 : i32
    %c0_i32_0 = arith.constant 0 : i32
    return %arg0, %1, %c0_i32 : i32, i32, i32
  }
  func.func @transform_1(%arg0: i32, %arg1: i32, %arg2: i32) -> (i32, i32) {
    %c0_i32 = arith.constant 0 : i32
    %c0_i32_0 = arith.constant 0 : i32
    %c0_i32_1 = arith.constant 0 : i32
    return %c0_i32, %c0_i32_0 : i32, i32
  }
  func.func @transform_2(%arg0: i32, %arg1: i32, %arg2: i32) -> (i32, i32) {
    %c0_i32 = arith.constant 0 : i32
    %c0_i32_0 = arith.constant 0 : i32
    %c0_i32_1 = arith.constant 0 : i32
    return %c0_i32, %c0_i32_0 : i32, i32
  }
  func.func @transform_3(%arg0: i32, %arg1: i32, %arg2: i32) -> (i32, i32) {
    %c0_i32 = arith.constant 0 : i32
    %c0_i32_0 = arith.constant 0 : i32
    %c0_i32_1 = arith.constant 0 : i32
    return %c0_i32, %c0_i32_0 : i32, i32
  }
  func.func @transform_4(%arg0: i32, %arg1: i32, %arg2: i32) -> (i32, i32) {
    %c0_i32 = arith.constant 0 : i32
    %c0_i32_0 = arith.constant 0 : i32
    %c0_i32_1 = arith.constant 0 : i32
    return %c0_i32, %c0_i32_0 : i32, i32
  }
  func.func @transform_5(%arg0: i32, %arg1: i32, %arg2: i32) -> (i32, i32) {
    %c0_i32 = arith.constant 0 : i32
    %c0_i32_0 = arith.constant 0 : i32
    %c0_i32_1 = arith.constant 0 : i32
    return %c0_i32, %c0_i32_0 : i32, i32
  }
  func.func @transform_6(%arg0: i32, %arg1: i32, %arg2: i32) -> (i32, i32) {
    %c0_i32 = arith.constant 0 : i32
    %c0_i32_0 = arith.constant 0 : i32
    %c0_i32_1 = arith.constant 0 : i32
    return %c0_i32, %c0_i32_0 : i32, i32
  }
  func.func @transform_7(%arg0: i32, %arg1: i32, %arg2: i32) -> (i32, i32) {
    %c0_i32 = arith.constant 0 : i32
    %c0_i32_0 = arith.constant 0 : i32
    %c0_i32_1 = arith.constant 0 : i32
    return %c0_i32, %c0_i32_0 : i32, i32
  }
  func.func @transform_8(%arg0: i32, %arg1: i32, %arg2: i32) -> (i32, i32, i32, i32) {
    %c0_i32 = arith.constant 0 : i32
    %c0_i32_0 = arith.constant 0 : i32
    %c0_i32_1 = arith.constant 0 : i32
    return %arg0, %arg1, %c0_i32, %c0_i32_0 : i32, i32, i32, i32
  }
}

</mosaic_0001>

<llo_original>
// kernel: tpu_custom_call.1
$region0: #{tpu_custom_call.1}
  #allocation0 [shape = 'u32[]', space=smem, size = 0x4, offset = 0x4, fixed_abs, tag = 'smem constant byte address 0x4 - core index']
  #allocation1 [shape = 'u32[72,128]{1,0:T(1,128)}', space=vmem, size = 0x9000, scoped, tag = 'internal scratch']
  %s0 = inlined_call_operand.vmem [shape: bf16[2,2048,8], index: 0, kind: input, shape index: {}]
  %s1 = inlined_call_operand.vmem [shape: bf16[8,64], index: 1, kind: input, shape index: {}]
  %s2 = inlined_call_operand.vmem [shape: f32[1,64], index: 2, kind: input, shape index: {}]
  %s3 = inlined_call_operand.vmem [shape: bf16[64,128], index: 3, kind: input, shape index: {}]
  %s4 = inlined_call_operand.vmem [shape: f32[1,128], index: 4, kind: input, shape index: {}]
  %s5 = inlined_call_operand.vmem [shape: bf16[128,256], index: 5, kind: input, shape index: {}]
  %s6 = inlined_call_operand.vmem [shape: f32[1,256], index: 6, kind: input, shape index: {}]
  %s7 = inlined_call_operand.vmem [shape: bf16[256,1024], index: 7, kind: input, shape index: {}]
  %s8 = inlined_call_operand.hbm [shape: f32[2,2,8,1024], index: 8, kind: output, shape index: {}]
  %s9 = sld [smem:[#allocation0]]
  $region73: #{tpu_custom_call.1} parent=0
    _
  %s11 = ssub.s32 1, %s9
  %s12 = scalar_select 0, %s11, %s9
  $region1: #{tpu_custom_call.1} parent=0
    #allocation2 [shape = 'u8[65536]{0}', space=vmem, size = 0x10000, scoped, tag = 'output window, operand 0']
    #allocation3 [shape = 's32[2]{0}', space=sflag, size = 0x8, scoped, tag = 'scoped memory for tpu_custom_call.1']
    %13 = vsyncpa [#allocation3], 0
    %s14 = scalar_lea.sflag [#allocation3], 1
    %15 = vsyncpa %s14, 0
    loop: start=0, step=1, limit=10
    $region2: #{tpu_custom_call.1} parent=1 // loop_pre_header
      _
    $region3: #{tpu_custom_call.1} parent=1 // loop_header
      %s17 = sphi 0, %s21
      %p18 = scmp.ge.s32.totalorder %s17, 10
      %s24 = sphi 0, %s43
      %s25 = sphi 0, %s39
      %s26 = sphi 0, %s35
      %s27 = sphi 0, %s24
      %s28 = sphi 0, %s25
      %s29 = sphi 0, %s26
      %s30 = sphi 0, %s27
      %s31 = sphi 0, %s28
      %s32 = sphi 0, %s29
      %s52 = sphi 0, %s54
      %s55 = sphi 0, %s52
      %s56 = sphi 0, %s55
      %s72 = sphi 0, %s56
      %s76 = sphi 0, %s76
      %s78 = sphi 0, %s76
      %s79 = sphi 0, %s78
      %s93 = sphi 0, %s79
      %s97 = sphi 0, %s97
      %s99 = sphi 0, %s97
      %s100 = sphi 0, %s99
      %s114 = sphi 0, %s100
      %s118 = sphi 0, %s118
      %s120 = sphi 0, %s118
      %s121 = sphi 0, %s120
      %s135 = sphi 0, %s121
      %s139 = sphi 0, %s139
      %s141 = sphi 0, %s139
      %s142 = sphi 0, %s141
      %s156 = sphi 0, %s142
      %s160 = sphi 0, %s160
      %s162 = sphi 0, %s160
      %s163 = sphi 0, %s162
      %s177 = sphi 0, %s163
      %s181 = sphi 0, %s181
      %s183 = sphi 0, %s181
      %s184 = sphi 0, %s183
      %s198 = sphi 0, %s184
      %s202 = sphi 0, %s202
      %s204 = sphi 0, %s202
      %s205 = sphi 0, %s204
      %s219 = sphi 0, %s205
      %s227 = sphi 0, %s229
      %s230 = sphi 0, %s227
      %s231 = sphi 0, %s230
      %s247 = sphi 0, %s231
    $region4: #{tpu_custom_call.1} parent=1 // loop_header_branch
      %20 = sbr.rel (%p18) target = $region8
    $region5: #{tpu_custom_call.1} parent=1 // loop_body
      %s22 = ssub.s32 %s17, 1
      %s23 = ssub.s32 %s17, 2
      %s33 = sadd.s32 1, %s26
      %p34 = scmp.ge.s32.totalorder %s33, 2
      %s35 = scalar_select %p34, 0, %s33
      %s36 = sadd.s32 1, %s25
      %s37 = scalar_select %p34, %s36, %s25
      %p38 = scmp.ge.s32.totalorder %s37, 2
      %s39 = scalar_select %p38, 0, %s37
      %s40 = sadd.s32 1, %s24
      %s41 = scalar_select %p38, %s40, %s24
      %p42 = scmp.ge.s32.totalorder %s41, 2
      %s43 = scalar_select %p42, 0, %s41
      %s44 = smul.u32 %s25, 2
      %s45 = sadd.s32 %s44, %s26
      %s46 = smul.u32 %s39, 2
      %s47 = sadd.s32 %s46, %s35
      %s48 = ssub.s32 %s24, %s43
      %s49 = ssub.s32 %s45, %s47
      %s50 = sor.u32 %s48, %s49
      %p51 = scmp.eq.s32.totalorder %s50, 0
      %s53 = sadd.s32 %s52, 1
      %s54 = scalar_select %p51, %s52, %s53
      %p57 = pneg %p51
      %p58 = scmp.eq.s32.totalorder %s17, 7
      %p59 = por %p57, %p58
      %p60 = scmp.ne.s32.totalorder %s52, %s55
      %p61 = scmp.eq.s32.totalorder %s17, 0
      %p62 = por %p60, %p61
      %p63 = scmp.ne.s32.totalorder %s52, %s55
      %p64 = scmp.eq.s32.totalorder %s22, 7
      %p65 = por %p63, %p64
      %p66 = scmp.ne.s32.totalorder %s55, %s56
      %p67 = scmp.eq.s32.totalorder %s22, 0
      %p68 = por %p66, %p67
      %p69 = scmp.ne.s32.totalorder %s55, %s56
      %p70 = scmp.eq.s32.totalorder %s23, 7
      %p71 = por %p69, %p70
      %p73 = scmp.ne.s32.totalorder %s56, %s72
      %p74 = scmp.eq.s32.totalorder %s23, 0
      %p75 = por %p73, %p74
      %s77 = sadd.s32 %s76, 1
      %p80 = scmp.eq.s32.totalorder %s17, 7
      %p81 = scmp.ne.s32.totalorder %s76, %s78
      %p82 = scmp.eq.s32.totalorder %s17, 0
      %p83 = por %p81, %p82
      %p84 = scmp.ne.s32.totalorder %s76, %s78
      %p85 = scmp.eq.s32.totalorder %s22, 7
      %p86 = por %p84, %p85
      %p87 = scmp.ne.s32.totalorder %s78, %s79
      %p88 = scmp.eq.s32.totalorder %s22, 0
      %p89 = por %p87, %p88
      %p90 = scmp.ne.s32.totalorder %s78, %s79
      %p91 = scmp.eq.s32.totalorder %s23, 7
      %p92 = por %p90, %p91
      %p94 = scmp.ne.s32.totalorder %s79, %s93
      %p95 = scmp.eq.s32.totalorder %s23, 0
      %p96 = por %p94, %p95
      %s98 = sadd.s32 %s97, 1
      %p101 = scmp.eq.s32.totalorder %s17, 7
      %p102 = scmp.ne.s32.totalorder %s97, %s99
      %p103 = scmp.eq.s32.totalorder %s17, 0
      %p104 = por %p102, %p103
      %p105 = scmp.ne.s32.totalorder %s97, %s99
      %p106 = scmp.eq.s32.totalorder %s22, 7
      %p107 = por %p105, %p106
      %p108 = scmp.ne.s32.totalorder %s99, %s100
      %p109 = scmp.eq.s32.totalorder %s22, 0
      %p110 = por %p108, %p109
      %p111 = scmp.ne.s32.totalorder %s99, %s100
      %p112 = scmp.eq.s32.totalorder %s23, 7
      %p113 = por %p111, %p112
      %p115 = scmp.ne.s32.totalorder %s100, %s114
      %p116 = scmp.eq.s32.totalorder %s23, 0
      %p117 = por %p115, %p116
      %s119 = sadd.s32 %s118, 1
      %p122 = scmp.eq.s32.totalorder %s17, 7
      %p123 = scmp.ne.s32.totalorder %s118, %s120
      %p124 = scmp.eq.s32.totalorder %s17, 0
      %p125 = por %p123, %p124
      %p126 = scmp.ne.s32.totalorder %s118, %s120
      %p127 = scmp.eq.s32.totalorder %s22, 7
      %p128 = por %p126, %p127
      %p129 = scmp.ne.s32.totalorder %s120, %s121
      %p130 = scmp.eq.s32.totalorder %s22, 0
      %p131 = por %p129, %p130
      %p132 = scmp.ne.s32.totalorder %s120, %s121
      %p133 = scmp.eq.s32.totalorder %s23, 7
      %p134 = por %p132, %p133
      %p136 = scmp.ne.s32.totalorder %s121, %s135
      %p137 = scmp.eq.s32.totalorder %s23, 0
      %p138 = por %p136, %p137
      %s140 = sadd.s32 %s139, 1
      %p143 = scmp.eq.s32.totalorder %s17, 7
      %p144 = scmp.ne.s32.totalorder %s139, %s141
      %p145 = scmp.eq.s32.totalorder %s17, 0
      %p146 = por %p144, %p145
      %p147 = scmp.ne.s32.totalorder %s139, %s141
      %p148 = scmp.eq.s32.totalorder %s22, 7
      %p149 = por %p147, %p148
      %p150 = scmp.ne.s32.totalorder %s141, %s142
      %p151 = scmp.eq.s32.totalorder %s22, 0
      %p152 = por %p150, %p151
      %p153 = scmp.ne.s32.totalorder %s141, %s142
      %p154 = scmp.eq.s32.totalorder %s23, 7
      %p155 = por %p153, %p154
      %p157 = scmp.ne.s32.totalorder %s142, %s156
      %p158 = scmp.eq.s32.totalorder %s23, 0
      %p159 = por %p157, %p158
      %s161 = sadd.s32 %s160, 1
      %p164 = scmp.eq.s32.totalorder %s17, 7
      %p165 = scmp.ne.s32.totalorder %s160, %s162
      %p166 = scmp.eq.s32.totalorder %s17, 0
      %p167 = por %p165, %p166
      %p168 = scmp.ne.s32.totalorder %s160, %s162
      %p169 = scmp.eq.s32.totalorder %s22, 7
      %p170 = por %p168, %p169
      %p171 = scmp.ne.s32.totalorder %s162, %s163
      %p172 = scmp.eq.s32.totalorder %s22, 0
      %p173 = por %p171, %p172
      %p174 = scmp.ne.s32.totalorder %s162, %s163
      %p175 = scmp.eq.s32.totalorder %s23, 7
      %p176 = por %p174, %p175
      %p178 = scmp.ne.s32.totalorder %s163, %s177
      %p179 = scmp.eq.s32.totalorder %s23, 0
      %p180 = por %p178, %p179
      %s182 = sadd.s32 %s181, 1
      %p185 = scmp.eq.s32.totalorder %s17, 7
      %p186 = scmp.ne.s32.totalorder %s181, %s183
      %p187 = scmp.eq.s32.totalorder %s17, 0
      %p188 = por %p186, %p187
      %p189 = scmp.ne.s32.totalorder %s181, %s183
      %p190 = scmp.eq.s32.totalorder %s22, 7
      %p191 = por %p189, %p190
      %p192 = scmp.ne.s32.totalorder %s183, %s184
      %p193 = scmp.eq.s32.totalorder %s22, 0
      %p194 = por %p192, %p193
      %p195 = scmp.ne.s32.totalorder %s183, %s184
      %p196 = scmp.eq.s32.totalorder %s23, 7
      %p197 = por %p195, %p196
      %p199 = scmp.ne.s32.totalorder %s184, %s198
      %p200 = scmp.eq.s32.totalorder %s23, 0
      %p201 = por %p199, %p200
      %s203 = sadd.s32 %s202, 1
      %p206 = scmp.eq.s32.totalorder %s17, 7
      %p207 = scmp.ne.s32.totalorder %s202, %s204
      %p208 = scmp.eq.s32.totalorder %s17, 0
      %p209 = por %p207, %p208
      %p210 = scmp.ne.s32.totalorder %s202, %s204
      %p211 = scmp.eq.s32.totalorder %s22, 7
      %p212 = por %p210, %p211
      %p213 = scmp.ne.s32.totalorder %s204, %s205
      %p214 = scmp.eq.s32.totalorder %s22, 0
      %p215 = por %p213, %p214
      %p216 = scmp.ne.s32.totalorder %s204, %s205
      %p217 = scmp.eq.s32.totalorder %s23, 7
      %p218 = por %p216, %p217
      %p220 = scmp.ne.s32.totalorder %s205, %s219
      %p221 = scmp.eq.s32.totalorder %s23, 0
      %p222 = por %p220, %p221
      %s223 = ssub.s32 %s24, %s43
      %s224 = ssub.s32 %s25, %s39
      %s225 = sor.u32 %s223, %s224
      %p226 = scmp.eq.s32.totalorder %s225, 0
      %s228 = sadd.s32 %s227, 1
      %s229 = scalar_select %p226, %s227, %s228
      %p232 = pneg %p226
      %p233 = scmp.eq.s32.totalorder %s17, 7
      %p234 = por %p232, %p233
      %p235 = scmp.ne.s32.totalorder %s227, %s230
      %p236 = scmp.eq.s32.totalorder %s17, 0
      %p237 = por %p235, %p236
      %p238 = scmp.ne.s32.totalorder %s227, %s230
      %p239 = scmp.eq.s32.totalorder %s22, 7
      %p240 = por %p238, %p239
      %p241 = scmp.ne.s32.totalorder %s230, %s231
      %p242 = scmp.eq.s32.totalorder %s22, 0
      %p243 = por %p241, %p242
      %p244 = scmp.ne.s32.totalorder %s230, %s231
      %p245 = scmp.eq.s32.totalorder %s23, 7
      %p246 = por %p244, %p245
      %p248 = scmp.ne.s32.totalorder %s231, %s247
      %p249 = scmp.eq.s32.totalorder %s23, 0
      %p250 = por %p248, %p249
      %p251 = scmp.le.s32.totalorder 1, %s17
      %p252 = scmp.lt.s32.totalorder %s17, 9
      %p253 = pnand %p251, %p252
      %p254 = pneg %p253
      // Predicated region
      $region9: #{tpu_custom_call.1} parent=5 // pred_check
        _
      $region10: #{tpu_custom_call.1} parent=5 // pred_check_branch
        %256 = sbr.rel (%p253) target = $region12
      $region11: #{tpu_custom_call.1} parent=5 // pred_region
        %s257 = ssub.s32 %s17, 1
        // Predicated region
        $region13: #{tpu_custom_call.1} parent=11 // pred_check
          %p258 = pneg %p89
        $region14: #{tpu_custom_call.1} parent=11 // pred_check_branch
          %260 = sbr.rel (%p258) target = $region16
        $region15: #{tpu_custom_call.1} parent=11 // pred_region
          _
        $region16: #{tpu_custom_call.1} parent=11 // pred_fallthru
          _
        // Predicated region
        $region17: #{tpu_custom_call.1} parent=11 // pred_check
          %p261 = pneg %p110
        $region18: #{tpu_custom_call.1} parent=11 // pred_check_branch
          %263 = sbr.rel (%p261) target = $region20
        $region19: #{tpu_custom_call.1} parent=11 // pred_region
          _
        $region20: #{tpu_custom_call.1} parent=11 // pred_fallthru
          _
        // Predicated region
        $region21: #{tpu_custom_call.1} parent=11 // pred_check
          %p264 = pneg %p131
        $region22: #{tpu_custom_call.1} parent=11 // pred_check_branch
          %266 = sbr.rel (%p264) target = $region24
        $region23: #{tpu_custom_call.1} parent=11 // pred_region
          _
        $region24: #{tpu_custom_call.1} parent=11 // pred_fallthru
          _
        // Predicated region
        $region25: #{tpu_custom_call.1} parent=11 // pred_check
          %p267 = pneg %p152
        $region26: #{tpu_custom_call.1} parent=11 // pred_check_branch
          %269 = sbr.rel (%p267) target = $region28
        $region27: #{tpu_custom_call.1} parent=11 // pred_region
          _
        $region28: #{tpu_custom_call.1} parent=11 // pred_fallthru
          _
        // Predicated region
        $region29: #{tpu_custom_call.1} parent=11 // pred_check
          %p270 = pneg %p173
        $region30: #{tpu_custom_call.1} parent=11 // pred_check_branch
          %272 = sbr.rel (%p270) target = $region32
        $region31: #{tpu_custom_call.1} parent=11 // pred_region
          _
        $region32: #{tpu_custom_call.1} parent=11 // pred_fallthru
          _
        // Predicated region
        $region33: #{tpu_custom_call.1} parent=11 // pred_check
          %p273 = pneg %p194
        $region34: #{tpu_custom_call.1} parent=11 // pred_check_branch
          %275 = sbr.rel (%p273) target = $region36
        $region35: #{tpu_custom_call.1} parent=11 // pred_region
          _
        $region36: #{tpu_custom_call.1} parent=11 // pred_fallthru
          _
        // Predicated region
        $region37: #{tpu_custom_call.1} parent=11 // pred_check
          %p276 = pneg %p215
        $region38: #{tpu_custom_call.1} parent=11 // pred_check_branch
          %278 = sbr.rel (%p276) target = $region40
        $region39: #{tpu_custom_call.1} parent=11 // pred_region
          _
        $region40: #{tpu_custom_call.1} parent=11 // pred_fallthru
          _
      $region12: #{tpu_custom_call.1} parent=5 // pred_fallthru
        _
      %p279 = scmp.lt.s32.totalorder %s17, 8
      // Predicated region
      $region41: #{tpu_custom_call.1} parent=5 // pred_check
        %p280 = pneg %p279
      $region42: #{tpu_custom_call.1} parent=5 // pred_check_branch
        %282 = sbr.rel (%p280) target = $region44
      $region43: #{tpu_custom_call.1} parent=5 // pred_region
        // Predicated region
        $region45: #{tpu_custom_call.1} parent=43 // pred_check
          %p283 = pneg %p62
        $region46: #{tpu_custom_call.1} parent=43 // pred_check_branch
          %285 = sbr.rel (%p283) target = $region48
        $region47: #{tpu_custom_call.1} parent=43 // pred_region
          %s286 = smul.u32 %s25, 2
          %s287 = sadd.s32 %s286, %s26
          %s288 = smul.u32 64, %s287
          %p289 = scmp.lt.s32.totalorder %s24, 1
          %s290 = scalar_select %p289, %s24, 1
          %p291 = scmp.lt.s32.totalorder %s288, 255
          %s292 = scalar_select %p291, %s288, 255
          %s293 = smul.addr %s290, 256
          %s294 = sadd.s32 %s292, %s293
          %s295 = smul.addr %s294, 4
          %s296 = scalar_lea.vmem %s0, %s295
          %s297 = smul.u32 %s25, 2
          %s298 = sadd.s32 %s297, %s26
          %s299 = smul.u32 64, %s298
        $region48: #{tpu_custom_call.1} parent=43 // pred_fallthru
          _
      $region44: #{tpu_custom_call.1} parent=5 // pred_fallthru
        _
      %p300 = scmp.le.s32.totalorder 1, %s17
      %p301 = scmp.lt.s32.totalorder %s17, 9
      %p302 = pnand %p300, %p301
      %p303 = pneg %p302
      // Predicated region
      $region49: #{tpu_custom_call.1} parent=5 // pred_check
        _
      $region50: #{tpu_custom_call.1} parent=5 // pred_check_branch
        %305 = sbr.rel (%p302) target = $region52
      $region51: #{tpu_custom_call.1} parent=5 // pred_region
        %s306 = ssub.s32 %s17, 1
        %s307 = smul.u32 %s28, 2
        %s308 = sadd.s32 %s307, %s29
        %s309 = smul.u32 64, %s308
        %p310 = scmp.lt.s32.totalorder %s27, 1
        %s311 = scalar_select %p310, %s27, 1
        %p312 = scmp.lt.s32.totalorder %s309, 255
        %s313 = scalar_select %p312, %s309, 255
        %s314 = smul.addr %s311, 256
        %s315 = sadd.s32 %s313, %s314
        %s316 = smul.addr %s315, 4
        %s317 = scalar_lea.vmem %s0, %s316
        %p318 = pneg %p68
        %p319 = pneg %p65
        %p320 = pneg %p89
        %p321 = pneg %p86
        %p322 = pneg %p110
        %p323 = pneg %p107
        %p324 = pneg %p131
        %p325 = pneg %p128
        %p326 = pneg %p152
        %p327 = pneg %p149
        %p328 = pneg %p173
        %p329 = pneg %p170
        %p330 = pneg %p194
        %p331 = pneg %p191
        %p332 = pneg %p215
        %p333 = pneg %p212
        %p334 = pneg %p243
        %p335 = pneg %p240
        %s336 = sand.u32 %s230, 1
        %s337 = scalar_lea.sflag [#allocation3], %s336
        %s338 = sand.u32 %s230, 1
        %s339 = smul.addr %s338, 64
        %s340 = scalar_lea.vmem [#allocation2], %s339
        %s341 = smul.u32 %s28, 2
        %s342 = sadd.s32 %s341, %s29
        %s343 = smul.u32 64, %s342
        %p344 = scmp.lt.s32.totalorder %s27, 1
        %s345 = scalar_select %p344, %s27, 1
        %p346 = scmp.lt.s32.totalorder %s343, 255
        %s347 = scalar_select %p346, %s343, 255
        %s348 = smul.addr %s345, 256
        %s349 = sadd.s32 %s347, %s348
        %s350 = smul.addr %s349, 4
        %s351 = scalar_lea.vmem %s0, %s350
        %s352 = smul.u32 %s28, 2
        %s353 = sadd.s32 %s352, %s29
        %s354 = smul.u32 64, %s353
        %v356 = vld [vmem:[%s351] sm:$0xf]
        %v357 = vld [vmem:[%s351 + $0x4] sm:$0xf]
        %v358 = vld [vmem:[%s351 + $0x8] sm:$0xf]
        %v359 = vld [vmem:[%s351 + $0xc] sm:$0xf]
        %v360 = vld [vmem:[%s351 + $0x10] sm:$0xf]
        %v361 = vld [vmem:[%s351 + $0x14] sm:$0xf]
        %v362 = vld [vmem:[%s351 + $0x18] sm:$0xf]
        %v363 = vld [vmem:[%s351 + $0x1c] sm:$0xf]
        %v364 = vld [vmem:[%s351 + $0x20] sm:$0xf]
        %v365 = vld [vmem:[%s351 + $0x24] sm:$0xf]
        %v366 = vld [vmem:[%s351 + $0x28] sm:$0xf]
        %v367 = vld [vmem:[%s351 + $0x2c] sm:$0xf]
        %v368 = vld [vmem:[%s351 + $0x30] sm:$0xf]
        %v369 = vld [vmem:[%s351 + $0x34] sm:$0xf]
        %v370 = vld [vmem:[%s351 + $0x38] sm:$0xf]
        %v371 = vld [vmem:[%s351 + $0x3c] sm:$0xf]
        %v372 = vld [vmem:[%s351 + $0x40] sm:$0xf]
        %v373 = vld [vmem:[%s351 + $0x44] sm:$0xf]
        %v374 = vld [vmem:[%s351 + $0x48] sm:$0xf]
        %v375 = vld [vmem:[%s351 + $0x4c] sm:$0xf]
        %v376 = vld [vmem:[%s351 + $0x50] sm:$0xf]
        %v377 = vld [vmem:[%s351 + $0x54] sm:$0xf]
        %v378 = vld [vmem:[%s351 + $0x58] sm:$0xf]
        %v379 = vld [vmem:[%s351 + $0x5c] sm:$0xf]
        %v380 = vld [vmem:[%s351 + $0x60] sm:$0xf]
        %v381 = vld [vmem:[%s351 + $0x64] sm:$0xf]
        %v382 = vld [vmem:[%s351 + $0x68] sm:$0xf]
        %v383 = vld [vmem:[%s351 + $0x6c] sm:$0xf]
        %v384 = vld [vmem:[%s351 + $0x70] sm:$0xf]
        %v385 = vld [vmem:[%s351 + $0x74] sm:$0xf]
        %v386 = vld [vmem:[%s351 + $0x78] sm:$0xf]
        %v387 = vld [vmem:[%s351 + $0x7c] sm:$0xf]
        %v388 = vld [vmem:[%s351 + $0x80] sm:$0xf]
        %v389 = vld [vmem:[%s351 + $0x84] sm:$0xf]
        %v390 = vld [vmem:[%s351 + $0x88] sm:$0xf]
        %v391 = vld [vmem:[%s351 + $0x8c] sm:$0xf]
        %v392 = vld [vmem:[%s351 + $0x90] sm:$0xf]
        %v393 = vld [vmem:[%s351 + $0x94] sm:$0xf]
        %v394 = vld [vmem:[%s351 + $0x98] sm:$0xf]
        %v395 = vld [vmem:[%s351 + $0x9c] sm:$0xf]
        %v396 = vld [vmem:[%s351 + $0xa0] sm:$0xf]
        %v397 = vld [vmem:[%s351 + $0xa4] sm:$0xf]
        %v398 = vld [vmem:[%s351 + $0xa8] sm:$0xf]
        %v399 = vld [vmem:[%s351 + $0xac] sm:$0xf]
        %v400 = vld [vmem:[%s351 + $0xb0] sm:$0xf]
        %v401 = vld [vmem:[%s351 + $0xb4] sm:$0xf]
        %v402 = vld [vmem:[%s351 + $0xb8] sm:$0xf]
        %v403 = vld [vmem:[%s351 + $0xbc] sm:$0xf]
        %v404 = vld [vmem:[%s351 + $0xc0] sm:$0xf]
        %v405 = vld [vmem:[%s351 + $0xc4] sm:$0xf]
        %v406 = vld [vmem:[%s351 + $0xc8] sm:$0xf]
        %v407 = vld [vmem:[%s351 + $0xcc] sm:$0xf]
        %v408 = vld [vmem:[%s351 + $0xd0] sm:$0xf]
        %v409 = vld [vmem:[%s351 + $0xd4] sm:$0xf]
        %v410 = vld [vmem:[%s351 + $0xd8] sm:$0xf]
        %v411 = vld [vmem:[%s351 + $0xdc] sm:$0xf]
        %v412 = vld [vmem:[%s351 + $0xe0] sm:$0xf]
        %v413 = vld [vmem:[%s351 + $0xe4] sm:$0xf]
        %v414 = vld [vmem:[%s351 + $0xe8] sm:$0xf]
        %v415 = vld [vmem:[%s351 + $0xec] sm:$0xf]
        %v416 = vld [vmem:[%s351 + $0xf0] sm:$0xf]
        %v417 = vld [vmem:[%s351 + $0xf4] sm:$0xf]
        %v418 = vld [vmem:[%s351 + $0xf8] sm:$0xf]
        %v419 = vld [vmem:[%s351 + $0xfc] sm:$0xf]
        %v420 = vld [vmem:[%s1] sm:$0xf]
        %v421 = vld [vmem:[%s2] sm:$0x1]
        %v423 = vperm.slane %v421, 0
        %v489 = vunpack.c.l.b16 %v356
        %v490 = vunpack.c.l.b16 %v357
        %v491 = vunpack.c.l.b16 %v358
        %v492 = vunpack.c.l.b16 %v359
        %v493 = vunpack.c.l.b16 %v360
        %v494 = vunpack.c.l.b16 %v361
        %v495 = vunpack.c.l.b16 %v362
        %v496 = vunpack.c.l.b16 %v363
        %v497 = vunpack.c.l.b16 %v364
        %v498 = vunpack.c.l.b16 %v365
        %v499 = vunpack.c.l.b16 %v366
        %v500 = vunpack.c.l.b16 %v367
        %v501 = vunpack.c.l.b16 %v368
        %v502 = vunpack.c.l.b16 %v369
        %v503 = vunpack.c.l.b16 %v370
        %v504 = vunpack.c.l.b16 %v371
        %v505 = vunpack.c.l.b16 %v372
        %v506 = vunpack.c.l.b16 %v373
        %v507 = vunpack.c.l.b16 %v374
        %v508 = vunpack.c.l.b16 %v375
        %v509 = vunpack.c.l.b16 %v376
        %v510 = vunpack.c.l.b16 %v377
        %v511 = vunpack.c.l.b16 %v378
        %v512 = vunpack.c.l.b16 %v379
        %v513 = vunpack.c.l.b16 %v380
        %v514 = vunpack.c.l.b16 %v381
        %v515 = vunpack.c.l.b16 %v382
        %v516 = vunpack.c.l.b16 %v383
        %v517 = vunpack.c.l.b16 %v384
        %v518 = vunpack.c.l.b16 %v385
        %v519 = vunpack.c.l.b16 %v386
        %v520 = vunpack.c.l.b16 %v387
        %v521 = vunpack.c.l.b16 %v388
        %v522 = vunpack.c.l.b16 %v389
        %v523 = vunpack.c.l.b16 %v390
        %v524 = vunpack.c.l.b16 %v391
        %v525 = vunpack.c.l.b16 %v392
        %v526 = vunpack.c.l.b16 %v393
        %v527 = vunpack.c.l.b16 %v394
        %v528 = vunpack.c.l.b16 %v395
        %v529 = vunpack.c.l.b16 %v396
        %v530 = vunpack.c.l.b16 %v397
        %v531 = vunpack.c.l.b16 %v398
        %v532 = vunpack.c.l.b16 %v399
        %v533 = vunpack.c.l.b16 %v400
        %v534 = vunpack.c.l.b16 %v401
        %v535 = vunpack.c.l.b16 %v402
        %v536 = vunpack.c.l.b16 %v403
        %v537 = vunpack.c.l.b16 %v404
        %v538 = vunpack.c.l.b16 %v405
        %v539 = vunpack.c.l.b16 %v406
        %v540 = vunpack.c.l.b16 %v407
        %v541 = vunpack.c.l.b16 %v408
        %v542 = vunpack.c.l.b16 %v409
        %v543 = vunpack.c.l.b16 %v410
        %v544 = vunpack.c.l.b16 %v411
        %v545 = vunpack.c.l.b16 %v412
        %v546 = vunpack.c.l.b16 %v413
        %v547 = vunpack.c.l.b16 %v414
        %v548 = vunpack.c.l.b16 %v415
        %v549 = vunpack.c.l.b16 %v416
        %v550 = vunpack.c.l.b16 %v417
        %v551 = vunpack.c.l.b16 %v418
        %v552 = vunpack.c.l.b16 %v419
        %v553 = vpack.c.b16 %v490, %v489
        %v554 = vpack.c.b16 %v492, %v491
        %v555 = vpack.c.b16 %v494, %v493
        %v556 = vpack.c.b16 %v496, %v495
        %v557 = vpack.c.b16 %v498, %v497
        %v558 = vpack.c.b16 %v500, %v499
        %v559 = vpack.c.b16 %v502, %v501
        %v560 = vpack.c.b16 %v504, %v503
        %v561 = vpack.c.b16 %v506, %v505
        %v562 = vpack.c.b16 %v508, %v507
        %v563 = vpack.c.b16 %v510, %v509
        %v564 = vpack.c.b16 %v512, %v511
        %v565 = vpack.c.b16 %v514, %v513
        %v566 = vpack.c.b16 %v516, %v515
        %v567 = vpack.c.b16 %v518, %v517
        %v568 = vpack.c.b16 %v520, %v519
        %v569 = vpack.c.b16 %v522, %v521
        %v570 = vpack.c.b16 %v524, %v523
        %v571 = vpack.c.b16 %v526, %v525
        %v572 = vpack.c.b16 %v528, %v527
        %v573 = vpack.c.b16 %v530, %v529
        %v574 = vpack.c.b16 %v532, %v531
        %v575 = vpack.c.b16 %v534, %v533
        %v576 = vpack.c.b16 %v536, %v535
        %v577 = vpack.c.b16 %v538, %v537
        %v578 = vpack.c.b16 %v540, %v539
        %v579 = vpack.c.b16 %v542, %v541
        %v580 = vpack.c.b16 %v544, %v543
        %v581 = vpack.c.b16 %v546, %v545
        %v582 = vpack.c.b16 %v548, %v547
        %v583 = vpack.c.b16 %v550, %v549
        %v584 = vpack.c.b16 %v552, %v551
        %vm585 = vcmask 64512
        %v587 = vsel %vm585, %v553, 0
        %v590 = vsel %vm585, %v554, 0
        %v593 = vsel %vm585, %v555, 0
        %v596 = vsel %vm585, %v556, 0
        %v599 = vsel %vm585, %v557, 0
        %v602 = vsel %vm585, %v558, 0
        %v605 = vsel %vm585, %v559, 0
        %v608 = vsel %vm585, %v560, 0
        %v611 = vsel %vm585, %v561, 0
        %v614 = vsel %vm585, %v562, 0
        %v617 = vsel %vm585, %v563, 0
        %v620 = vsel %vm585, %v564, 0
        %v623 = vsel %vm585, %v565, 0
        %v626 = vsel %vm585, %v566, 0
        %v629 = vsel %vm585, %v567, 0
        %v632 = vsel %vm585, %v568, 0
        %v635 = vsel %vm585, %v569, 0
        %v638 = vsel %vm585, %v570, 0
        %v641 = vsel %vm585, %v571, 0
        %v644 = vsel %vm585, %v572, 0
        %v647 = vsel %vm585, %v573, 0
        %v650 = vsel %vm585, %v574, 0
        %v653 = vsel %vm585, %v575, 0
        %v656 = vsel %vm585, %v576, 0
        %v659 = vsel %vm585, %v577, 0
        %v662 = vsel %vm585, %v578, 0
        %v665 = vsel %vm585, %v579, 0
        %v668 = vsel %vm585, %v580, 0
        %v671 = vsel %vm585, %v581, 0
        %v674 = vsel %vm585, %v582, 0
        %v677 = vsel %vm585, %v583, 0
        %v680 = vsel %vm585, %v584, 0
        %vm682 = vcmask 1043456
        %v684 = vsel %vm682, %v420, 0
        %686 = vmatpush.bf16.msra.mxu0 0
        %687 = vmatpush.bf16.msra.mxu0 0
        %688 = vmatpush.bf16.msra.mxu0 0
        %689 = vmatpush.bf16.msra.mxu0 0
        %690 = vmatpush.bf16.msra.mxu0 0
        %691 = vmatpush.bf16.msra.mxu0 0
        %692 = vmatpush.bf16.msra.mxu0 0
        %693 = vmatpush.bf16.msra.mxu0 %v684
        %694 = vmatmul.bf16.gmra.mxu0 %v587
        %v695 = vpop.f32.mrf.mxu0
        %v696 = vadd.f32 %v423, %v695
        %v697 = vpop.f32.mrf.mxu0
        %v698 = vadd.f32 %v423, %v697
        %699 = vmatmul.bf16.gmra.mxu0 %v590
        %v700 = vpop.f32.mrf.mxu0
        %v701 = vadd.f32 %v423, %v700
        %v702 = vpop.f32.mrf.mxu0
        %v703 = vadd.f32 %v423, %v702
        %704 = vmatmul.bf16.gmra.mxu0 %v593
        %v705 = vpop.f32.mrf.mxu0
        %v706 = vadd.f32 %v423, %v705
        %v707 = vpop.f32.mrf.mxu0
        %v708 = vadd.f32 %v423, %v707
        %709 = vmatmul.bf16.gmra.mxu0 %v596
        %v710 = vpop.f32.mrf.mxu0
        %v711 = vadd.f32 %v423, %v710
        %v712 = vpop.f32.mrf.mxu0
        %v713 = vadd.f32 %v423, %v712
        %714 = vmatmul.bf16.gmra.mxu0 %v599
        %v715 = vpop.f32.mrf.mxu0
        %v716 = vadd.f32 %v423, %v715
        %v717 = vpop.f32.mrf.mxu0
        %v718 = vadd.f32 %v423, %v717
        %719 = vmatmul.bf16.gmra.mxu0 %v602
        %v720 = vpop.f32.mrf.mxu0
        %v721 = vadd.f32 %v423, %v720
        %v722 = vpop.f32.mrf.mxu0
        %v723 = vadd.f32 %v423, %v722
        %724 = vmatmul.bf16.gmra.mxu0 %v605
        %v725 = vpop.f32.mrf.mxu0
        %v726 = vadd.f32 %v423, %v725
        %v727 = vpop.f32.mrf.mxu0
        %v728 = vadd.f32 %v423, %v727
        %729 = vmatmul.bf16.gmra.mxu0 %v608
        %v730 = vpop.f32.mrf.mxu0
        %v731 = vadd.f32 %v423, %v730
        %v732 = vpop.f32.mrf.mxu0
        %v733 = vadd.f32 %v423, %v732
        %734 = vmatmul.bf16.gmra.mxu0 %v611
        %v735 = vpop.f32.mrf.mxu0
        %v736 = vadd.f32 %v423, %v735
        %v737 = vpop.f32.mrf.mxu0
        %v738 = vadd.f32 %v423, %v737
        %739 = vmatmul.bf16.gmra.mxu0 %v614
        %v740 = vpop.f32.mrf.mxu0
        %v741 = vadd.f32 %v423, %v740
        %v742 = vpop.f32.mrf.mxu0
        %v743 = vadd.f32 %v423, %v742
        %744 = vmatmul.bf16.gmra.mxu0 %v617
        %v745 = vpop.f32.mrf.mxu0
        %v746 = vadd.f32 %v423, %v745
        %v747 = vpop.f32.mrf.mxu0
        %v748 = vadd.f32 %v423, %v747
        %749 = vmatmul.bf16.gmra.mxu0 %v620
        %v750 = vpop.f32.mrf.mxu0
        %v751 = vadd.f32 %v423, %v750
        %v752 = vpop.f32.mrf.mxu0
        %v753 = vadd.f32 %v423, %v752
        %754 = vmatmul.bf16.gmra.mxu0 %v623
        %v755 = vpop.f32.mrf.mxu0
        %v756 = vadd.f32 %v423, %v755
        %v757 = vpop.f32.mrf.mxu0
        %v758 = vadd.f32 %v423, %v757
        %759 = vmatmul.bf16.gmra.mxu0 %v626
        %v760 = vpop.f32.mrf.mxu0
        %v761 = vadd.f32 %v423, %v760
        %v762 = vpop.f32.mrf.mxu0
        %v763 = vadd.f32 %v423, %v762
        %764 = vmatmul.bf16.gmra.mxu0 %v629
        %v765 = vpop.f32.mrf.mxu0
        %v766 = vadd.f32 %v423, %v765
        %v767 = vpop.f32.mrf.mxu0
        %v768 = vadd.f32 %v423, %v767
        %769 = vmatmul.bf16.gmra.mxu0 %v632
        %v770 = vpop.f32.mrf.mxu0
        %v771 = vadd.f32 %v423, %v770
        %v772 = vpop.f32.mrf.mxu0
        %v773 = vadd.f32 %v423, %v772
        %774 = vmatmul.bf16.gmra.mxu0 %v635
        %v775 = vpop.f32.mrf.mxu0
        %v776 = vadd.f32 %v423, %v775
        %v777 = vpop.f32.mrf.mxu0
        %v778 = vadd.f32 %v423, %v777
        %779 = vmatmul.bf16.gmra.mxu0 %v638
        %v780 = vpop.f32.mrf.mxu0
        %v781 = vadd.f32 %v423, %v780
        %v782 = vpop.f32.mrf.mxu0
        %v783 = vadd.f32 %v423, %v782
        %784 = vmatmul.bf16.gmra.mxu0 %v641
        %v785 = vpop.f32.mrf.mxu0
        %v786 = vadd.f32 %v423, %v785
        %v787 = vpop.f32.mrf.mxu0
        %v788 = vadd.f32 %v423, %v787
        %789 = vmatmul.bf16.gmra.mxu0 %v644
        %v790 = vpop.f32.mrf.mxu0
        %v791 = vadd.f32 %v423, %v790
        %v792 = vpop.f32.mrf.mxu0
        %v793 = vadd.f32 %v423, %v792
        %794 = vmatmul.bf16.gmra.mxu0 %v647
        %v795 = vpop.f32.mrf.mxu0
        %v796 = vadd.f32 %v423, %v795
        %v797 = vpop.f32.mrf.mxu0
        %v798 = vadd.f32 %v423, %v797
        %799 = vmatmul.bf16.gmra.mxu0 %v650
        %v800 = vpop.f32.mrf.mxu0
        %v801 = vadd.f32 %v423, %v800
        %v802 = vpop.f32.mrf.mxu0
        %v803 = vadd.f32 %v423, %v802
        %804 = vmatmul.bf16.gmra.mxu0 %v653
        %v805 = vpop.f32.mrf.mxu0
        %v806 = vadd.f32 %v423, %v805
        %v807 = vpop.f32.mrf.mxu0
        %v808 = vadd.f32 %v423, %v807
        %809 = vmatmul.bf16.gmra.mxu0 %v656
        %v810 = vpop.f32.mrf.mxu0
        %v811 = vadd.f32 %v423, %v810
        %v812 = vpop.f32.mrf.mxu0
        %v813 = vadd.f32 %v423, %v812
        %814 = vmatmul.bf16.gmra.mxu0 %v659
        %v815 = vpop.f32.mrf.mxu0
        %v816 = vadd.f32 %v423, %v815
        %v817 = vpop.f32.mrf.mxu0
        %v818 = vadd.f32 %v423, %v817
        %819 = vmatmul.bf16.gmra.mxu0 %v662
        %v820 = vpop.f32.mrf.mxu0
        %v821 = vadd.f32 %v423, %v820
        %v822 = vpop.f32.mrf.mxu0
        %v823 = vadd.f32 %v423, %v822
        %824 = vmatmul.bf16.gmra.mxu0 %v665
        %v825 = vpop.f32.mrf.mxu0
        %v826 = vadd.f32 %v423, %v825
        %v827 = vpop.f32.mrf.mxu0
        %v828 = vadd.f32 %v423, %v827
        %829 = vmatmul.bf16.gmra.mxu0 %v668
        %v830 = vpop.f32.mrf.mxu0
        %v831 = vadd.f32 %v423, %v830
        %v832 = vpop.f32.mrf.mxu0
        %v833 = vadd.f32 %v423, %v832
        %834 = vmatmul.bf16.gmra.mxu0 %v671
        %v835 = vpop.f32.mrf.mxu0
        %v836 = vadd.f32 %v423, %v835
        %v837 = vpop.f32.mrf.mxu0
        %v838 = vadd.f32 %v423, %v837
        %839 = vmatmul.bf16.gmra.mxu0 %v674
        %v840 = vpop.f32.mrf.mxu0
        %v841 = vadd.f32 %v423, %v840
        %v842 = vpop.f32.mrf.mxu0
        %v843 = vadd.f32 %v423, %v842
        %844 = vmatmul.bf16.gmra.mxu0 %v677
        %v845 = vpop.f32.mrf.mxu0
        %v846 = vadd.f32 %v423, %v845
        %v847 = vpop.f32.mrf.mxu0
        %v848 = vadd.f32 %v423, %v847
        %849 = vmatmul.bf16.gmra.mxu0 %v680
        %v850 = vpop.f32.mrf.mxu0
        %v851 = vadd.f32 %v423, %v850
        %v852 = vpop.f32.mrf.mxu0
        %v853 = vadd.f32 %v423, %v852
        %854 = vdwg.mxu0
        %v855 = vpack.c.bf16 %v696, %v696
        %v856 = vpack.c.bf16 %v698, %v698
        %v857 = vpack.c.bf16 %v701, %v701
        %v858 = vpack.c.bf16 %v703, %v703
        %v859 = vpack.c.bf16 %v706, %v706
        %v860 = vpack.c.bf16 %v708, %v708
        %v861 = vpack.c.bf16 %v711, %v711
        %v862 = vpack.c.bf16 %v713, %v713
        %v863 = vpack.c.bf16 %v716, %v716
        %v864 = vpack.c.bf16 %v718, %v718
        %v865 = vpack.c.bf16 %v721, %v721
        %v866 = vpack.c.bf16 %v723, %v723
        %v867 = vpack.c.bf16 %v726, %v726
        %v868 = vpack.c.bf16 %v728, %v728
        %v869 = vpack.c.bf16 %v731, %v731
        %v870 = vpack.c.bf16 %v733, %v733
        %v871 = vpack.c.bf16 %v736, %v736
        %v872 = vpack.c.bf16 %v738, %v738
        %v873 = vpack.c.bf16 %v741, %v741
        %v874 = vpack.c.bf16 %v743, %v743
        %v875 = vpack.c.bf16 %v746, %v746
        %v876 = vpack.c.bf16 %v748, %v748
        %v877 = vpack.c.bf16 %v751, %v751
        %v878 = vpack.c.bf16 %v753, %v753
        %v879 = vpack.c.bf16 %v756, %v756
        %v880 = vpack.c.bf16 %v758, %v758
        %v881 = vpack.c.bf16 %v761, %v761
        %v882 = vpack.c.bf16 %v763, %v763
        %v883 = vpack.c.bf16 %v766, %v766
        %v884 = vpack.c.bf16 %v768, %v768
        %v885 = vpack.c.bf16 %v771, %v771
        %v886 = vpack.c.bf16 %v773, %v773
        %v887 = vpack.c.bf16 %v776, %v776
        %v888 = vpack.c.bf16 %v778, %v778
        %v889 = vpack.c.bf16 %v781, %v781
        %v890 = vpack.c.bf16 %v783, %v783
        %v891 = vpack.c.bf16 %v786, %v786
        %v892 = vpack.c.bf16 %v788, %v788
        %v893 = vpack.c.bf16 %v791, %v791
        %v894 = vpack.c.bf16 %v793, %v793
        %v895 = vpack.c.bf16 %v796, %v796
        %v896 = vpack.c.bf16 %v798, %v798
        %v897 = vpack.c.bf16 %v801, %v801
        %v898 = vpack.c.bf16 %v803, %v803
        %v899 = vpack.c.bf16 %v806, %v806
        %v900 = vpack.c.bf16 %v808, %v808
        %v901 = vpack.c.bf16 %v811, %v811
        %v902 = vpack.c.bf16 %v813, %v813
        %v903 = vpack.c.bf16 %v816, %v816
        %v904 = vpack.c.bf16 %v818, %v818
        %v905 = vpack.c.bf16 %v821, %v821
        %v906 = vpack.c.bf16 %v823, %v823
        %v907 = vpack.c.bf16 %v826, %v826
        %v908 = vpack.c.bf16 %v828, %v828
        %v909 = vpack.c.bf16 %v831, %v831
        %v910 = vpack.c.bf16 %v833, %v833
        %v911 = vpack.c.bf16 %v836, %v836
        %v912 = vpack.c.bf16 %v838, %v838
        %v913 = vpack.c.bf16 %v841, %v841
        %v914 = vpack.c.bf16 %v843, %v843
        %v915 = vpack.c.bf16 %v846, %v846
        %v916 = vpack.c.bf16 %v848, %v848
        %v917 = vpack.c.bf16 %v851, %v851
        %v918 = vpack.c.bf16 %v853, %v853
        %v919 = vunpack.c.l.bf16 %v855
        %v920 = vunpack.c.l.bf16 %v856
        %v921 = vunpack.c.l.bf16 %v857
        %v922 = vunpack.c.l.bf16 %v858
        %v923 = vunpack.c.l.bf16 %v859
        %v924 = vunpack.c.l.bf16 %v860
        %v925 = vunpack.c.l.bf16 %v861
        %v926 = vunpack.c.l.bf16 %v862
        %v927 = vunpack.c.l.bf16 %v863
        %v928 = vunpack.c.l.bf16 %v864
        %v929 = vunpack.c.l.bf16 %v865
        %v930 = vunpack.c.l.bf16 %v866
        %v931 = vunpack.c.l.bf16 %v867
        %v932 = vunpack.c.l.bf16 %v868
        %v933 = vunpack.c.l.bf16 %v869
        %v934 = vunpack.c.l.bf16 %v870
        %v935 = vunpack.c.l.bf16 %v871
        %v936 = vunpack.c.l.bf16 %v872
        %v937 = vunpack.c.l.bf16 %v873
        %v938 = vunpack.c.l.bf16 %v874
        %v939 = vunpack.c.l.bf16 %v875
        %v940 = vunpack.c.l.bf16 %v876
        %v941 = vunpack.c.l.bf16 %v877
        %v942 = vunpack.c.l.bf16 %v878
        %v943 = vunpack.c.l.bf16 %v879
        %v944 = vunpack.c.l.bf16 %v880
        %v945 = vunpack.c.l.bf16 %v881
        %v946 = vunpack.c.l.bf16 %v882
        %v947 = vunpack.c.l.bf16 %v883
        %v948 = vunpack.c.l.bf16 %v884
        %v949 = vunpack.c.l.bf16 %v885
        %v950 = vunpack.c.l.bf16 %v886
        %v951 = vunpack.c.l.bf16 %v887
        %v952 = vunpack.c.l.bf16 %v888
        %v953 = vunpack.c.l.bf16 %v889
        %v954 = vunpack.c.l.bf16 %v890
        %v955 = vunpack.c.l.bf16 %v891
        %v956 = vunpack.c.l.bf16 %v892
        %v957 = vunpack.c.l.bf16 %v893
        %v958 = vunpack.c.l.bf16 %v894
        %v959 = vunpack.c.l.bf16 %v895
        %v960 = vunpack.c.l.bf16 %v896
        %v961 = vunpack.c.l.bf16 %v897
        %v962 = vunpack.c.l.bf16 %v898
        %v963 = vunpack.c.l.bf16 %v899
        %v964 = vunpack.c.l.bf16 %v900
        %v965 = vunpack.c.l.bf16 %v901
        %v966 = vunpack.c.l.bf16 %v902
        %v967 = vunpack.c.l.bf16 %v903
        %v968 = vunpack.c.l.bf16 %v904
        %v969 = vunpack.c.l.bf16 %v905
        %v970 = vunpack.c.l.bf16 %v906
        %v971 = vunpack.c.l.bf16 %v907
        %v972 = vunpack.c.l.bf16 %v908
        %v973 = vunpack.c.l.bf16 %v909
        %v974 = vunpack.c.l.bf16 %v910
        %v975 = vunpack.c.l.bf16 %v911
        %v976 = vunpack.c.l.bf16 %v912
        %v977 = vunpack.c.l.bf16 %v913
        %v978 = vunpack.c.l.bf16 %v914
        %v979 = vunpack.c.l.bf16 %v915
        %v980 = vunpack.c.l.bf16 %v916
        %v981 = vunpack.c.l.bf16 %v917
        %v982 = vunpack.c.l.bf16 %v918
        %v983 = vmax.f32 %v919, 0.0
        %v984 = vmax.f32 %v920, 0.0
        %v985 = vmax.f32 %v921, 0.0
        %v986 = vmax.f32 %v922, 0.0
        %v987 = vmax.f32 %v923, 0.0
        %v988 = vmax.f32 %v924, 0.0
        %v989 = vmax.f32 %v925, 0.0
        %v990 = vmax.f32 %v926, 0.0
        %v991 = vmax.f32 %v927, 0.0
        %v992 = vmax.f32 %v928, 0.0
        %v993 = vmax.f32 %v929, 0.0
        %v994 = vmax.f32 %v930, 0.0
        %v995 = vmax.f32 %v931, 0.0
        %v996 = vmax.f32 %v932, 0.0
        %v997 = vmax.f32 %v933, 0.0
        %v998 = vmax.f32 %v934, 0.0
        %v999 = vmax.f32 %v935, 0.0
        %v1000 = vmax.f32 %v936, 0.0
        %v1001 = vmax.f32 %v937, 0.0
        %v1002 = vmax.f32 %v938, 0.0
        %v1003 = vmax.f32 %v939, 0.0
        %v1004 = vmax.f32 %v940, 0.0
        %v1005 = vmax.f32 %v941, 0.0
        %v1006 = vmax.f32 %v942, 0.0
        %v1007 = vmax.f32 %v943, 0.0
        %v1008 = vmax.f32 %v944, 0.0
        %v1009 = vmax.f32 %v945, 0.0
        %v1010 = vmax.f32 %v946, 0.0
        %v1011 = vmax.f32 %v947, 0.0
        %v1012 = vmax.f32 %v948, 0.0
        %v1013 = vmax.f32 %v949, 0.0
        %v1014 = vmax.f32 %v950, 0.0
        %v1015 = vmax.f32 %v951, 0.0
        %v1016 = vmax.f32 %v952, 0.0
        %v1017 = vmax.f32 %v953, 0.0
        %v1018 = vmax.f32 %v954, 0.0
        %v1019 = vmax.f32 %v955, 0.0
        %v1020 = vmax.f32 %v956, 0.0
        %v1021 = vmax.f32 %v957, 0.0
        %v1022 = vmax.f32 %v958, 0.0
        %v1023 = vmax.f32 %v959, 0.0
        %v1024 = vmax.f32 %v960, 0.0
        %v1025 = vmax.f32 %v961, 0.0
        %v1026 = vmax.f32 %v962, 0.0
        %v1027 = vmax.f32 %v963, 0.0
        %v1028 = vmax.f32 %v964, 0.0
        %v1029 = vmax.f32 %v965, 0.0
        %v1030 = vmax.f32 %v966, 0.0
        %v1031 = vmax.f32 %v967, 0.0
        %v1032 = vmax.f32 %v968, 0.0
        %v1033 = vmax.f32 %v969, 0.0
        %v1034 = vmax.f32 %v970, 0.0
        %v1035 = vmax.f32 %v971, 0.0
        %v1036 = vmax.f32 %v972, 0.0
        %v1037 = vmax.f32 %v973, 0.0
        %v1038 = vmax.f32 %v974, 0.0
        %v1039 = vmax.f32 %v975, 0.0
        %v1040 = vmax.f32 %v976, 0.0
        %v1041 = vmax.f32 %v977, 0.0
        %v1042 = vmax.f32 %v978, 0.0
        %v1043 = vmax.f32 %v979, 0.0
        %v1044 = vmax.f32 %v980, 0.0
        %v1045 = vmax.f32 %v981, 0.0
        %v1046 = vmax.f32 %v982, 0.0
        %v1047 = vpack.c.bf16 %v984, %v983
        %v1048 = vpack.c.bf16 %v986, %v985
        %v1049 = vpack.c.bf16 %v988, %v987
        %v1050 = vpack.c.bf16 %v990, %v989
        %v1051 = vpack.c.bf16 %v992, %v991
        %v1052 = vpack.c.bf16 %v994, %v993
        %v1053 = vpack.c.bf16 %v996, %v995
        %v1054 = vpack.c.bf16 %v998, %v997
        %v1055 = vpack.c.bf16 %v1000, %v999
        %v1056 = vpack.c.bf16 %v1002, %v1001
        %v1057 = vpack.c.bf16 %v1004, %v1003
        %v1058 = vpack.c.bf16 %v1006, %v1005
        %v1059 = vpack.c.bf16 %v1008, %v1007
        %v1060 = vpack.c.bf16 %v1010, %v1009
        %v1061 = vpack.c.bf16 %v1012, %v1011
        %v1062 = vpack.c.bf16 %v1014, %v1013
        %v1063 = vpack.c.bf16 %v1016, %v1015
        %v1064 = vpack.c.bf16 %v1018, %v1017
        %v1065 = vpack.c.bf16 %v1020, %v1019
        %v1066 = vpack.c.bf16 %v1022, %v1021
        %v1067 = vpack.c.bf16 %v1024, %v1023
        %v1068 = vpack.c.bf16 %v1026, %v1025
        %v1069 = vpack.c.bf16 %v1028, %v1027
        %v1070 = vpack.c.bf16 %v1030, %v1029
        %v1071 = vpack.c.bf16 %v1032, %v1031
        %v1072 = vpack.c.bf16 %v1034, %v1033
        %v1073 = vpack.c.bf16 %v1036, %v1035
        %v1074 = vpack.c.bf16 %v1038, %v1037
        %v1075 = vpack.c.bf16 %v1040, %v1039
        %v1076 = vpack.c.bf16 %v1042, %v1041
        %v1077 = vpack.c.bf16 %v1044, %v1043
        %v1078 = vpack.c.bf16 %v1046, %v1045
        %v1079 = vld [vmem:[%s3] sm:$0xf]
        %v1080 = vld [vmem:[%s3 + $0x4] sm:$0xf]
        %v1081 = vld [vmem:[%s3 + $0x8] sm:$0xf]
        %v1082 = vld [vmem:[%s3 + $0xc] sm:$0xf]
        %v1083 = vld [vmem:[%s3 + $0x10] sm:$0xf]
        %v1084 = vld [vmem:[%s3 + $0x14] sm:$0xf]
        %v1085 = vld [vmem:[%s3 + $0x18] sm:$0xf]
        %v1086 = vld [vmem:[%s3 + $0x1c] sm:$0xf]
        %v1087 = vld [vmem:[%s4] sm:$0x1]
        %v1089 = vperm.slane %v1087, 0
        %v1099 = vunpack.c.l.b16 %v1079
        %v1100 = vunpack.c.l.b16 %v1080
        %v1101 = vunpack.c.l.b16 %v1081
        %v1102 = vunpack.c.l.b16 %v1082
        %v1103 = vunpack.c.l.b16 %v1083
        %v1104 = vunpack.c.l.b16 %v1084
        %v1105 = vunpack.c.l.b16 %v1085
        %v1106 = vunpack.c.l.b16 %v1086
        %v1107 = vpack.c.b16 %v1100, %v1099
        %v1108 = vpack.c.b16 %v1102, %v1101
        %v1109 = vpack.c.b16 %v1104, %v1103
        %v1110 = vpack.c.b16 %v1106, %v1105
        %vm1115 = vcmask 523264
        %v1117 = vsel %vm1115, %v1047, 0
        %v1120 = vsel %vm1115, %v1048, 0
        %v1123 = vsel %vm1115, %v1049, 0
        %v1126 = vsel %vm1115, %v1050, 0
        %v1129 = vsel %vm1115, %v1051, 0
        %v1132 = vsel %vm1115, %v1052, 0
        %v1135 = vsel %vm1115, %v1053, 0
        %v1138 = vsel %vm1115, %v1054, 0
        %v1141 = vsel %vm1115, %v1055, 0
        %v1144 = vsel %vm1115, %v1056, 0
        %v1147 = vsel %vm1115, %v1057, 0
        %v1150 = vsel %vm1115, %v1058, 0
        %v1153 = vsel %vm1115, %v1059, 0
        %v1156 = vsel %vm1115, %v1060, 0
        %v1159 = vsel %vm1115, %v1061, 0
        %v1162 = vsel %vm1115, %v1062, 0
        %v1165 = vsel %vm1115, %v1063, 0
        %v1168 = vsel %vm1115, %v1064, 0
        %v1171 = vsel %vm1115, %v1065, 0
        %v1174 = vsel %vm1115, %v1066, 0
        %v1177 = vsel %vm1115, %v1067, 0
        %v1180 = vsel %vm1115, %v1068, 0
        %v1183 = vsel %vm1115, %v1069, 0
        %v1186 = vsel %vm1115, %v1070, 0
        %v1189 = vsel %vm1115, %v1071, 0
        %v1192 = vsel %vm1115, %v1072, 0
        %v1195 = vsel %vm1115, %v1073, 0
        %v1198 = vsel %vm1115, %v1074, 0
        %v1201 = vsel %vm1115, %v1075, 0
        %v1204 = vsel %vm1115, %v1076, 0
        %v1207 = vsel %vm1115, %v1077, 0
        %v1210 = vsel %vm1115, %v1078, 0
        %1212 = vmatpush.bf16.msra.mxu0 0
        %1213 = vmatpush.bf16.msra.mxu0 0
        %1214 = vmatpush.bf16.msra.mxu0 0
        %1215 = vmatpush.bf16.msra.mxu0 0
        %1216 = vmatpush.bf16.msra.mxu0 %v1110
        %1217 = vmatpush.bf16.msra.mxu0 %v1109
        %1218 = vmatpush.bf16.msra.mxu0 %v1108
        %1219 = vmatpush.bf16.msra.mxu0 %v1107
        %1220 = vmatmul.bf16.gmra.mxu0 %v1117
        %v1221 = vpop.f32.mrf.mxu0
        %v1222 = vadd.f32 %v1089, %v1221
        %v1223 = vpop.f32.mrf.mxu0
        %v1224 = vadd.f32 %v1089, %v1223
        %1225 = vmatmul.bf16.gmra.mxu0 %v1120
        %v1226 = vpop.f32.mrf.mxu0
        %v1227 = vadd.f32 %v1089, %v1226
        %v1228 = vpop.f32.mrf.mxu0
        %v1229 = vadd.f32 %v1089, %v1228
        %1230 = vmatmul.bf16.gmra.mxu0 %v1123
        %v1231 = vpop.f32.mrf.mxu0
        %v1232 = vadd.f32 %v1089, %v1231
        %v1233 = vpop.f32.mrf.mxu0
        %v1234 = vadd.f32 %v1089, %v1233
        %1235 = vmatmul.bf16.gmra.mxu0 %v1126
        %v1236 = vpop.f32.mrf.mxu0
        %v1237 = vadd.f32 %v1089, %v1236
        %v1238 = vpop.f32.mrf.mxu0
        %v1239 = vadd.f32 %v1089, %v1238
        %1240 = vmatmul.bf16.gmra.mxu0 %v1129
        %v1241 = vpop.f32.mrf.mxu0
        %v1242 = vadd.f32 %v1089, %v1241
        %v1243 = vpop.f32.mrf.mxu0
        %v1244 = vadd.f32 %v1089, %v1243
        %1245 = vmatmul.bf16.gmra.mxu0 %v1132
        %v1246 = vpop.f32.mrf.mxu0
        %v1247 = vadd.f32 %v1089, %v1246
        %v1248 = vpop.f32.mrf.mxu0
        %v1249 = vadd.f32 %v1089, %v1248
        %1250 = vmatmul.bf16.gmra.mxu0 %v1135
        %v1251 = vpop.f32.mrf.mxu0
        %v1252 = vadd.f32 %v1089, %v1251
        %v1253 = vpop.f32.mrf.mxu0
        %v1254 = vadd.f32 %v1089, %v1253
        %1255 = vmatmul.bf16.gmra.mxu0 %v1138
        %v1256 = vpop.f32.mrf.mxu0
        %v1257 = vadd.f32 %v1089, %v1256
        %v1258 = vpop.f32.mrf.mxu0
        %v1259 = vadd.f32 %v1089, %v1258
        %1260 = vmatmul.bf16.gmra.mxu0 %v1141
        %v1261 = vpop.f32.mrf.mxu0
        %v1262 = vadd.f32 %v1089, %v1261
        %v1263 = vpop.f32.mrf.mxu0
        %v1264 = vadd.f32 %v1089, %v1263
        %1265 = vmatmul.bf16.gmra.mxu0 %v1144
        %v1266 = vpop.f32.mrf.mxu0
        %v1267 = vadd.f32 %v1089, %v1266
        %v1268 = vpop.f32.mrf.mxu0
        %v1269 = vadd.f32 %v1089, %v1268
        %1270 = vmatmul.bf16.gmra.mxu0 %v1147
        %v1271 = vpop.f32.mrf.mxu0
        %v1272 = vadd.f32 %v1089, %v1271
        %v1273 = vpop.f32.mrf.mxu0
        %v1274 = vadd.f32 %v1089, %v1273
        %1275 = vmatmul.bf16.gmra.mxu0 %v1150
        %v1276 = vpop.f32.mrf.mxu0
        %v1277 = vadd.f32 %v1089, %v1276
        %v1278 = vpop.f32.mrf.mxu0
        %v1279 = vadd.f32 %v1089, %v1278
        %1280 = vmatmul.bf16.gmra.mxu0 %v1153
        %v1281 = vpop.f32.mrf.mxu0
        %v1282 = vadd.f32 %v1089, %v1281
        %v1283 = vpop.f32.mrf.mxu0
        %v1284 = vadd.f32 %v1089, %v1283
        %1285 = vmatmul.bf16.gmra.mxu0 %v1156
        %v1286 = vpop.f32.mrf.mxu0
        %v1287 = vadd.f32 %v1089, %v1286
        %v1288 = vpop.f32.mrf.mxu0
        %v1289 = vadd.f32 %v1089, %v1288
        %1290 = vmatmul.bf16.gmra.mxu0 %v1159
        %v1291 = vpop.f32.mrf.mxu0
        %v1292 = vadd.f32 %v1089, %v1291
        %v1293 = vpop.f32.mrf.mxu0
        %v1294 = vadd.f32 %v1089, %v1293
        %1295 = vmatmul.bf16.gmra.mxu0 %v1162
        %v1296 = vpop.f32.mrf.mxu0
        %v1297 = vadd.f32 %v1089, %v1296
        %v1298 = vpop.f32.mrf.mxu0
        %v1299 = vadd.f32 %v1089, %v1298
        %1300 = vmatmul.bf16.gmra.mxu0 %v1165
        %v1301 = vpop.f32.mrf.mxu0
        %v1302 = vadd.f32 %v1089, %v1301
        %v1303 = vpop.f32.mrf.mxu0
        %v1304 = vadd.f32 %v1089, %v1303
        %1305 = vmatmul.bf16.gmra.mxu0 %v1168
        %v1306 = vpop.f32.mrf.mxu0
        %v1307 = vadd.f32 %v1089, %v1306
        %v1308 = vpop.f32.mrf.mxu0
        %v1309 = vadd.f32 %v1089, %v1308
        %1310 = vmatmul.bf16.gmra.mxu0 %v1171
        %v1311 = vpop.f32.mrf.mxu0
        %v1312 = vadd.f32 %v1089, %v1311
        %v1313 = vpop.f32.mrf.mxu0
        %v1314 = vadd.f32 %v1089, %v1313
        %1315 = vmatmul.bf16.gmra.mxu0 %v1174
        %v1316 = vpop.f32.mrf.mxu0
        %v1317 = vadd.f32 %v1089, %v1316
        %v1318 = vpop.f32.mrf.mxu0
        %v1319 = vadd.f32 %v1089, %v1318
        %1320 = vmatmul.bf16.gmra.mxu0 %v1177
        %v1321 = vpop.f32.mrf.mxu0
        %v1322 = vadd.f32 %v1089, %v1321
        %v1323 = vpop.f32.mrf.mxu0
        %v1324 = vadd.f32 %v1089, %v1323
        %1325 = vmatmul.bf16.gmra.mxu0 %v1180
        %v1326 = vpop.f32.mrf.mxu0
        %v1327 = vadd.f32 %v1089, %v1326
        %v1328 = vpop.f32.mrf.mxu0
        %v1329 = vadd.f32 %v1089, %v1328
        %1330 = vmatmul.bf16.gmra.mxu0 %v1183
        %v1331 = vpop.f32.mrf.mxu0
        %v1332 = vadd.f32 %v1089, %v1331
        %v1333 = vpop.f32.mrf.mxu0
        %v1334 = vadd.f32 %v1089, %v1333
        %1335 = vmatmul.bf16.gmra.mxu0 %v1186
        %v1336 = vpop.f32.mrf.mxu0
        %v1337 = vadd.f32 %v1089, %v1336
        %v1338 = vpop.f32.mrf.mxu0
        %v1339 = vadd.f32 %v1089, %v1338
        %1340 = vmatmul.bf16.gmra.mxu0 %v1189
        %v1341 = vpop.f32.mrf.mxu0
        %v1342 = vadd.f32 %v1089, %v1341
        %v1343 = vpop.f32.mrf.mxu0
        %v1344 = vadd.f32 %v1089, %v1343
        %1345 = vmatmul.bf16.gmra.mxu0 %v1192
        %v1346 = vpop.f32.mrf.mxu0
        %v1347 = vadd.f32 %v1089, %v1346
        %v1348 = vpop.f32.mrf.mxu0
        %v1349 = vadd.f32 %v1089, %v1348
        %1350 = vmatmul.bf16.gmra.mxu0 %v1195
        %v1351 = vpop.f32.mrf.mxu0
        %v1352 = vadd.f32 %v1089, %v1351
        %v1353 = vpop.f32.mrf.mxu0
        %v1354 = vadd.f32 %v1089, %v1353
        %1355 = vmatmul.bf16.gmra.mxu0 %v1198
        %v1356 = vpop.f32.mrf.mxu0
        %v1357 = vadd.f32 %v1089, %v1356
        %v1358 = vpop.f32.mrf.mxu0
        %v1359 = vadd.f32 %v1089, %v1358
        %1360 = vmatmul.bf16.gmra.mxu0 %v1201
        %v1361 = vpop.f32.mrf.mxu0
        %v1362 = vadd.f32 %v1089, %v1361
        %v1363 = vpop.f32.mrf.mxu0
        %v1364 = vadd.f32 %v1089, %v1363
        %1365 = vmatmul.bf16.gmra.mxu0 %v1204
        %v1366 = vpop.f32.mrf.mxu0
        %v1367 = vadd.f32 %v1089, %v1366
        %v1368 = vpop.f32.mrf.mxu0
        %v1369 = vadd.f32 %v1089, %v1368
        %1370 = vmatmul.bf16.gmra.mxu0 %v1207
        %v1371 = vpop.f32.mrf.mxu0
        %v1372 = vadd.f32 %v1089, %v1371
        %v1373 = vpop.f32.mrf.mxu0
        %v1374 = vadd.f32 %v1089, %v1373
        %1375 = vmatmul.bf16.gmra.mxu0 %v1210
        %v1376 = vpop.f32.mrf.mxu0
        %v1377 = vadd.f32 %v1089, %v1376
        %v1378 = vpop.f32.mrf.mxu0
        %v1379 = vadd.f32 %v1089, %v1378
        %1380 = vdwg.mxu0
        %v1381 = vpack.c.bf16 %v1222, %v1222
        %v1382 = vpack.c.bf16 %v1224, %v1224
        %v1383 = vpack.c.bf16 %v1227, %v1227
        %v1384 = vpack.c.bf16 %v1229, %v1229
        %v1385 = vpack.c.bf16 %v1232, %v1232
        %v1386 = vpack.c.bf16 %v1234, %v1234
        %v1387 = vpack.c.bf16 %v1237, %v1237
        %v1388 = vpack.c.bf16 %v1239, %v1239
        %v1389 = vpack.c.bf16 %v1242, %v1242
        %v1390 = vpack.c.bf16 %v1244, %v1244
        %v1391 = vpack.c.bf16 %v1247, %v1247
        %v1392 = vpack.c.bf16 %v1249, %v1249
        %v1393 = vpack.c.bf16 %v1252, %v1252
        %v1394 = vpack.c.bf16 %v1254, %v1254
        %v1395 = vpack.c.bf16 %v1257, %v1257
        %v1396 = vpack.c.bf16 %v1259, %v1259
        %v1397 = vpack.c.bf16 %v1262, %v1262
        %v1398 = vpack.c.bf16 %v1264, %v1264
        %v1399 = vpack.c.bf16 %v1267, %v1267
        %v1400 = vpack.c.bf16 %v1269, %v1269
        %v1401 = vpack.c.bf16 %v1272, %v1272
        %v1402 = vpack.c.bf16 %v1274, %v1274
        %v1403 = vpack.c.bf16 %v1277, %v1277
        %v1404 = vpack.c.bf16 %v1279, %v1279
        %v1405 = vpack.c.bf16 %v1282, %v1282
        %v1406 = vpack.c.bf16 %v1284, %v1284
        %v1407 = vpack.c.bf16 %v1287, %v1287
        %v1408 = vpack.c.bf16 %v1289, %v1289
        %v1409 = vpack.c.bf16 %v1292, %v1292
        %v1410 = vpack.c.bf16 %v1294, %v1294
        %v1411 = vpack.c.bf16 %v1297, %v1297
        %v1412 = vpack.c.bf16 %v1299, %v1299
        %v1413 = vpack.c.bf16 %v1302, %v1302
        %v1414 = vpack.c.bf16 %v1304, %v1304
        %v1415 = vpack.c.bf16 %v1307, %v1307
        %v1416 = vpack.c.bf16 %v1309, %v1309
        %v1417 = vpack.c.bf16 %v1312, %v1312
        %v1418 = vpack.c.bf16 %v1314, %v1314
        %v1419 = vpack.c.bf16 %v1317, %v1317
        %v1420 = vpack.c.bf16 %v1319, %v1319
        %v1421 = vpack.c.bf16 %v1322, %v1322
        %v1422 = vpack.c.bf16 %v1324, %v1324
        %v1423 = vpack.c.bf16 %v1327, %v1327
        %v1424 = vpack.c.bf16 %v1329, %v1329
        %v1425 = vpack.c.bf16 %v1332, %v1332
        %v1426 = vpack.c.bf16 %v1334, %v1334
        %v1427 = vpack.c.bf16 %v1337, %v1337
        %v1428 = vpack.c.bf16 %v1339, %v1339
        %v1429 = vpack.c.bf16 %v1342, %v1342
        %v1430 = vpack.c.bf16 %v1344, %v1344
        %v1431 = vpack.c.bf16 %v1347, %v1347
        %v1432 = vpack.c.bf16 %v1349, %v1349
        %v1433 = vpack.c.bf16 %v1352, %v1352
        %v1434 = vpack.c.bf16 %v1354, %v1354
        %v1435 = vpack.c.bf16 %v1357, %v1357
        %v1436 = vpack.c.bf16 %v1359, %v1359
        %v1437 = vpack.c.bf16 %v1362, %v1362
        %v1438 = vpack.c.bf16 %v1364, %v1364
        %v1439 = vpack.c.bf16 %v1367, %v1367
        %v1440 = vpack.c.bf16 %v1369, %v1369
        %v1441 = vpack.c.bf16 %v1372, %v1372
        %v1442 = vpack.c.bf16 %v1374, %v1374
        %v1443 = vpack.c.bf16 %v1377, %v1377
        %v1444 = vpack.c.bf16 %v1379, %v1379
        %v1445 = vunpack.c.l.bf16 %v1381
        %v1446 = vunpack.c.l.bf16 %v1382
        %v1447 = vunpack.c.l.bf16 %v1383
        %v1448 = vunpack.c.l.bf16 %v1384
        %v1449 = vunpack.c.l.bf16 %v1385
        %v1450 = vunpack.c.l.bf16 %v1386
        %v1451 = vunpack.c.l.bf16 %v1387
        %v1452 = vunpack.c.l.bf16 %v1388
        %v1453 = vunpack.c.l.bf16 %v1389
        %v1454 = vunpack.c.l.bf16 %v1390
        %v1455 = vunpack.c.l.bf16 %v1391
        %v1456 = vunpack.c.l.bf16 %v1392
        %v1457 = vunpack.c.l.bf16 %v1393
        %v1458 = vunpack.c.l.bf16 %v1394
        %v1459 = vunpack.c.l.bf16 %v1395
        %v1460 = vunpack.c.l.bf16 %v1396
        %v1461 = vunpack.c.l.bf16 %v1397
        %v1462 = vunpack.c.l.bf16 %v1398
        %v1463 = vunpack.c.l.bf16 %v1399
        %v1464 = vunpack.c.l.bf16 %v1400
        %v1465 = vunpack.c.l.bf16 %v1401
        %v1466 = vunpack.c.l.bf16 %v1402
        %v1467 = vunpack.c.l.bf16 %v1403
        %v1468 = vunpack.c.l.bf16 %v1404
        %v1469 = vunpack.c.l.bf16 %v1405
        %v1470 = vunpack.c.l.bf16 %v1406
        %v1471 = vunpack.c.l.bf16 %v1407
        %v1472 = vunpack.c.l.bf16 %v1408
        %v1473 = vunpack.c.l.bf16 %v1409
        %v1474 = vunpack.c.l.bf16 %v1410
        %v1475 = vunpack.c.l.bf16 %v1411
        %v1476 = vunpack.c.l.bf16 %v1412
        %v1477 = vunpack.c.l.bf16 %v1413
        %v1478 = vunpack.c.l.bf16 %v1414
        %v1479 = vunpack.c.l.bf16 %v1415
        %v1480 = vunpack.c.l.bf16 %v1416
        %v1481 = vunpack.c.l.bf16 %v1417
        %v1482 = vunpack.c.l.bf16 %v1418
        %v1483 = vunpack.c.l.bf16 %v1419
        %v1484 = vunpack.c.l.bf16 %v1420
        %v1485 = vunpack.c.l.bf16 %v1421
        %v1486 = vunpack.c.l.bf16 %v1422
        %v1487 = vunpack.c.l.bf16 %v1423
        %v1488 = vunpack.c.l.bf16 %v1424
        %v1489 = vunpack.c.l.bf16 %v1425
        %v1490 = vunpack.c.l.bf16 %v1426
        %v1491 = vunpack.c.l.bf16 %v1427
        %v1492 = vunpack.c.l.bf16 %v1428
        %v1493 = vunpack.c.l.bf16 %v1429
        %v1494 = vunpack.c.l.bf16 %v1430
        %v1495 = vunpack.c.l.bf16 %v1431
        %v1496 = vunpack.c.l.bf16 %v1432
        %v1497 = vunpack.c.l.bf16 %v1433
        %v1498 = vunpack.c.l.bf16 %v1434
        %v1499 = vunpack.c.l.bf16 %v1435
        %v1500 = vunpack.c.l.bf16 %v1436
        %v1501 = vunpack.c.l.bf16 %v1437
        %v1502 = vunpack.c.l.bf16 %v1438
        %v1503 = vunpack.c.l.bf16 %v1439
        %v1504 = vunpack.c.l.bf16 %v1440
        %v1505 = vunpack.c.l.bf16 %v1441
        %v1506 = vunpack.c.l.bf16 %v1442
        %v1507 = vunpack.c.l.bf16 %v1443
        %v1508 = vunpack.c.l.bf16 %v1444
        %v1509 = vmax.f32 %v1445, 0.0
        %v1510 = vmax.f32 %v1446, 0.0
        %v1511 = vmax.f32 %v1447, 0.0
        %v1512 = vmax.f32 %v1448, 0.0
        %v1513 = vmax.f32 %v1449, 0.0
        %v1514 = vmax.f32 %v1450, 0.0
        %v1515 = vmax.f32 %v1451, 0.0
        %v1516 = vmax.f32 %v1452, 0.0
        %v1517 = vmax.f32 %v1453, 0.0
        %v1518 = vmax.f32 %v1454, 0.0
        %v1519 = vmax.f32 %v1455, 0.0
        %v1520 = vmax.f32 %v1456, 0.0
        %v1521 = vmax.f32 %v1457, 0.0
        %v1522 = vmax.f32 %v1458, 0.0
        %v1523 = vmax.f32 %v1459, 0.0
        %v1524 = vmax.f32 %v1460, 0.0
        %v1525 = vmax.f32 %v1461, 0.0
        %v1526 = vmax.f32 %v1462, 0.0
        %v1527 = vmax.f32 %v1463, 0.0
        %v1528 = vmax.f32 %v1464, 0.0
        %v1529 = vmax.f32 %v1465, 0.0
        %v1530 = vmax.f32 %v1466, 0.0
        %v1531 = vmax.f32 %v1467, 0.0
        %v1532 = vmax.f32 %v1468, 0.0
        %v1533 = vmax.f32 %v1469, 0.0
        %v1534 = vmax.f32 %v1470, 0.0
        %v1535 = vmax.f32 %v1471, 0.0
        %v1536 = vmax.f32 %v1472, 0.0
        %v1537 = vmax.f32 %v1473, 0.0
        %v1538 = vmax.f32 %v1474, 0.0
        %v1539 = vmax.f32 %v1475, 0.0
        %v1540 = vmax.f32 %v1476, 0.0
        %v1541 = vmax.f32 %v1477, 0.0
        %v1542 = vmax.f32 %v1478, 0.0
        %v1543 = vmax.f32 %v1479, 0.0
        %v1544 = vmax.f32 %v1480, 0.0
        %v1545 = vmax.f32 %v1481, 0.0
        %v1546 = vmax.f32 %v1482, 0.0
        %v1547 = vmax.f32 %v1483, 0.0
        %v1548 = vmax.f32 %v1484, 0.0
        %v1549 = vmax.f32 %v1485, 0.0
        %v1550 = vmax.f32 %v1486, 0.0
        %v1551 = vmax.f32 %v1487, 0.0
        %v1552 = vmax.f32 %v1488, 0.0
        %v1553 = vmax.f32 %v1489, 0.0
        %v1554 = vmax.f32 %v1490, 0.0
        %v1555 = vmax.f32 %v1491, 0.0
        %v1556 = vmax.f32 %v1492, 0.0
        %v1557 = vmax.f32 %v1493, 0.0
        %v1558 = vmax.f32 %v1494, 0.0
        %v1559 = vmax.f32 %v1495, 0.0
        %v1560 = vmax.f32 %v1496, 0.0
        %v1561 = vmax.f32 %v1497, 0.0
        %v1562 = vmax.f32 %v1498, 0.0
        %v1563 = vmax.f32 %v1499, 0.0
        %v1564 = vmax.f32 %v1500, 0.0
        %v1565 = vmax.f32 %v1501, 0.0
        %v1566 = vmax.f32 %v1502, 0.0
        %v1567 = vmax.f32 %v1503, 0.0
        %v1568 = vmax.f32 %v1504, 0.0
        %v1569 = vmax.f32 %v1505, 0.0
        %v1570 = vmax.f32 %v1506, 0.0
        %v1571 = vmax.f32 %v1507, 0.0
        %v1572 = vmax.f32 %v1508, 0.0
        %v1573 = vpack.c.bf16 %v1510, %v1509
        %v1574 = vpack.c.bf16 %v1512, %v1511
        %v1575 = vpack.c.bf16 %v1514, %v1513
        %v1576 = vpack.c.bf16 %v1516, %v1515
        %v1577 = vpack.c.bf16 %v1518, %v1517
        %v1578 = vpack.c.bf16 %v1520, %v1519
        %v1579 = vpack.c.bf16 %v1522, %v1521
        %v1580 = vpack.c.bf16 %v1524, %v1523
        %v1581 = vpack.c.bf16 %v1526, %v1525
        %v1582 = vpack.c.bf16 %v1528, %v1527
        %v1583 = vpack.c.bf16 %v1530, %v1529
        %v1584 = vpack.c.bf16 %v1532, %v1531
        %v1585 = vpack.c.bf16 %v1534, %v1533
        %v1586 = vpack.c.bf16 %v1536, %v1535
        %v1587 = vpack.c.bf16 %v1538, %v1537
        %v1588 = vpack.c.bf16 %v1540, %v1539
        %v1589 = vpack.c.bf16 %v1542, %v1541
        %v1590 = vpack.c.bf16 %v1544, %v1543
        %v1591 = vpack.c.bf16 %v1546, %v1545
        %v1592 = vpack.c.bf16 %v1548, %v1547
        %v1593 = vpack.c.bf16 %v1550, %v1549
        %v1594 = vpack.c.bf16 %v1552, %v1551
        %v1595 = vpack.c.bf16 %v1554, %v1553
        %v1596 = vpack.c.bf16 %v1556, %v1555
        %v1597 = vpack.c.bf16 %v1558, %v1557
        %v1598 = vpack.c.bf16 %v1560, %v1559
        %v1599 = vpack.c.bf16 %v1562, %v1561
        %v1600 = vpack.c.bf16 %v1564, %v1563
        %v1601 = vpack.c.bf16 %v1566, %v1565
        %v1602 = vpack.c.bf16 %v1568, %v1567
        %v1603 = vpack.c.bf16 %v1570, %v1569
        %v1604 = vpack.c.bf16 %v1572, %v1571
        %v1605 = vld [vmem:[%s5] sm:$0xff]
        %v1606 = vld [vmem:[%s5 + $0x8] sm:$0xff]
        %v1607 = vld [vmem:[%s5 + $0x10] sm:$0xff]
        %v1608 = vld [vmem:[%s5 + $0x18] sm:$0xff]
        %v1609 = vld [vmem:[%s5 + $0x20] sm:$0xff]
        %v1610 = vld [vmem:[%s5 + $0x28] sm:$0xff]
        %v1611 = vld [vmem:[%s5 + $0x30] sm:$0xff]
        %v1612 = vld [vmem:[%s5 + $0x38] sm:$0xff]
        %v1613 = vld [vmem:[%s5 + $0x40] sm:$0xff]
        %v1614 = vld [vmem:[%s5 + $0x48] sm:$0xff]
        %v1615 = vld [vmem:[%s5 + $0x50] sm:$0xff]
        %v1616 = vld [vmem:[%s5 + $0x58] sm:$0xff]
        %v1617 = vld [vmem:[%s5 + $0x60] sm:$0xff]
        %v1618 = vld [vmem:[%s5 + $0x68] sm:$0xff]
        %v1619 = vld [vmem:[%s5 + $0x70] sm:$0xff]
        %v1620 = vld [vmem:[%s5 + $0x78] sm:$0xff]
        %v1621 = vld [vmem:[%s6] sm:$0x3]
        %v1623 = vperm.slane %v1621, 0
        %v1624 = vperm.slane %v1621, 1
        %v1643 = vunpack.c.l.b16 %v1605
        %v1644 = vunpack.c.h.b16 %v1605
        %v1645 = vunpack.c.l.b16 %v1606
        %v1646 = vunpack.c.h.b16 %v1606
        %v1647 = vunpack.c.l.b16 %v1607
        %v1648 = vunpack.c.h.b16 %v1607
        %v1649 = vunpack.c.l.b16 %v1608
        %v1650 = vunpack.c.h.b16 %v1608
        %v1651 = vunpack.c.l.b16 %v1609
        %v1652 = vunpack.c.h.b16 %v1609
        %v1653 = vunpack.c.l.b16 %v1610
        %v1654 = vunpack.c.h.b16 %v1610
        %v1655 = vunpack.c.l.b16 %v1611
        %v1656 = vunpack.c.h.b16 %v1611
        %v1657 = vunpack.c.l.b16 %v1612
        %v1658 = vunpack.c.h.b16 %v1612
        %v1659 = vunpack.c.l.b16 %v1613
        %v1660 = vunpack.c.h.b16 %v1613
        %v1661 = vunpack.c.l.b16 %v1614
        %v1662 = vunpack.c.h.b16 %v1614
        %v1663 = vunpack.c.l.b16 %v1615
        %v1664 = vunpack.c.h.b16 %v1615
        %v1665 = vunpack.c.l.b16 %v1616
        %v1666 = vunpack.c.h.b16 %v1616
        %v1667 = vunpack.c.l.b16 %v1617
        %v1668 = vunpack.c.h.b16 %v1617
        %v1669 = vunpack.c.l.b16 %v1618
        %v1670 = vunpack.c.h.b16 %v1618
        %v1671 = vunpack.c.l.b16 %v1619
        %v1672 = vunpack.c.h.b16 %v1619
        %v1673 = vunpack.c.l.b16 %v1620
        %v1674 = vunpack.c.h.b16 %v1620
        %v1675 = vpack.c.b16 %v1645, %v1643
        %v1676 = vpack.c.b16 %v1646, %v1644
        %v1677 = vpack.c.b16 %v1649, %v1647
        %v1678 = vpack.c.b16 %v1650, %v1648
        %v1679 = vpack.c.b16 %v1653, %v1651
        %v1680 = vpack.c.b16 %v1654, %v1652
        %v1681 = vpack.c.b16 %v1657, %v1655
        %v1682 = vpack.c.b16 %v1658, %v1656
        %v1683 = vpack.c.b16 %v1661, %v1659
        %v1684 = vpack.c.b16 %v1662, %v1660
        %v1685 = vpack.c.b16 %v1665, %v1663
        %v1686 = vpack.c.b16 %v1666, %v1664
        %v1687 = vpack.c.b16 %v1669, %v1667
        %v1688 = vpack.c.b16 %v1670, %v1668
        %v1689 = vpack.c.b16 %v1673, %v1671
        %v1690 = vpack.c.b16 %v1674, %v1672
        %1707 = vmatpush.bf16.msra.mxu0 %v1689
        %1708 = vmatpush.bf16.msra.mxu0 %v1687
        %1709 = vmatpush.bf16.msra.mxu0 %v1685
        %1710 = vmatpush.bf16.msra.mxu0 %v1683
        %1711 = vmatpush.bf16.msra.mxu0 %v1681
        %1712 = vmatpush.bf16.msra.mxu0 %v1679
        %1713 = vmatpush.bf16.msra.mxu0 %v1677
        %1714 = vmatpush.bf16.msra.mxu0 %v1675
        %1715 = vmatmul.bf16.gmra.mxu0 %v1573
        %v1716 = vpop.f32.mrf.mxu0
        %v1717 = vadd.f32 %v1623, %v1716
        %v1718 = vpop.f32.mrf.mxu0
        %v1719 = vadd.f32 %v1623, %v1718
        %1720 = vmatmul.bf16.gmra.mxu0 %v1574
        %v1721 = vpop.f32.mrf.mxu0
        %v1722 = vadd.f32 %v1623, %v1721
        %v1723 = vpop.f32.mrf.mxu0
        %v1724 = vadd.f32 %v1623, %v1723
        %1725 = vmatmul.bf16.gmra.mxu0 %v1575
        %v1726 = vpop.f32.mrf.mxu0
        %v1727 = vadd.f32 %v1623, %v1726
        %v1728 = vpop.f32.mrf.mxu0
        %v1729 = vadd.f32 %v1623, %v1728
        %1730 = vmatmul.bf16.gmra.mxu0 %v1576
        %v1731 = vpop.f32.mrf.mxu0
        %v1732 = vadd.f32 %v1623, %v1731
        %v1733 = vpop.f32.mrf.mxu0
        %v1734 = vadd.f32 %v1623, %v1733
        %1735 = vmatmul.bf16.gmra.mxu0 %v1577
        %v1736 = vpop.f32.mrf.mxu0
        %v1737 = vadd.f32 %v1623, %v1736
        %v1738 = vpop.f32.mrf.mxu0
        %v1739 = vadd.f32 %v1623, %v1738
        %1740 = vmatmul.bf16.gmra.mxu0 %v1578
        %v1741 = vpop.f32.mrf.mxu0
        %v1742 = vadd.f32 %v1623, %v1741
        %v1743 = vpop.f32.mrf.mxu0
        %v1744 = vadd.f32 %v1623, %v1743
        %1745 = vmatmul.bf16.gmra.mxu0 %v1579
        %v1746 = vpop.f32.mrf.mxu0
        %v1747 = vadd.f32 %v1623, %v1746
        %v1748 = vpop.f32.mrf.mxu0
        %v1749 = vadd.f32 %v1623, %v1748
        %1750 = vmatmul.bf16.gmra.mxu0 %v1580
        %v1751 = vpop.f32.mrf.mxu0
        %v1752 = vadd.f32 %v1623, %v1751
        %v1753 = vpop.f32.mrf.mxu0
        %v1754 = vadd.f32 %v1623, %v1753
        %1755 = vmatmul.bf16.gmra.mxu0 %v1581
        %v1756 = vpop.f32.mrf.mxu0
        %v1757 = vadd.f32 %v1623, %v1756
        %v1758 = vpop.f32.mrf.mxu0
        %v1759 = vadd.f32 %v1623, %v1758
        %1760 = vmatmul.bf16.gmra.mxu0 %v1582
        %v1761 = vpop.f32.mrf.mxu0
        %v1762 = vadd.f32 %v1623, %v1761
        %v1763 = vpop.f32.mrf.mxu0
        %v1764 = vadd.f32 %v1623, %v1763
        %1765 = vmatmul.bf16.gmra.mxu0 %v1583
        %v1766 = vpop.f32.mrf.mxu0
        %v1767 = vadd.f32 %v1623, %v1766
        %v1768 = vpop.f32.mrf.mxu0
        %v1769 = vadd.f32 %v1623, %v1768
        %1770 = vmatmul.bf16.gmra.mxu0 %v1584
        %v1771 = vpop.f32.mrf.mxu0
        %v1772 = vadd.f32 %v1623, %v1771
        %v1773 = vpop.f32.mrf.mxu0
        %v1774 = vadd.f32 %v1623, %v1773
        %1775 = vmatmul.bf16.gmra.mxu0 %v1585
        %v1776 = vpop.f32.mrf.mxu0
        %v1777 = vadd.f32 %v1623, %v1776
        %v1778 = vpop.f32.mrf.mxu0
        %v1779 = vadd.f32 %v1623, %v1778
        %1780 = vmatmul.bf16.gmra.mxu0 %v1586
        %v1781 = vpop.f32.mrf.mxu0
        %v1782 = vadd.f32 %v1623, %v1781
        %v1783 = vpop.f32.mrf.mxu0
        %v1784 = vadd.f32 %v1623, %v1783
        %1785 = vmatmul.bf16.gmra.mxu0 %v1587
        %v1786 = vpop.f32.mrf.mxu0
        %v1787 = vadd.f32 %v1623, %v1786
        %v1788 = vpop.f32.mrf.mxu0
        %v1789 = vadd.f32 %v1623, %v1788
        %1790 = vmatmul.bf16.gmra.mxu0 %v1588
        %v1791 = vpop.f32.mrf.mxu0
        %v1792 = vadd.f32 %v1623, %v1791
        %v1793 = vpop.f32.mrf.mxu0
        %v1794 = vadd.f32 %v1623, %v1793
        %1795 = vmatmul.bf16.gmra.mxu0 %v1589
        %v1796 = vpop.f32.mrf.mxu0
        %v1797 = vadd.f32 %v1623, %v1796
        %v1798 = vpop.f32.mrf.mxu0
        %v1799 = vadd.f32 %v1623, %v1798
        %1800 = vmatmul.bf16.gmra.mxu0 %v1590
        %v1801 = vpop.f32.mrf.mxu0
        %v1802 = vadd.f32 %v1623, %v1801
        %v1803 = vpop.f32.mrf.mxu0
        %v1804 = vadd.f32 %v1623, %v1803
        %1805 = vmatmul.bf16.gmra.mxu0 %v1591
        %v1806 = vpop.f32.mrf.mxu0
        %v1807 = vadd.f32 %v1623, %v1806
        %v1808 = vpop.f32.mrf.mxu0
        %v1809 = vadd.f32 %v1623, %v1808
        %1810 = vmatmul.bf16.gmra.mxu0 %v1592
        %v1811 = vpop.f32.mrf.mxu0
        %v1812 = vadd.f32 %v1623, %v1811
        %v1813 = vpop.f32.mrf.mxu0
        %v1814 = vadd.f32 %v1623, %v1813
        %1815 = vmatmul.bf16.gmra.mxu0 %v1593
        %v1816 = vpop.f32.mrf.mxu0
        %v1817 = vadd.f32 %v1623, %v1816
        %v1818 = vpop.f32.mrf.mxu0
        %v1819 = vadd.f32 %v1623, %v1818
        %1820 = vmatmul.bf16.gmra.mxu0 %v1594
        %v1821 = vpop.f32.mrf.mxu0
        %v1822 = vadd.f32 %v1623, %v1821
        %v1823 = vpop.f32.mrf.mxu0
        %v1824 = vadd.f32 %v1623, %v1823
        %1825 = vmatmul.bf16.gmra.mxu0 %v1595
        %v1826 = vpop.f32.mrf.mxu0
        %v1827 = vadd.f32 %v1623, %v1826
        %v1828 = vpop.f32.mrf.mxu0
        %v1829 = vadd.f32 %v1623, %v1828
        %1830 = vmatmul.bf16.gmra.mxu0 %v1596
        %v1831 = vpop.f32.mrf.mxu0
        %v1832 = vadd.f32 %v1623, %v1831
        %v1833 = vpop.f32.mrf.mxu0
        %v1834 = vadd.f32 %v1623, %v1833
        %1835 = vmatmul.bf16.gmra.mxu0 %v1597
        %v1836 = vpop.f32.mrf.mxu0
        %v1837 = vadd.f32 %v1623, %v1836
        %v1838 = vpop.f32.mrf.mxu0
        %v1839 = vadd.f32 %v1623, %v1838
        %1840 = vmatmul.bf16.gmra.mxu0 %v1598
        %v1841 = vpop.f32.mrf.mxu0
        %v1842 = vadd.f32 %v1623, %v1841
        %v1843 = vpop.f32.mrf.mxu0
        %v1844 = vadd.f32 %v1623, %v1843
        %1845 = vmatmul.bf16.gmra.mxu0 %v1599
        %v1846 = vpop.f32.mrf.mxu0
        %v1847 = vadd.f32 %v1623, %v1846
        %v1848 = vpop.f32.mrf.mxu0
        %v1849 = vadd.f32 %v1623, %v1848
        %1850 = vmatmul.bf16.gmra.mxu0 %v1600
        %v1851 = vpop.f32.mrf.mxu0
        %v1852 = vadd.f32 %v1623, %v1851
        %v1853 = vpop.f32.mrf.mxu0
        %v1854 = vadd.f32 %v1623, %v1853
        %1855 = vmatmul.bf16.gmra.mxu0 %v1601
        %v1856 = vpop.f32.mrf.mxu0
        %v1857 = vadd.f32 %v1623, %v1856
        %v1858 = vpop.f32.mrf.mxu0
        %v1859 = vadd.f32 %v1623, %v1858
        %1860 = vmatmul.bf16.gmra.mxu0 %v1602
        %v1861 = vpop.f32.mrf.mxu0
        %v1862 = vadd.f32 %v1623, %v1861
        %v1863 = vpop.f32.mrf.mxu0
        %v1864 = vadd.f32 %v1623, %v1863
        %1865 = vmatmul.bf16.gmra.mxu0 %v1603
        %v1866 = vpop.f32.mrf.mxu0
        %v1867 = vadd.f32 %v1623, %v1866
        %v1868 = vpop.f32.mrf.mxu0
        %v1869 = vadd.f32 %v1623, %v1868
        %1870 = vmatmul.bf16.gmra.mxu0 %v1604
        %v1871 = vpop.f32.mrf.mxu0
        %v1872 = vadd.f32 %v1623, %v1871
        %v1873 = vpop.f32.mrf.mxu0
        %v1874 = vadd.f32 %v1623, %v1873
        %1875 = vdwg.mxu0
        %1876 = vmatpush.bf16.msra.mxu0 %v1690
        %1877 = vmatpush.bf16.msra.mxu0 %v1688
        %1878 = vmatpush.bf16.msra.mxu0 %v1686
        %1879 = vmatpush.bf16.msra.mxu0 %v1684
        %1880 = vmatpush.bf16.msra.mxu0 %v1682
        %1881 = vmatpush.bf16.msra.mxu0 %v1680
        %1882 = vmatpush.bf16.msra.mxu0 %v1678
        %1883 = vmatpush.bf16.msra.mxu0 %v1676
        %1884 = vmatmul.bf16.gmra.mxu0 %v1573
        %v1885 = vpop.f32.mrf.mxu0
        %v1886 = vadd.f32 %v1624, %v1885
        %v1887 = vpop.f32.mrf.mxu0
        %v1888 = vadd.f32 %v1624, %v1887
        %1889 = vmatmul.bf16.gmra.mxu0 %v1574
        %v1890 = vpop.f32.mrf.mxu0
        %v1891 = vadd.f32 %v1624, %v1890
        %v1892 = vpop.f32.mrf.mxu0
        %v1893 = vadd.f32 %v1624, %v1892
        %1894 = vmatmul.bf16.gmra.mxu0 %v1575
        %v1895 = vpop.f32.mrf.mxu0
        %v1896 = vadd.f32 %v1624, %v1895
        %v1897 = vpop.f32.mrf.mxu0
        %v1898 = vadd.f32 %v1624, %v1897
        %1899 = vmatmul.bf16.gmra.mxu0 %v1576
        %v1900 = vpop.f32.mrf.mxu0
        %v1901 = vadd.f32 %v1624, %v1900
        %v1902 = vpop.f32.mrf.mxu0
        %v1903 = vadd.f32 %v1624, %v1902
        %1904 = vmatmul.bf16.gmra.mxu0 %v1577
        %v1905 = vpop.f32.mrf.mxu0
        %v1906 = vadd.f32 %v1624, %v1905
        %v1907 = vpop.f32.mrf.mxu0
        %v1908 = vadd.f32 %v1624, %v1907
        %1909 = vmatmul.bf16.gmra.mxu0 %v1578
        %v1910 = vpop.f32.mrf.mxu0
        %v1911 = vadd.f32 %v1624, %v1910
        %v1912 = vpop.f32.mrf.mxu0
        %v1913 = vadd.f32 %v1624, %v1912
        %1914 = vmatmul.bf16.gmra.mxu0 %v1579
        %v1915 = vpop.f32.mrf.mxu0
        %v1916 = vadd.f32 %v1624, %v1915
        %v1917 = vpop.f32.mrf.mxu0
        %v1918 = vadd.f32 %v1624, %v1917
        %1919 = vmatmul.bf16.gmra.mxu0 %v1580
        %v1920 = vpop.f32.mrf.mxu0
        %v1921 = vadd.f32 %v1624, %v1920
        %v1922 = vpop.f32.mrf.mxu0
        %v1923 = vadd.f32 %v1624, %v1922
        %1924 = vmatmul.bf16.gmra.mxu0 %v1581
        %v1925 = vpop.f32.mrf.mxu0
        %v1926 = vadd.f32 %v1624, %v1925
        %v1927 = vpop.f32.mrf.mxu0
        %v1928 = vadd.f32 %v1624, %v1927
        %1929 = vmatmul.bf16.gmra.mxu0 %v1582
        %v1930 = vpop.f32.mrf.mxu0
        %v1931 = vadd.f32 %v1624, %v1930
        %v1932 = vpop.f32.mrf.mxu0
        %v1933 = vadd.f32 %v1624, %v1932
        %1934 = vmatmul.bf16.gmra.mxu0 %v1583
        %v1935 = vpop.f32.mrf.mxu0
        %v1936 = vadd.f32 %v1624, %v1935
        %v1937 = vpop.f32.mrf.mxu0
        %v1938 = vadd.f32 %v1624, %v1937
        %1939 = vmatmul.bf16.gmra.mxu0 %v1584
        %v1940 = vpop.f32.mrf.mxu0
        %v1941 = vadd.f32 %v1624, %v1940
        %v1942 = vpop.f32.mrf.mxu0
        %v1943 = vadd.f32 %v1624, %v1942
        %1944 = vmatmul.bf16.gmra.mxu0 %v1585
        %v1945 = vpop.f32.mrf.mxu0
        %v1946 = vadd.f32 %v1624, %v1945
        %v1947 = vpop.f32.mrf.mxu0
        %v1948 = vadd.f32 %v1624, %v1947
        %1949 = vmatmul.bf16.gmra.mxu0 %v1586
        %v1950 = vpop.f32.mrf.mxu0
        %v1951 = vadd.f32 %v1624, %v1950
        %v1952 = vpop.f32.mrf.mxu0
        %v1953 = vadd.f32 %v1624, %v1952
        %1954 = vmatmul.bf16.gmra.mxu0 %v1587
        %v1955 = vpop.f32.mrf.mxu0
        %v1956 = vadd.f32 %v1624, %v1955
        %v1957 = vpop.f32.mrf.mxu0
        %v1958 = vadd.f32 %v1624, %v1957
        %1959 = vmatmul.bf16.gmra.mxu0 %v1588
        %v1960 = vpop.f32.mrf.mxu0
        %v1961 = vadd.f32 %v1624, %v1960
        %v1962 = vpop.f32.mrf.mxu0
        %v1963 = vadd.f32 %v1624, %v1962
        %1964 = vmatmul.bf16.gmra.mxu0 %v1589
        %v1965 = vpop.f32.mrf.mxu0
        %v1966 = vadd.f32 %v1624, %v1965
        %v1967 = vpop.f32.mrf.mxu0
        %v1968 = vadd.f32 %v1624, %v1967
        %1969 = vmatmul.bf16.gmra.mxu0 %v1590
        %v1970 = vpop.f32.mrf.mxu0
        %v1971 = vadd.f32 %v1624, %v1970
        %v1972 = vpop.f32.mrf.mxu0
        %v1973 = vadd.f32 %v1624, %v1972
        %1974 = vmatmul.bf16.gmra.mxu0 %v1591
        %v1975 = vpop.f32.mrf.mxu0
        %v1976 = vadd.f32 %v1624, %v1975
        %v1977 = vpop.f32.mrf.mxu0
        %v1978 = vadd.f32 %v1624, %v1977
        %1979 = vmatmul.bf16.gmra.mxu0 %v1592
        %v1980 = vpop.f32.mrf.mxu0
        %v1981 = vadd.f32 %v1624, %v1980
        %v1982 = vpop.f32.mrf.mxu0
        %v1983 = vadd.f32 %v1624, %v1982
        %1984 = vmatmul.bf16.gmra.mxu0 %v1593
        %v1985 = vpop.f32.mrf.mxu0
        %v1986 = vadd.f32 %v1624, %v1985
        %v1987 = vpop.f32.mrf.mxu0
        %v1988 = vadd.f32 %v1624, %v1987
        %1989 = vmatmul.bf16.gmra.mxu0 %v1594
        %v1990 = vpop.f32.mrf.mxu0
        %v1991 = vadd.f32 %v1624, %v1990
        %v1992 = vpop.f32.mrf.mxu0
        %v1993 = vadd.f32 %v1624, %v1992
        %1994 = vmatmul.bf16.gmra.mxu0 %v1595
        %v1995 = vpop.f32.mrf.mxu0
        %v1996 = vadd.f32 %v1624, %v1995
        %v1997 = vpop.f32.mrf.mxu0
        %v1998 = vadd.f32 %v1624, %v1997
        %1999 = vmatmul.bf16.gmra.mxu0 %v1596
        %v2000 = vpop.f32.mrf.mxu0
        %v2001 = vadd.f32 %v1624, %v2000
        %v2002 = vpop.f32.mrf.mxu0
        %v2003 = vadd.f32 %v1624, %v2002
        %2004 = vmatmul.bf16.gmra.mxu0 %v1597
        %v2005 = vpop.f32.mrf.mxu0
        %v2006 = vadd.f32 %v1624, %v2005
        %v2007 = vpop.f32.mrf.mxu0
        %v2008 = vadd.f32 %v1624, %v2007
        %2009 = vmatmul.bf16.gmra.mxu0 %v1598
        %v2010 = vpop.f32.mrf.mxu0
        %v2011 = vadd.f32 %v1624, %v2010
        %v2012 = vpop.f32.mrf.mxu0
        %v2013 = vadd.f32 %v1624, %v2012
        %2014 = vmatmul.bf16.gmra.mxu0 %v1599
        %v2015 = vpop.f32.mrf.mxu0
        %v2016 = vadd.f32 %v1624, %v2015
        %v2017 = vpop.f32.mrf.mxu0
        %v2018 = vadd.f32 %v1624, %v2017
        %2019 = vmatmul.bf16.gmra.mxu0 %v1600
        %v2020 = vpop.f32.mrf.mxu0
        %v2021 = vadd.f32 %v1624, %v2020
        %v2022 = vpop.f32.mrf.mxu0
        %v2023 = vadd.f32 %v1624, %v2022
        %2024 = vmatmul.bf16.gmra.mxu0 %v1601
        %v2025 = vpop.f32.mrf.mxu0
        %v2026 = vadd.f32 %v1624, %v2025
        %v2027 = vpop.f32.mrf.mxu0
        %v2028 = vadd.f32 %v1624, %v2027
        %2029 = vmatmul.bf16.gmra.mxu0 %v1602
        %v2030 = vpop.f32.mrf.mxu0
        %v2031 = vadd.f32 %v1624, %v2030
        %v2032 = vpop.f32.mrf.mxu0
        %v2033 = vadd.f32 %v1624, %v2032
        %2034 = vmatmul.bf16.gmra.mxu0 %v1603
        %v2035 = vpop.f32.mrf.mxu0
        %v2036 = vadd.f32 %v1624, %v2035
        %v2037 = vpop.f32.mrf.mxu0
        %v2038 = vadd.f32 %v1624, %v2037
        %2039 = vmatmul.bf16.gmra.mxu0 %v1604
        %v2040 = vpop.f32.mrf.mxu0
        %v2041 = vadd.f32 %v1624, %v2040
        %v2042 = vpop.f32.mrf.mxu0
        %v2043 = vadd.f32 %v1624, %v2042
        %2044 = vdwg.mxu0
        %v2045 = vpack.c.bf16 %v1886, %v1717
        %v2046 = vpack.c.bf16 %v1888, %v1719
        %v2047 = vpack.c.bf16 %v1891, %v1722
        %v2048 = vpack.c.bf16 %v1893, %v1724
        %v2049 = vpack.c.bf16 %v1896, %v1727
        %v2050 = vpack.c.bf16 %v1898, %v1729
        %v2051 = vpack.c.bf16 %v1901, %v1732
        %v2052 = vpack.c.bf16 %v1903, %v1734
        %v2053 = vpack.c.bf16 %v1906, %v1737
        %v2054 = vpack.c.bf16 %v1908, %v1739
        %v2055 = vpack.c.bf16 %v1911, %v1742
        %v2056 = vpack.c.bf16 %v1913, %v1744
        %v2057 = vpack.c.bf16 %v1916, %v1747
        %v2058 = vpack.c.bf16 %v1918, %v1749
        %v2059 = vpack.c.bf16 %v1921, %v1752
        %v2060 = vpack.c.bf16 %v1923, %v1754
        %v2061 = vpack.c.bf16 %v1926, %v1757
        %v2062 = vpack.c.bf16 %v1928, %v1759
        %v2063 = vpack.c.bf16 %v1931, %v1762
        %v2064 = vpack.c.bf16 %v1933, %v1764
        %v2065 = vpack.c.bf16 %v1936, %v1767
        %v2066 = vpack.c.bf16 %v1938, %v1769
        %v2067 = vpack.c.bf16 %v1941, %v1772
        %v2068 = vpack.c.bf16 %v1943, %v1774
        %v2069 = vpack.c.bf16 %v1946, %v1777
        %v2070 = vpack.c.bf16 %v1948, %v1779
        %v2071 = vpack.c.bf16 %v1951, %v1782
        %v2072 = vpack.c.bf16 %v1953, %v1784
        %v2073 = vpack.c.bf16 %v1956, %v1787
        %v2074 = vpack.c.bf16 %v1958, %v1789
        %v2075 = vpack.c.bf16 %v1961, %v1792
        %v2076 = vpack.c.bf16 %v1963, %v1794
        %v2077 = vpack.c.bf16 %v1966, %v1797
        %v2078 = vpack.c.bf16 %v1968, %v1799
        %v2079 = vpack.c.bf16 %v1971, %v1802
        %v2080 = vpack.c.bf16 %v1973, %v1804
        %v2081 = vpack.c.bf16 %v1976, %v1807
        %v2082 = vpack.c.bf16 %v1978, %v1809
        %v2083 = vpack.c.bf16 %v1981, %v1812
        %v2084 = vpack.c.bf16 %v1983, %v1814
        %v2085 = vpack.c.bf16 %v1986, %v1817
        %v2086 = vpack.c.bf16 %v1988, %v1819
        %v2087 = vpack.c.bf16 %v1991, %v1822
        %v2088 = vpack.c.bf16 %v1993, %v1824
        %v2089 = vpack.c.bf16 %v1996, %v1827
        %v2090 = vpack.c.bf16 %v1998, %v1829
        %v2091 = vpack.c.bf16 %v2001, %v1832
        %v2092 = vpack.c.bf16 %v2003, %v1834
        %v2093 = vpack.c.bf16 %v2006, %v1837
        %v2094 = vpack.c.bf16 %v2008, %v1839
        %v2095 = vpack.c.bf16 %v2011, %v1842
        %v2096 = vpack.c.bf16 %v2013, %v1844
        %v2097 = vpack.c.bf16 %v2016, %v1847
        %v2098 = vpack.c.bf16 %v2018, %v1849
        %v2099 = vpack.c.bf16 %v2021, %v1852
        %v2100 = vpack.c.bf16 %v2023, %v1854
        %v2101 = vpack.c.bf16 %v2026, %v1857
        %v2102 = vpack.c.bf16 %v2028, %v1859
        %v2103 = vpack.c.bf16 %v2031, %v1862
        %v2104 = vpack.c.bf16 %v2033, %v1864
        %v2105 = vpack.c.bf16 %v2036, %v1867
        %v2106 = vpack.c.bf16 %v2038, %v1869
        %v2107 = vpack.c.bf16 %v2041, %v1872
        %v2108 = vpack.c.bf16 %v2043, %v1874
        %v2109 = vunpack.c.l.bf16 %v2045
        %v2110 = vunpack.c.h.bf16 %v2045
        %v2111 = vunpack.c.l.bf16 %v2046
        %v2112 = vunpack.c.h.bf16 %v2046
        %v2113 = vunpack.c.l.bf16 %v2047
        %v2114 = vunpack.c.h.bf16 %v2047
        %v2115 = vunpack.c.l.bf16 %v2048
        %v2116 = vunpack.c.h.bf16 %v2048
        %v2117 = vunpack.c.l.bf16 %v2049
        %v2118 = vunpack.c.h.bf16 %v2049
        %v2119 = vunpack.c.l.bf16 %v2050
        %v2120 = vunpack.c.h.bf16 %v2050
        %v2121 = vunpack.c.l.bf16 %v2051
        %v2122 = vunpack.c.h.bf16 %v2051
        %v2123 = vunpack.c.l.bf16 %v2052
        %v2124 = vunpack.c.h.bf16 %v2052
        %v2125 = vunpack.c.l.bf16 %v2053
        %v2126 = vunpack.c.h.bf16 %v2053
        %v2127 = vunpack.c.l.bf16 %v2054
        %v2128 = vunpack.c.h.bf16 %v2054
        %v2129 = vunpack.c.l.bf16 %v2055
        %v2130 = vunpack.c.h.bf16 %v2055
        %v2131 = vunpack.c.l.bf16 %v2056
        %v2132 = vunpack.c.h.bf16 %v2056
        %v2133 = vunpack.c.l.bf16 %v2057
        %v2134 = vunpack.c.h.bf16 %v2057
        %v2135 = vunpack.c.l.bf16 %v2058
        %v2136 = vunpack.c.h.bf16 %v2058
        %v2137 = vunpack.c.l.bf16 %v2059
        %v2138 = vunpack.c.h.bf16 %v2059
        %v2139 = vunpack.c.l.bf16 %v2060
        %v2140 = vunpack.c.h.bf16 %v2060
        %v2141 = vunpack.c.l.bf16 %v2061
        %v2142 = vunpack.c.h.bf16 %v2061
        %v2143 = vunpack.c.l.bf16 %v2062
        %v2144 = vunpack.c.h.bf16 %v2062
        %v2145 = vunpack.c.l.bf16 %v2063
        %v2146 = vunpack.c.h.bf16 %v2063
        %v2147 = vunpack.c.l.bf16 %v2064
        %v2148 = vunpack.c.h.bf16 %v2064
        %v2149 = vunpack.c.l.bf16 %v2065
        %v2150 = vunpack.c.h.bf16 %v2065
        %v2151 = vunpack.c.l.bf16 %v2066
        %v2152 = vunpack.c.h.bf16 %v2066
        %v2153 = vunpack.c.l.bf16 %v2067
        %v2154 = vunpack.c.h.bf16 %v2067
        %v2155 = vunpack.c.l.bf16 %v2068
        %v2156 = vunpack.c.h.bf16 %v2068
        %v2157 = vunpack.c.l.bf16 %v2069
        %v2158 = vunpack.c.h.bf16 %v2069
        %v2159 = vunpack.c.l.bf16 %v2070
        %v2160 = vunpack.c.h.bf16 %v2070
        %v2161 = vunpack.c.l.bf16 %v2071
        %v2162 = vunpack.c.h.bf16 %v2071
        %v2163 = vunpack.c.l.bf16 %v2072
        %v2164 = vunpack.c.h.bf16 %v2072
        %v2165 = vunpack.c.l.bf16 %v2073
        %v2166 = vunpack.c.h.bf16 %v2073
        %v2167 = vunpack.c.l.bf16 %v2074
        %v2168 = vunpack.c.h.bf16 %v2074
        %v2169 = vunpack.c.l.bf16 %v2075
        %v2170 = vunpack.c.h.bf16 %v2075
        %v2171 = vunpack.c.l.bf16 %v2076
        %v2172 = vunpack.c.h.bf16 %v2076
        %v2173 = vunpack.c.l.bf16 %v2077
        %v2174 = vunpack.c.h.bf16 %v2077
        %v2175 = vunpack.c.l.bf16 %v2078
        %v2176 = vunpack.c.h.bf16 %v2078
        %v2177 = vunpack.c.l.bf16 %v2079
        %v2178 = vunpack.c.h.bf16 %v2079
        %v2179 = vunpack.c.l.bf16 %v2080
        %v2180 = vunpack.c.h.bf16 %v2080
        %v2181 = vunpack.c.l.bf16 %v2081
        %v2182 = vunpack.c.h.bf16 %v2081
        %v2183 = vunpack.c.l.bf16 %v2082
        %v2184 = vunpack.c.h.bf16 %v2082
        %v2185 = vunpack.c.l.bf16 %v2083
        %v2186 = vunpack.c.h.bf16 %v2083
        %v2187 = vunpack.c.l.bf16 %v2084
        %v2188 = vunpack.c.h.bf16 %v2084
        %v2189 = vunpack.c.l.bf16 %v2085
        %v2190 = vunpack.c.h.bf16 %v2085
        %v2191 = vunpack.c.l.bf16 %v2086
        %v2192 = vunpack.c.h.bf16 %v2086
        %v2193 = vunpack.c.l.bf16 %v2087
        %v2194 = vunpack.c.h.bf16 %v2087
        %v2195 = vunpack.c.l.bf16 %v2088
        %v2196 = vunpack.c.h.bf16 %v2088
        %v2197 = vunpack.c.l.bf16 %v2089
        %v2198 = vunpack.c.h.bf16 %v2089
        %v2199 = vunpack.c.l.bf16 %v2090
        %v2200 = vunpack.c.h.bf16 %v2090
        %v2201 = vunpack.c.l.bf16 %v2091
        %v2202 = vunpack.c.h.bf16 %v2091
        %v2203 = vunpack.c.l.bf16 %v2092
        %v2204 = vunpack.c.h.bf16 %v2092
        %v2205 = vunpack.c.l.bf16 %v2093
        %v2206 = vunpack.c.h.bf16 %v2093
        %v2207 = vunpack.c.l.bf16 %v2094
        %v2208 = vunpack.c.h.bf16 %v2094
        %v2209 = vunpack.c.l.bf16 %v2095
        %v2210 = vunpack.c.h.bf16 %v2095
        %v2211 = vunpack.c.l.bf16 %v2096
        %v2212 = vunpack.c.h.bf16 %v2096
        %v2213 = vunpack.c.l.bf16 %v2097
        %v2214 = vunpack.c.h.bf16 %v2097
        %v2215 = vunpack.c.l.bf16 %v2098
        %v2216 = vunpack.c.h.bf16 %v2098
        %v2217 = vunpack.c.l.bf16 %v2099
        %v2218 = vunpack.c.h.bf16 %v2099
        %v2219 = vunpack.c.l.bf16 %v2100
        %v2220 = vunpack.c.h.bf16 %v2100
        %v2221 = vunpack.c.l.bf16 %v2101
        %v2222 = vunpack.c.h.bf16 %v2101
        %v2223 = vunpack.c.l.bf16 %v2102
        %v2224 = vunpack.c.h.bf16 %v2102
        %v2225 = vunpack.c.l.bf16 %v2103
        %v2226 = vunpack.c.h.bf16 %v2103
        %v2227 = vunpack.c.l.bf16 %v2104
        %v2228 = vunpack.c.h.bf16 %v2104
        %v2229 = vunpack.c.l.bf16 %v2105
        %v2230 = vunpack.c.h.bf16 %v2105
        %v2231 = vunpack.c.l.bf16 %v2106
        %v2232 = vunpack.c.h.bf16 %v2106
        %v2233 = vunpack.c.l.bf16 %v2107
        %v2234 = vunpack.c.h.bf16 %v2107
        %v2235 = vunpack.c.l.bf16 %v2108
        %v2236 = vunpack.c.h.bf16 %v2108
        %v2237 = vmax.f32 %v2109, 0.0
        %v2238 = vmax.f32 %v2110, 0.0
        %v2239 = vmax.f32 %v2111, 0.0
        %v2240 = vmax.f32 %v2112, 0.0
        %v2241 = vmax.f32 %v2113, 0.0
        %v2242 = vmax.f32 %v2114, 0.0
        %v2243 = vmax.f32 %v2115, 0.0
        %v2244 = vmax.f32 %v2116, 0.0
        %v2245 = vmax.f32 %v2117, 0.0
        %v2246 = vmax.f32 %v2118, 0.0
        %v2247 = vmax.f32 %v2119, 0.0
        %v2248 = vmax.f32 %v2120, 0.0
        %v2249 = vmax.f32 %v2121, 0.0
        %v2250 = vmax.f32 %v2122, 0.0
        %v2251 = vmax.f32 %v2123, 0.0
        %v2252 = vmax.f32 %v2124, 0.0
        %v2253 = vmax.f32 %v2125, 0.0
        %v2254 = vmax.f32 %v2126, 0.0
        %v2255 = vmax.f32 %v2127, 0.0
        %v2256 = vmax.f32 %v2128, 0.0
        %v2257 = vmax.f32 %v2129, 0.0
        %v2258 = vmax.f32 %v2130, 0.0
        %v2259 = vmax.f32 %v2131, 0.0
        %v2260 = vmax.f32 %v2132, 0.0
        %v2261 = vmax.f32 %v2133, 0.0
        %v2262 = vmax.f32 %v2134, 0.0
        %v2263 = vmax.f32 %v2135, 0.0
        %v2264 = vmax.f32 %v2136, 0.0
        %v2265 = vmax.f32 %v2137, 0.0
        %v2266 = vmax.f32 %v2138, 0.0
        %v2267 = vmax.f32 %v2139, 0.0
        %v2268 = vmax.f32 %v2140, 0.0
        %v2269 = vmax.f32 %v2141, 0.0
        %v2270 = vmax.f32 %v2142, 0.0
        %v2271 = vmax.f32 %v2143, 0.0
        %v2272 = vmax.f32 %v2144, 0.0
        %v2273 = vmax.f32 %v2145, 0.0
        %v2274 = vmax.f32 %v2146, 0.0
        %v2275 = vmax.f32 %v2147, 0.0
        %v2276 = vmax.f32 %v2148, 0.0
        %v2277 = vmax.f32 %v2149, 0.0
        %v2278 = vmax.f32 %v2150, 0.0
        %v2279 = vmax.f32 %v2151, 0.0
        %v2280 = vmax.f32 %v2152, 0.0
        %v2281 = vmax.f32 %v2153, 0.0
        %v2282 = vmax.f32 %v2154, 0.0
        %v2283 = vmax.f32 %v2155, 0.0
        %v2284 = vmax.f32 %v2156, 0.0
        %v2285 = vmax.f32 %v2157, 0.0
        %v2286 = vmax.f32 %v2158, 0.0
        %v2287 = vmax.f32 %v2159, 0.0
        %v2288 = vmax.f32 %v2160, 0.0
        %v2289 = vmax.f32 %v2161, 0.0
        %v2290 = vmax.f32 %v2162, 0.0
        %v2291 = vmax.f32 %v2163, 0.0
        %v2292 = vmax.f32 %v2164, 0.0
        %v2293 = vmax.f32 %v2165, 0.0
        %v2294 = vmax.f32 %v2166, 0.0
        %v2295 = vmax.f32 %v2167, 0.0
        %v2296 = vmax.f32 %v2168, 0.0
        %v2297 = vmax.f32 %v2169, 0.0
        %v2298 = vmax.f32 %v2170, 0.0
        %v2299 = vmax.f32 %v2171, 0.0
        %v2300 = vmax.f32 %v2172, 0.0
        %v2301 = vmax.f32 %v2173, 0.0
        %v2302 = vmax.f32 %v2174, 0.0
        %v2303 = vmax.f32 %v2175, 0.0
        %v2304 = vmax.f32 %v2176, 0.0
        %v2305 = vmax.f32 %v2177, 0.0
        %v2306 = vmax.f32 %v2178, 0.0
        %v2307 = vmax.f32 %v2179, 0.0
        %v2308 = vmax.f32 %v2180, 0.0
        %v2309 = vmax.f32 %v2181, 0.0
        %v2310 = vmax.f32 %v2182, 0.0
        %v2311 = vmax.f32 %v2183, 0.0
        %v2312 = vmax.f32 %v2184, 0.0
        %v2313 = vmax.f32 %v2185, 0.0
        %v2314 = vmax.f32 %v2186, 0.0
        %v2315 = vmax.f32 %v2187, 0.0
        %v2316 = vmax.f32 %v2188, 0.0
        %v2317 = vmax.f32 %v2189, 0.0
        %v2318 = vmax.f32 %v2190, 0.0
        %v2319 = vmax.f32 %v2191, 0.0
        %v2320 = vmax.f32 %v2192, 0.0
        %v2321 = vmax.f32 %v2193, 0.0
        %v2322 = vmax.f32 %v2194, 0.0
        %v2323 = vmax.f32 %v2195, 0.0
        %v2324 = vmax.f32 %v2196, 0.0
        %v2325 = vmax.f32 %v2197, 0.0
        %v2326 = vmax.f32 %v2198, 0.0
        %v2327 = vmax.f32 %v2199, 0.0
        %v2328 = vmax.f32 %v2200, 0.0
        %v2329 = vmax.f32 %v2201, 0.0
        %v2330 = vmax.f32 %v2202, 0.0
        %v2331 = vmax.f32 %v2203, 0.0
        %v2332 = vmax.f32 %v2204, 0.0
        %v2333 = vmax.f32 %v2205, 0.0
        %v2334 = vmax.f32 %v2206, 0.0
        %v2335 = vmax.f32 %v2207, 0.0
        %v2336 = vmax.f32 %v2208, 0.0
        %v2337 = vmax.f32 %v2209, 0.0
        %v2338 = vmax.f32 %v2210, 0.0
        %v2339 = vmax.f32 %v2211, 0.0
        %v2340 = vmax.f32 %v2212, 0.0
        %v2341 = vmax.f32 %v2213, 0.0
        %v2342 = vmax.f32 %v2214, 0.0
        %v2343 = vmax.f32 %v2215, 0.0
        %v2344 = vmax.f32 %v2216, 0.0
        %v2345 = vmax.f32 %v2217, 0.0
        %v2346 = vmax.f32 %v2218, 0.0
        %v2347 = vmax.f32 %v2219, 0.0
        %v2348 = vmax.f32 %v2220, 0.0
        %v2349 = vmax.f32 %v2221, 0.0
        %v2350 = vmax.f32 %v2222, 0.0
        %v2351 = vmax.f32 %v2223, 0.0
        %v2352 = vmax.f32 %v2224, 0.0
        %v2353 = vmax.f32 %v2225, 0.0
        %v2354 = vmax.f32 %v2226, 0.0
        %v2355 = vmax.f32 %v2227, 0.0
        %v2356 = vmax.f32 %v2228, 0.0
        %v2357 = vmax.f32 %v2229, 0.0
        %v2358 = vmax.f32 %v2230, 0.0
        %v2359 = vmax.f32 %v2231, 0.0
        %v2360 = vmax.f32 %v2232, 0.0
        %v2361 = vmax.f32 %v2233, 0.0
        %v2362 = vmax.f32 %v2234, 0.0
        %v2363 = vmax.f32 %v2235, 0.0
        %v2364 = vmax.f32 %v2236, 0.0
        %v2365 = vpack.c.bf16 %v2239, %v2237
        %v2366 = vpack.c.bf16 %v2240, %v2238
        %v2367 = vpack.c.bf16 %v2243, %v2241
        %v2368 = vpack.c.bf16 %v2244, %v2242
        %v2369 = vpack.c.bf16 %v2247, %v2245
        %v2370 = vpack.c.bf16 %v2248, %v2246
        %v2371 = vpack.c.bf16 %v2251, %v2249
        %v2372 = vpack.c.bf16 %v2252, %v2250
        %v2373 = vpack.c.bf16 %v2255, %v2253
        %v2374 = vpack.c.bf16 %v2256, %v2254
        %v2375 = vpack.c.bf16 %v2259, %v2257
        %v2376 = vpack.c.bf16 %v2260, %v2258
        %v2377 = vpack.c.bf16 %v2263, %v2261
        %v2378 = vpack.c.bf16 %v2264, %v2262
        %v2379 = vpack.c.bf16 %v2267, %v2265
        %v2380 = vpack.c.bf16 %v2268, %v2266
        %v2381 = vpack.c.bf16 %v2271, %v2269
        %v2382 = vpack.c.bf16 %v2272, %v2270
        %v2383 = vpack.c.bf16 %v2275, %v2273
        %v2384 = vpack.c.bf16 %v2276, %v2274
        %v2385 = vpack.c.bf16 %v2279, %v2277
        %v2386 = vpack.c.bf16 %v2280, %v2278
        %v2387 = vpack.c.bf16 %v2283, %v2281
        %v2388 = vpack.c.bf16 %v2284, %v2282
        %v2389 = vpack.c.bf16 %v2287, %v2285
        %v2390 = vpack.c.bf16 %v2288, %v2286
        %v2391 = vpack.c.bf16 %v2291, %v2289
        %v2392 = vpack.c.bf16 %v2292, %v2290
        %v2393 = vpack.c.bf16 %v2295, %v2293
        %v2394 = vpack.c.bf16 %v2296, %v2294
        %v2395 = vpack.c.bf16 %v2299, %v2297
        %v2396 = vpack.c.bf16 %v2300, %v2298
        %v2397 = vpack.c.bf16 %v2303, %v2301
        %v2398 = vpack.c.bf16 %v2304, %v2302
        %v2399 = vpack.c.bf16 %v2307, %v2305
        %v2400 = vpack.c.bf16 %v2308, %v2306
        %v2401 = vpack.c.bf16 %v2311, %v2309
        %v2402 = vpack.c.bf16 %v2312, %v2310
        %v2403 = vpack.c.bf16 %v2315, %v2313
        %v2404 = vpack.c.bf16 %v2316, %v2314
        %v2405 = vpack.c.bf16 %v2319, %v2317
        %v2406 = vpack.c.bf16 %v2320, %v2318
        %v2407 = vpack.c.bf16 %v2323, %v2321
        %v2408 = vpack.c.bf16 %v2324, %v2322
        %v2409 = vpack.c.bf16 %v2327, %v2325
        %v2410 = vpack.c.bf16 %v2328, %v2326
        %v2411 = vpack.c.bf16 %v2331, %v2329
        %v2412 = vpack.c.bf16 %v2332, %v2330
        %v2413 = vpack.c.bf16 %v2335, %v2333
        %v2414 = vpack.c.bf16 %v2336, %v2334
        %v2415 = vpack.c.bf16 %v2339, %v2337
        %v2416 = vpack.c.bf16 %v2340, %v2338
        %v2417 = vpack.c.bf16 %v2343, %v2341
        %v2418 = vpack.c.bf16 %v2344, %v2342
        %v2419 = vpack.c.bf16 %v2347, %v2345
        %v2420 = vpack.c.bf16 %v2348, %v2346
        %v2421 = vpack.c.bf16 %v2351, %v2349
        %v2422 = vpack.c.bf16 %v2352, %v2350
        %v2423 = vpack.c.bf16 %v2355, %v2353
        %v2424 = vpack.c.bf16 %v2356, %v2354
        %v2425 = vpack.c.bf16 %v2359, %v2357
        %v2426 = vpack.c.bf16 %v2360, %v2358
        %v2427 = vpack.c.bf16 %v2363, %v2361
        %v2428 = vpack.c.bf16 %v2364, %v2362
        %v2429 = vld [vmem:[%s7] sm:$0xff]
        %v2430 = vld [vmem:[%s7 + $0x8] sm:$0xff]
        %v2431 = vld [vmem:[%s7 + $0x10] sm:$0xff]
        %v2432 = vld [vmem:[%s7 + $0x18] sm:$0xff]
        %v2433 = vld [vmem:[%s7 + $0x20] sm:$0xff]
        %v2434 = vld [vmem:[%s7 + $0x28] sm:$0xff]
        %v2435 = vld [vmem:[%s7 + $0x30] sm:$0xff]
        %v2436 = vld [vmem:[%s7 + $0x38] sm:$0xff]
        %v2437 = vld [vmem:[%s7 + $0x40] sm:$0xff]
        %v2438 = vld [vmem:[%s7 + $0x48] sm:$0xff]
        %v2439 = vld [vmem:[%s7 + $0x50] sm:$0xff]
        %v2440 = vld [vmem:[%s7 + $0x58] sm:$0xff]
        %v2441 = vld [vmem:[%s7 + $0x60] sm:$0xff]
        %v2442 = vld [vmem:[%s7 + $0x68] sm:$0xff]
        %v2443 = vld [vmem:[%s7 + $0x70] sm:$0xff]
        %v2444 = vld [vmem:[%s7 + $0x78] sm:$0xff]
        %v2445 = vld [vmem:[%s7 + $0x80] sm:$0xff]
        %v2446 = vld [vmem:[%s7 + $0x88] sm:$0xff]
        %v2447 = vld [vmem:[%s7 + $0x90] sm:$0xff]
        %v2448 = vld [vmem:[%s7 + $0x98] sm:$0xff]
        %v2449 = vld [vmem:[%s7 + $0xa0] sm:$0xff]
        %v2450 = vld [vmem:[%s7 + $0xa8] sm:$0xff]
        %v2451 = vld [vmem:[%s7 + $0xb0] sm:$0xff]
        %v2452 = vld [vmem:[%s7 + $0xb8] sm:$0xff]
        %v2453 = vld [vmem:[%s7 + $0xc0] sm:$0xff]
        %v2454 = vld [vmem:[%s7 + $0xc8] sm:$0xff]
        %v2455 = vld [vmem:[%s7 + $0xd0] sm:$0xff]
        %v2456 = vld [vmem:[%s7 + $0xd8] sm:$0xff]
        %v2457 = vld [vmem:[%s7 + $0xe0] sm:$0xff]
        %v2458 = vld [vmem:[%s7 + $0xe8] sm:$0xff]
        %v2459 = vld [vmem:[%s7 + $0xf0] sm:$0xff]
        %v2460 = vld [vmem:[%s7 + $0xf8] sm:$0xff]
        %v2461 = vld [vmem:[%s7 + $0x100] sm:$0xff]
        %v2462 = vld [vmem:[%s7 + $0x108] sm:$0xff]
        %v2463 = vld [vmem:[%s7 + $0x110] sm:$0xff]
        %v2464 = vld [vmem:[%s7 + $0x118] sm:$0xff]
        %v2465 = vld [vmem:[%s7 + $0x120] sm:$0xff]
        %v2466 = vld [vmem:[%s7 + $0x128] sm:$0xff]
        %v2467 = vld [vmem:[%s7 + $0x130] sm:$0xff]
        %v2468 = vld [vmem:[%s7 + $0x138] sm:$0xff]
        %v2469 = vld [vmem:[%s7 + $0x140] sm:$0xff]
        %v2470 = vld [vmem:[%s7 + $0x148] sm:$0xff]
        %v2471 = vld [vmem:[%s7 + $0x150] sm:$0xff]
        %v2472 = vld [vmem:[%s7 + $0x158] sm:$0xff]
        %v2473 = vld [vmem:[%s7 + $0x160] sm:$0xff]
        %v2474 = vld [vmem:[%s7 + $0x168] sm:$0xff]
        %v2475 = vld [vmem:[%s7 + $0x170] sm:$0xff]
        %v2476 = vld [vmem:[%s7 + $0x178] sm:$0xff]
        %v2477 = vld [vmem:[%s7 + $0x180] sm:$0xff]
        %v2478 = vld [vmem:[%s7 + $0x188] sm:$0xff]
        %v2479 = vld [vmem:[%s7 + $0x190] sm:$0xff]
        %v2480 = vld [vmem:[%s7 + $0x198] sm:$0xff]
        %v2481 = vld [vmem:[%s7 + $0x1a0] sm:$0xff]
        %v2482 = vld [vmem:[%s7 + $0x1a8] sm:$0xff]
        %v2483 = vld [vmem:[%s7 + $0x1b0] sm:$0xff]
        %v2484 = vld [vmem:[%s7 + $0x1b8] sm:$0xff]
        %v2485 = vld [vmem:[%s7 + $0x1c0] sm:$0xff]
        %v2486 = vld [vmem:[%s7 + $0x1c8] sm:$0xff]
        %v2487 = vld [vmem:[%s7 + $0x1d0] sm:$0xff]
        %v2488 = vld [vmem:[%s7 + $0x1d8] sm:$0xff]
        %v2489 = vld [vmem:[%s7 + $0x1e0] sm:$0xff]
        %v2490 = vld [vmem:[%s7 + $0x1e8] sm:$0xff]
        %v2491 = vld [vmem:[%s7 + $0x1f0] sm:$0xff]
        %v2492 = vld [vmem:[%s7 + $0x1f8] sm:$0xff]
        %v2493 = vld [vmem:[%s7 + $0x200] sm:$0xff]
        %v2494 = vld [vmem:[%s7 + $0x208] sm:$0xff]
        %v2495 = vld [vmem:[%s7 + $0x210] sm:$0xff]
        %v2496 = vld [vmem:[%s7 + $0x218] sm:$0xff]
        %v2497 = vld [vmem:[%s7 + $0x220] sm:$0xff]
        %v2498 = vld [vmem:[%s7 + $0x228] sm:$0xff]
        %v2499 = vld [vmem:[%s7 + $0x230] sm:$0xff]
        %v2500 = vld [vmem:[%s7 + $0x238] sm:$0xff]
        %v2501 = vld [vmem:[%s7 + $0x240] sm:$0xff]
        %v2502 = vld [vmem:[%s7 + $0x248] sm:$0xff]
        %v2503 = vld [vmem:[%s7 + $0x250] sm:$0xff]
        %v2504 = vld [vmem:[%s7 + $0x258] sm:$0xff]
        %v2505 = vld [vmem:[%s7 + $0x260] sm:$0xff]
        %v2506 = vld [vmem:[%s7 + $0x268] sm:$0xff]
        %v2507 = vld [vmem:[%s7 + $0x270] sm:$0xff]
        %v2508 = vld [vmem:[%s7 + $0x278] sm:$0xff]
        %v2509 = vld [vmem:[%s7 + $0x280] sm:$0xff]
        %v2510 = vld [vmem:[%s7 + $0x288] sm:$0xff]
        %v2511 = vld [vmem:[%s7 + $0x290] sm:$0xff]
        %v2512 = vld [vmem:[%s7 + $0x298] sm:$0xff]
        %v2513 = vld [vmem:[%s7 + $0x2a0] sm:$0xff]
        %v2514 = vld [vmem:[%s7 + $0x2a8] sm:$0xff]
        %v2515 = vld [vmem:[%s7 + $0x2b0] sm:$0xff]
        %v2516 = vld [vmem:[%s7 + $0x2b8] sm:$0xff]
        %v2517 = vld [vmem:[%s7 + $0x2c0] sm:$0xff]
        %v2518 = vld [vmem:[%s7 + $0x2c8] sm:$0xff]
        %v2519 = vld [vmem:[%s7 + $0x2d0] sm:$0xff]
        %v2520 = vld [vmem:[%s7 + $0x2d8] sm:$0xff]
        %v2521 = vld [vmem:[%s7 + $0x2e0] sm:$0xff]
        %v2522 = vld [vmem:[%s7 + $0x2e8] sm:$0xff]
        %v2523 = vld [vmem:[%s7 + $0x2f0] sm:$0xff]
        %v2524 = vld [vmem:[%s7 + $0x2f8] sm:$0xff]
        %v2525 = vld [vmem:[%s7 + $0x300] sm:$0xff]
        %v2526 = vld [vmem:[%s7 + $0x308] sm:$0xff]
        %v2527 = vld [vmem:[%s7 + $0x310] sm:$0xff]
        %v2528 = vld [vmem:[%s7 + $0x318] sm:$0xff]
        %v2529 = vld [vmem:[%s7 + $0x320] sm:$0xff]
        %v2530 = vld [vmem:[%s7 + $0x328] sm:$0xff]
        %v2531 = vld [vmem:[%s7 + $0x330] sm:$0xff]
        %v2532 = vld [vmem:[%s7 + $0x338] sm:$0xff]
        %v2533 = vld [vmem:[%s7 + $0x340] sm:$0xff]
        %v2534 = vld [vmem:[%s7 + $0x348] sm:$0xff]
        %v2535 = vld [vmem:[%s7 + $0x350] sm:$0xff]
        %v2536 = vld [vmem:[%s7 + $0x358] sm:$0xff]
        %v2537 = vld [vmem:[%s7 + $0x360] sm:$0xff]
        %v2538 = vld [vmem:[%s7 + $0x368] sm:$0xff]
        %v2539 = vld [vmem:[%s7 + $0x370] sm:$0xff]
        %v2540 = vld [vmem:[%s7 + $0x378] sm:$0xff]
        %v2541 = vld [vmem:[%s7 + $0x380] sm:$0xff]
        %v2542 = vld [vmem:[%s7 + $0x388] sm:$0xff]
        %v2543 = vld [vmem:[%s7 + $0x390] sm:$0xff]
        %v2544 = vld [vmem:[%s7 + $0x398] sm:$0xff]
        %v2545 = vld [vmem:[%s7 + $0x3a0] sm:$0xff]
        %v2546 = vld [vmem:[%s7 + $0x3a8] sm:$0xff]
        %v2547 = vld [vmem:[%s7 + $0x3b0] sm:$0xff]
        %v2548 = vld [vmem:[%s7 + $0x3b8] sm:$0xff]
        %v2549 = vld [vmem:[%s7 + $0x3c0] sm:$0xff]
        %v2550 = vld [vmem:[%s7 + $0x3c8] sm:$0xff]
        %v2551 = vld [vmem:[%s7 + $0x3d0] sm:$0xff]
        %v2552 = vld [vmem:[%s7 + $0x3d8] sm:$0xff]
        %v2553 = vld [vmem:[%s7 + $0x3e0] sm:$0xff]
        %v2554 = vld [vmem:[%s7 + $0x3e8] sm:$0xff]
        %v2555 = vld [vmem:[%s7 + $0x3f0] sm:$0xff]
        %v2556 = vld [vmem:[%s7 + $0x3f8] sm:$0xff]
        %v2685 = vunpack.c.l.b16 %v2429
        %v2686 = vunpack.c.h.b16 %v2429
        %v2687 = vunpack.c.l.b16 %v2430
        %v2688 = vunpack.c.h.b16 %v2430
        %v2689 = vunpack.c.l.b16 %v2431
        %v2690 = vunpack.c.h.b16 %v2431
        %v2691 = vunpack.c.l.b16 %v2432
        %v2692 = vunpack.c.h.b16 %v2432
        %v2693 = vunpack.c.l.b16 %v2433
        %v2694 = vunpack.c.h.b16 %v2433
        %v2695 = vunpack.c.l.b16 %v2434
        %v2696 = vunpack.c.h.b16 %v2434
        %v2697 = vunpack.c.l.b16 %v2435
        %v2698 = vunpack.c.h.b16 %v2435
        %v2699 = vunpack.c.l.b16 %v2436
        %v2700 = vunpack.c.h.b16 %v2436
        %v2701 = vunpack.c.l.b16 %v2437
        %v2702 = vunpack.c.h.b16 %v2437
        %v2703 = vunpack.c.l.b16 %v2438
        %v2704 = vunpack.c.h.b16 %v2438
        %v2705 = vunpack.c.l.b16 %v2439
        %v2706 = vunpack.c.h.b16 %v2439
        %v2707 = vunpack.c.l.b16 %v2440
        %v2708 = vunpack.c.h.b16 %v2440
        %v2709 = vunpack.c.l.b16 %v2441
        %v2710 = vunpack.c.h.b16 %v2441
        %v2711 = vunpack.c.l.b16 %v2442
        %v2712 = vunpack.c.h.b16 %v2442
        %v2713 = vunpack.c.l.b16 %v2443
        %v2714 = vunpack.c.h.b16 %v2443
        %v2715 = vunpack.c.l.b16 %v2444
        %v2716 = vunpack.c.h.b16 %v2444
        %v2717 = vunpack.c.l.b16 %v2445
        %v2718 = vunpack.c.h.b16 %v2445
        %v2719 = vunpack.c.l.b16 %v2446
        %v2720 = vunpack.c.h.b16 %v2446
        %v2721 = vunpack.c.l.b16 %v2447
        %v2722 = vunpack.c.h.b16 %v2447
        %v2723 = vunpack.c.l.b16 %v2448
        %v2724 = vunpack.c.h.b16 %v2448
        %v2725 = vunpack.c.l.b16 %v2449
        %v2726 = vunpack.c.h.b16 %v2449
        %v2727 = vunpack.c.l.b16 %v2450
        %v2728 = vunpack.c.h.b16 %v2450
        %v2729 = vunpack.c.l.b16 %v2451
        %v2730 = vunpack.c.h.b16 %v2451
        %v2731 = vunpack.c.l.b16 %v2452
        %v2732 = vunpack.c.h.b16 %v2452
        %v2733 = vunpack.c.l.b16 %v2453
        %v2734 = vunpack.c.h.b16 %v2453
        %v2735 = vunpack.c.l.b16 %v2454
        %v2736 = vunpack.c.h.b16 %v2454
        %v2737 = vunpack.c.l.b16 %v2455
        %v2738 = vunpack.c.h.b16 %v2455
        %v2739 = vunpack.c.l.b16 %v2456
        %v2740 = vunpack.c.h.b16 %v2456
        %v2741 = vunpack.c.l.b16 %v2457
        %v2742 = vunpack.c.h.b16 %v2457
        %v2743 = vunpack.c.l.b16 %v2458
        %v2744 = vunpack.c.h.b16 %v2458
        %v2745 = vunpack.c.l.b16 %v2459
        %v2746 = vunpack.c.h.b16 %v2459
        %v2747 = vunpack.c.l.b16 %v2460
        %v2748 = vunpack.c.h.b16 %v2460
        %v2749 = vunpack.c.l.b16 %v2461
        %v2750 = vunpack.c.h.b16 %v2461
        %v2751 = vunpack.c.l.b16 %v2462
        %v2752 = vunpack.c.h.b16 %v2462
        %v2753 = vunpack.c.l.b16 %v2463
        %v2754 = vunpack.c.h.b16 %v2463
        %v2755 = vunpack.c.l.b16 %v2464
        %v2756 = vunpack.c.h.b16 %v2464
        %v2757 = vunpack.c.l.b16 %v2465
        %v2758 = vunpack.c.h.b16 %v2465
        %v2759 = vunpack.c.l.b16 %v2466
        %v2760 = vunpack.c.h.b16 %v2466
        %v2761 = vunpack.c.l.b16 %v2467
        %v2762 = vunpack.c.h.b16 %v2467
        %v2763 = vunpack.c.l.b16 %v2468
        %v2764 = vunpack.c.h.b16 %v2468
        %v2765 = vunpack.c.l.b16 %v2469
        %v2766 = vunpack.c.h.b16 %v2469
        %v2767 = vunpack.c.l.b16 %v2470
        %v2768 = vunpack.c.h.b16 %v2470
        %v2769 = vunpack.c.l.b16 %v2471
        %v2770 = vunpack.c.h.b16 %v2471
        %v2771 = vunpack.c.l.b16 %v2472
        %v2772 = vunpack.c.h.b16 %v2472
        %v2773 = vunpack.c.l.b16 %v2473
        %v2774 = vunpack.c.h.b16 %v2473
        %v2775 = vunpack.c.l.b16 %v2474
        %v2776 = vunpack.c.h.b16 %v2474
        %v2777 = vunpack.c.l.b16 %v2475
        %v2778 = vunpack.c.h.b16 %v2475
        %v2779 = vunpack.c.l.b16 %v2476
        %v2780 = vunpack.c.h.b16 %v2476
        %v2781 = vunpack.c.l.b16 %v2477
        %v2782 = vunpack.c.h.b16 %v2477
        %v2783 = vunpack.c.l.b16 %v2478
        %v2784 = vunpack.c.h.b16 %v2478
        %v2785 = vunpack.c.l.b16 %v2479
        %v2786 = vunpack.c.h.b16 %v2479
        %v2787 = vunpack.c.l.b16 %v2480
        %v2788 = vunpack.c.h.b16 %v2480
        %v2789 = vunpack.c.l.b16 %v2481
        %v2790 = vunpack.c.h.b16 %v2481
        %v2791 = vunpack.c.l.b16 %v2482
        %v2792 = vunpack.c.h.b16 %v2482
        %v2793 = vunpack.c.l.b16 %v2483
        %v2794 = vunpack.c.h.b16 %v2483
        %v2795 = vunpack.c.l.b16 %v2484
        %v2796 = vunpack.c.h.b16 %v2484
        %v2797 = vunpack.c.l.b16 %v2485
        %v2798 = vunpack.c.h.b16 %v2485
        %v2799 = vunpack.c.l.b16 %v2486
        %v2800 = vunpack.c.h.b16 %v2486
        %v2801 = vunpack.c.l.b16 %v2487
        %v2802 = vunpack.c.h.b16 %v2487
        %v2803 = vunpack.c.l.b16 %v2488
        %v2804 = vunpack.c.h.b16 %v2488
        %v2805 = vunpack.c.l.b16 %v2489
        %v2806 = vunpack.c.h.b16 %v2489
        %v2807 = vunpack.c.l.b16 %v2490
        %v2808 = vunpack.c.h.b16 %v2490
        %v2809 = vunpack.c.l.b16 %v2491
        %v2810 = vunpack.c.h.b16 %v2491
        %v2811 = vunpack.c.l.b16 %v2492
        %v2812 = vunpack.c.h.b16 %v2492
        %v2813 = vunpack.c.l.b16 %v2493
        %v2814 = vunpack.c.h.b16 %v2493
        %v2815 = vunpack.c.l.b16 %v2494
        %v2816 = vunpack.c.h.b16 %v2494
        %v2817 = vunpack.c.l.b16 %v2495
        %v2818 = vunpack.c.h.b16 %v2495
        %v2819 = vunpack.c.l.b16 %v2496
        %v2820 = vunpack.c.h.b16 %v2496
        %v2821 = vunpack.c.l.b16 %v2497
        %v2822 = vunpack.c.h.b16 %v2497
        %v2823 = vunpack.c.l.b16 %v2498
        %v2824 = vunpack.c.h.b16 %v2498
        %v2825 = vunpack.c.l.b16 %v2499
        %v2826 = vunpack.c.h.b16 %v2499
        %v2827 = vunpack.c.l.b16 %v2500
        %v2828 = vunpack.c.h.b16 %v2500
        %v2829 = vunpack.c.l.b16 %v2501
        %v2830 = vunpack.c.h.b16 %v2501
        %v2831 = vunpack.c.l.b16 %v2502
        %v2832 = vunpack.c.h.b16 %v2502
        %v2833 = vunpack.c.l.b16 %v2503
        %v2834 = vunpack.c.h.b16 %v2503
        %v2835 = vunpack.c.l.b16 %v2504
        %v2836 = vunpack.c.h.b16 %v2504
        %v2837 = vunpack.c.l.b16 %v2505
        %v2838 = vunpack.c.h.b16 %v2505
        %v2839 = vunpack.c.l.b16 %v2506
        %v2840 = vunpack.c.h.b16 %v2506
        %v2841 = vunpack.c.l.b16 %v2507
        %v2842 = vunpack.c.h.b16 %v2507
        %v2843 = vunpack.c.l.b16 %v2508
        %v2844 = vunpack.c.h.b16 %v2508
        %v2845 = vunpack.c.l.b16 %v2509
        %v2846 = vunpack.c.h.b16 %v2509
        %v2847 = vunpack.c.l.b16 %v2510
        %v2848 = vunpack.c.h.b16 %v2510
        %v2849 = vunpack.c.l.b16 %v2511
        %v2850 = vunpack.c.h.b16 %v2511
        %v2851 = vunpack.c.l.b16 %v2512
        %v2852 = vunpack.c.h.b16 %v2512
        %v2853 = vunpack.c.l.b16 %v2513
        %v2854 = vunpack.c.h.b16 %v2513
        %v2855 = vunpack.c.l.b16 %v2514
        %v2856 = vunpack.c.h.b16 %v2514
        %v2857 = vunpack.c.l.b16 %v2515
        %v2858 = vunpack.c.h.b16 %v2515
        %v2859 = vunpack.c.l.b16 %v2516
        %v2860 = vunpack.c.h.b16 %v2516
        %v2861 = vunpack.c.l.b16 %v2517
        %v2862 = vunpack.c.h.b16 %v2517
        %v2863 = vunpack.c.l.b16 %v2518
        %v2864 = vunpack.c.h.b16 %v2518
        %v2865 = vunpack.c.l.b16 %v2519
        %v2866 = vunpack.c.h.b16 %v2519
        %v2867 = vunpack.c.l.b16 %v2520
        %v2868 = vunpack.c.h.b16 %v2520
        %v2869 = vunpack.c.l.b16 %v2521
        %v2870 = vunpack.c.h.b16 %v2521
        %v2871 = vunpack.c.l.b16 %v2522
        %v2872 = vunpack.c.h.b16 %v2522
        %v2873 = vunpack.c.l.b16 %v2523
        %v2874 = vunpack.c.h.b16 %v2523
        %v2875 = vunpack.c.l.b16 %v2524
        %v2876 = vunpack.c.h.b16 %v2524
        %v2877 = vunpack.c.l.b16 %v2525
        %v2878 = vunpack.c.h.b16 %v2525
        %v2879 = vunpack.c.l.b16 %v2526
        %v2880 = vunpack.c.h.b16 %v2526
        %v2881 = vunpack.c.l.b16 %v2527
        %v2882 = vunpack.c.h.b16 %v2527
        %v2883 = vunpack.c.l.b16 %v2528
        %v2884 = vunpack.c.h.b16 %v2528
        %v2885 = vunpack.c.l.b16 %v2529
        %v2886 = vunpack.c.h.b16 %v2529
        %v2887 = vunpack.c.l.b16 %v2530
        %v2888 = vunpack.c.h.b16 %v2530
        %v2889 = vunpack.c.l.b16 %v2531
        %v2890 = vunpack.c.h.b16 %v2531
        %v2891 = vunpack.c.l.b16 %v2532
        %v2892 = vunpack.c.h.b16 %v2532
        %v2893 = vunpack.c.l.b16 %v2533
        %v2894 = vunpack.c.h.b16 %v2533
        %v2895 = vunpack.c.l.b16 %v2534
        %v2896 = vunpack.c.h.b16 %v2534
        %v2897 = vunpack.c.l.b16 %v2535
        %v2898 = vunpack.c.h.b16 %v2535
        %v2899 = vunpack.c.l.b16 %v2536
        %v2900 = vunpack.c.h.b16 %v2536
        %v2901 = vunpack.c.l.b16 %v2537
        %v2902 = vunpack.c.h.b16 %v2537
        %v2903 = vunpack.c.l.b16 %v2538
        %v2904 = vunpack.c.h.b16 %v2538
        %v2905 = vunpack.c.l.b16 %v2539
        %v2906 = vunpack.c.h.b16 %v2539
        %v2907 = vunpack.c.l.b16 %v2540
        %v2908 = vunpack.c.h.b16 %v2540
        %v2909 = vunpack.c.l.b16 %v2541
        %v2910 = vunpack.c.h.b16 %v2541
        %v2911 = vunpack.c.l.b16 %v2542
        %v2912 = vunpack.c.h.b16 %v2542
        %v2913 = vunpack.c.l.b16 %v2543
        %v2914 = vunpack.c.h.b16 %v2543
        %v2915 = vunpack.c.l.b16 %v2544
        %v2916 = vunpack.c.h.b16 %v2544
        %v2917 = vunpack.c.l.b16 %v2545
        %v2918 = vunpack.c.h.b16 %v2545
        %v2919 = vunpack.c.l.b16 %v2546
        %v2920 = vunpack.c.h.b16 %v2546
        %v2921 = vunpack.c.l.b16 %v2547
        %v2922 = vunpack.c.h.b16 %v2547
        %v2923 = vunpack.c.l.b16 %v2548
        %v2924 = vunpack.c.h.b16 %v2548
        %v2925 = vunpack.c.l.b16 %v2549
        %v2926 = vunpack.c.h.b16 %v2549
        %v2927 = vunpack.c.l.b16 %v2550
        %v2928 = vunpack.c.h.b16 %v2550
        %v2929 = vunpack.c.l.b16 %v2551
        %v2930 = vunpack.c.h.b16 %v2551
        %v2931 = vunpack.c.l.b16 %v2552
        %v2932 = vunpack.c.h.b16 %v2552
        %v2933 = vunpack.c.l.b16 %v2553
        %v2934 = vunpack.c.h.b16 %v2553
        %v2935 = vunpack.c.l.b16 %v2554
        %v2936 = vunpack.c.h.b16 %v2554
        %v2937 = vunpack.c.l.b16 %v2555
        %v2938 = vunpack.c.h.b16 %v2555
        %v2939 = vunpack.c.l.b16 %v2556
        %v2940 = vunpack.c.h.b16 %v2556
        %v2941 = vpack.c.b16 %v2693, %v2685
        %v2942 = vpack.c.b16 %v2694, %v2686
        %v2943 = vpack.c.b16 %v2695, %v2687
        %v2944 = vpack.c.b16 %v2696, %v2688
        %v2945 = vpack.c.b16 %v2697, %v2689
        %v2946 = vpack.c.b16 %v2698, %v2690
        %v2947 = vpack.c.b16 %v2699, %v2691
        %v2948 = vpack.c.b16 %v2700, %v2692
        %v2949 = vpack.c.b16 %v2709, %v2701
        %v2950 = vpack.c.b16 %v2710, %v2702
        %v2951 = vpack.c.b16 %v2711, %v2703
        %v2952 = vpack.c.b16 %v2712, %v2704
        %v2953 = vpack.c.b16 %v2713, %v2705
        %v2954 = vpack.c.b16 %v2714, %v2706
        %v2955 = vpack.c.b16 %v2715, %v2707
        %v2956 = vpack.c.b16 %v2716, %v2708
        %v2957 = vpack.c.b16 %v2725, %v2717
        %v2958 = vpack.c.b16 %v2726, %v2718
        %v2959 = vpack.c.b16 %v2727, %v2719
        %v2960 = vpack.c.b16 %v2728, %v2720
        %v2961 = vpack.c.b16 %v2729, %v2721
        %v2962 = vpack.c.b16 %v2730, %v2722
        %v2963 = vpack.c.b16 %v2731, %v2723
        %v2964 = vpack.c.b16 %v2732, %v2724
        %v2965 = vpack.c.b16 %v2741, %v2733
        %v2966 = vpack.c.b16 %v2742, %v2734
        %v2967 = vpack.c.b16 %v2743, %v2735
        %v2968 = vpack.c.b16 %v2744, %v2736
        %v2969 = vpack.c.b16 %v2745, %v2737
        %v2970 = vpack.c.b16 %v2746, %v2738
        %v2971 = vpack.c.b16 %v2747, %v2739
        %v2972 = vpack.c.b16 %v2748, %v2740
        %v2973 = vpack.c.b16 %v2757, %v2749
        %v2974 = vpack.c.b16 %v2758, %v2750
        %v2975 = vpack.c.b16 %v2759, %v2751
        %v2976 = vpack.c.b16 %v2760, %v2752
        %v2977 = vpack.c.b16 %v2761, %v2753
        %v2978 = vpack.c.b16 %v2762, %v2754
        %v2979 = vpack.c.b16 %v2763, %v2755
        %v2980 = vpack.c.b16 %v2764, %v2756
        %v2981 = vpack.c.b16 %v2773, %v2765
        %v2982 = vpack.c.b16 %v2774, %v2766
        %v2983 = vpack.c.b16 %v2775, %v2767
        %v2984 = vpack.c.b16 %v2776, %v2768
        %v2985 = vpack.c.b16 %v2777, %v2769
        %v2986 = vpack.c.b16 %v2778, %v2770
        %v2987 = vpack.c.b16 %v2779, %v2771
        %v2988 = vpack.c.b16 %v2780, %v2772
        %v2989 = vpack.c.b16 %v2789, %v2781
        %v2990 = vpack.c.b16 %v2790, %v2782
        %v2991 = vpack.c.b16 %v2791, %v2783
        %v2992 = vpack.c.b16 %v2792, %v2784
        %v2993 = vpack.c.b16 %v2793, %v2785
        %v2994 = vpack.c.b16 %v2794, %v2786
        %v2995 = vpack.c.b16 %v2795, %v2787
        %v2996 = vpack.c.b16 %v2796, %v2788
        %v2997 = vpack.c.b16 %v2805, %v2797
        %v2998 = vpack.c.b16 %v2806, %v2798
        %v2999 = vpack.c.b16 %v2807, %v2799
        %v3000 = vpack.c.b16 %v2808, %v2800
        %v3001 = vpack.c.b16 %v2809, %v2801
        %v3002 = vpack.c.b16 %v2810, %v2802
        %v3003 = vpack.c.b16 %v2811, %v2803
        %v3004 = vpack.c.b16 %v2812, %v2804
        %v3005 = vpack.c.b16 %v2821, %v2813
        %v3006 = vpack.c.b16 %v2822, %v2814
        %v3007 = vpack.c.b16 %v2823, %v2815
        %v3008 = vpack.c.b16 %v2824, %v2816
        %v3009 = vpack.c.b16 %v2825, %v2817
        %v3010 = vpack.c.b16 %v2826, %v2818
        %v3011 = vpack.c.b16 %v2827, %v2819
        %v3012 = vpack.c.b16 %v2828, %v2820
        %v3013 = vpack.c.b16 %v2837, %v2829
        %v3014 = vpack.c.b16 %v2838, %v2830
        %v3015 = vpack.c.b16 %v2839, %v2831
        %v3016 = vpack.c.b16 %v2840, %v2832
        %v3017 = vpack.c.b16 %v2841, %v2833
        %v3018 = vpack.c.b16 %v2842, %v2834
        %v3019 = vpack.c.b16 %v2843, %v2835
        %v3020 = vpack.c.b16 %v2844, %v2836
        %v3021 = vpack.c.b16 %v2853, %v2845
        %v3022 = vpack.c.b16 %v2854, %v2846
        %v3023 = vpack.c.b16 %v2855, %v2847
        %v3024 = vpack.c.b16 %v2856, %v2848
        %v3025 = vpack.c.b16 %v2857, %v2849
        %v3026 = vpack.c.b16 %v2858, %v2850
        %v3027 = vpack.c.b16 %v2859, %v2851
        %v3028 = vpack.c.b16 %v2860, %v2852
        %v3029 = vpack.c.b16 %v2869, %v2861
        %v3030 = vpack.c.b16 %v2870, %v2862
        %v3031 = vpack.c.b16 %v2871, %v2863
        %v3032 = vpack.c.b16 %v2872, %v2864
        %v3033 = vpack.c.b16 %v2873, %v2865
        %v3034 = vpack.c.b16 %v2874, %v2866
        %v3035 = vpack.c.b16 %v2875, %v2867
        %v3036 = vpack.c.b16 %v2876, %v2868
        %v3037 = vpack.c.b16 %v2885, %v2877
        %v3038 = vpack.c.b16 %v2886, %v2878
        %v3039 = vpack.c.b16 %v2887, %v2879
        %v3040 = vpack.c.b16 %v2888, %v2880
        %v3041 = vpack.c.b16 %v2889, %v2881
        %v3042 = vpack.c.b16 %v2890, %v2882
        %v3043 = vpack.c.b16 %v2891, %v2883
        %v3044 = vpack.c.b16 %v2892, %v2884
        %v3045 = vpack.c.b16 %v2901, %v2893
        %v3046 = vpack.c.b16 %v2902, %v2894
        %v3047 = vpack.c.b16 %v2903, %v2895
        %v3048 = vpack.c.b16 %v2904, %v2896
        %v3049 = vpack.c.b16 %v2905, %v2897
        %v3050 = vpack.c.b16 %v2906, %v2898
        %v3051 = vpack.c.b16 %v2907, %v2899
        %v3052 = vpack.c.b16 %v2908, %v2900
        %v3053 = vpack.c.b16 %v2917, %v2909
        %v3054 = vpack.c.b16 %v2918, %v2910
        %v3055 = vpack.c.b16 %v2919, %v2911
        %v3056 = vpack.c.b16 %v2920, %v2912
        %v3057 = vpack.c.b16 %v2921, %v2913
        %v3058 = vpack.c.b16 %v2922, %v2914
        %v3059 = vpack.c.b16 %v2923, %v2915
        %v3060 = vpack.c.b16 %v2924, %v2916
        %v3061 = vpack.c.b16 %v2933, %v2925
        %v3062 = vpack.c.b16 %v2934, %v2926
        %v3063 = vpack.c.b16 %v2935, %v2927
        %v3064 = vpack.c.b16 %v2936, %v2928
        %v3065 = vpack.c.b16 %v2937, %v2929
        %v3066 = vpack.c.b16 %v2938, %v2930
        %v3067 = vpack.c.b16 %v2939, %v2931
        %v3068 = vpack.c.b16 %v2940, %v2932
        %3197 = vmatpush.bf16.msra.mxu0 %v2997
        %3198 = vmatpush.bf16.msra.mxu0 %v2989
        %3199 = vmatpush.bf16.msra.mxu0 %v2981
        %3200 = vmatpush.bf16.msra.mxu0 %v2973
        %3201 = vmatpush.bf16.msra.mxu0 %v2965
        %3202 = vmatpush.bf16.msra.mxu0 %v2957
        %3203 = vmatpush.bf16.msra.mxu0 %v2949
        %3204 = vmatpush.bf16.msra.mxu0 %v2941
        %3205 = vmatmul.bf16.gmra.mxu0 %v2365
        %v3206 = vpop.f32.mrf.mxu0
        %v3207 = vadd.f32 0.0, %v3206
        %v3208 = vpop.f32.mrf.mxu0
        %v3209 = vadd.f32 0.0, %v3208
        %3210 = vmatmul.bf16.gmra.mxu0 %v2367
        %v3211 = vpop.f32.mrf.mxu0
        %v3212 = vadd.f32 0.0, %v3211
        %v3213 = vpop.f32.mrf.mxu0
        %v3214 = vadd.f32 0.0, %v3213
        %3215 = vmatmul.bf16.gmra.mxu0 %v2369
        %v3216 = vpop.f32.mrf.mxu0
        %v3217 = vadd.f32 0.0, %v3216
        %v3218 = vpop.f32.mrf.mxu0
        %v3219 = vadd.f32 0.0, %v3218
        %3220 = vmatmul.bf16.gmra.mxu0 %v2371
        %v3221 = vpop.f32.mrf.mxu0
        %v3222 = vadd.f32 0.0, %v3221
        %v3223 = vpop.f32.mrf.mxu0
        %v3224 = vadd.f32 0.0, %v3223
        %3225 = vmatmul.bf16.gmra.mxu0 %v2373
        %v3226 = vpop.f32.mrf.mxu0
        %v3227 = vadd.f32 0.0, %v3226
        %v3228 = vpop.f32.mrf.mxu0
        %v3229 = vadd.f32 0.0, %v3228
        %3230 = vmatmul.bf16.gmra.mxu0 %v2375
        %v3231 = vpop.f32.mrf.mxu0
        %v3232 = vadd.f32 0.0, %v3231
        %v3233 = vpop.f32.mrf.mxu0
        %v3234 = vadd.f32 0.0, %v3233
        %3235 = vmatmul.bf16.gmra.mxu0 %v2377
        %v3236 = vpop.f32.mrf.mxu0
        %v3237 = vadd.f32 0.0, %v3236
        %v3238 = vpop.f32.mrf.mxu0
        %v3239 = vadd.f32 0.0, %v3238
        %3240 = vmatmul.bf16.gmra.mxu0 %v2379
        %v3241 = vpop.f32.mrf.mxu0
        %v3242 = vadd.f32 0.0, %v3241
        %v3243 = vpop.f32.mrf.mxu0
        %v3244 = vadd.f32 0.0, %v3243
        %3245 = vmatmul.bf16.gmra.mxu0 %v2381
        %v3246 = vpop.f32.mrf.mxu0
        %v3247 = vadd.f32 0.0, %v3246
        %v3248 = vpop.f32.mrf.mxu0
        %v3249 = vadd.f32 0.0, %v3248
        %3250 = vmatmul.bf16.gmra.mxu0 %v2383
        %v3251 = vpop.f32.mrf.mxu0
        %v3252 = vadd.f32 0.0, %v3251
        %v3253 = vpop.f32.mrf.mxu0
        %v3254 = vadd.f32 0.0, %v3253
        %3255 = vmatmul.bf16.gmra.mxu0 %v2385
        %v3256 = vpop.f32.mrf.mxu0
        %v3257 = vadd.f32 0.0, %v3256
        %v3258 = vpop.f32.mrf.mxu0
        %v3259 = vadd.f32 0.0, %v3258
        %3260 = vmatmul.bf16.gmra.mxu0 %v2387
        %v3261 = vpop.f32.mrf.mxu0
        %v3262 = vadd.f32 0.0, %v3261
        %v3263 = vpop.f32.mrf.mxu0
        %v3264 = vadd.f32 0.0, %v3263
        %3265 = vmatmul.bf16.gmra.mxu0 %v2389
        %v3266 = vpop.f32.mrf.mxu0
        %v3267 = vadd.f32 0.0, %v3266
        %v3268 = vpop.f32.mrf.mxu0
        %v3269 = vadd.f32 0.0, %v3268
        %3270 = vmatmul.bf16.gmra.mxu0 %v2391
        %v3271 = vpop.f32.mrf.mxu0
        %v3272 = vadd.f32 0.0, %v3271
        %v3273 = vpop.f32.mrf.mxu0
        %v3274 = vadd.f32 0.0, %v3273
        %3275 = vmatmul.bf16.gmra.mxu0 %v2393
        %v3276 = vpop.f32.mrf.mxu0
        %v3277 = vadd.f32 0.0, %v3276
        %v3278 = vpop.f32.mrf.mxu0
        %v3279 = vadd.f32 0.0, %v3278
        %3280 = vmatmul.bf16.gmra.mxu0 %v2395
        %v3281 = vpop.f32.mrf.mxu0
        %v3282 = vadd.f32 0.0, %v3281
        %v3283 = vpop.f32.mrf.mxu0
        %v3284 = vadd.f32 0.0, %v3283
        %3285 = vmatmul.bf16.gmra.mxu0 %v2397
        %v3286 = vpop.f32.mrf.mxu0
        %v3287 = vadd.f32 0.0, %v3286
        %v3288 = vpop.f32.mrf.mxu0
        %v3289 = vadd.f32 0.0, %v3288
        %3290 = vmatmul.bf16.gmra.mxu0 %v2399
        %v3291 = vpop.f32.mrf.mxu0
        %v3292 = vadd.f32 0.0, %v3291
        %v3293 = vpop.f32.mrf.mxu0
        %v3294 = vadd.f32 0.0, %v3293
        %3295 = vmatmul.bf16.gmra.mxu0 %v2401
        %v3296 = vpop.f32.mrf.mxu0
        %v3297 = vadd.f32 0.0, %v3296
        %v3298 = vpop.f32.mrf.mxu0
        %v3299 = vadd.f32 0.0, %v3298
        %3300 = vmatmul.bf16.gmra.mxu0 %v2403
        %v3301 = vpop.f32.mrf.mxu0
        %v3302 = vadd.f32 0.0, %v3301
        %v3303 = vpop.f32.mrf.mxu0
        %v3304 = vadd.f32 0.0, %v3303
        %3305 = vmatmul.bf16.gmra.mxu0 %v2405
        %v3306 = vpop.f32.mrf.mxu0
        %v3307 = vadd.f32 0.0, %v3306
        %v3308 = vpop.f32.mrf.mxu0
        %v3309 = vadd.f32 0.0, %v3308
        %3310 = vmatmul.bf16.gmra.mxu0 %v2407
        %v3311 = vpop.f32.mrf.mxu0
        %v3312 = vadd.f32 0.0, %v3311
        %v3313 = vpop.f32.mrf.mxu0
        %v3314 = vadd.f32 0.0, %v3313
        %3315 = vmatmul.bf16.gmra.mxu0 %v2409
        %v3316 = vpop.f32.mrf.mxu0
        %v3317 = vadd.f32 0.0, %v3316
        %v3318 = vpop.f32.mrf.mxu0
        %v3319 = vadd.f32 0.0, %v3318
        %3320 = vmatmul.bf16.gmra.mxu0 %v2411
        %v3321 = vpop.f32.mrf.mxu0
        %v3322 = vadd.f32 0.0, %v3321
        %v3323 = vpop.f32.mrf.mxu0
        %v3324 = vadd.f32 0.0, %v3323
        %3325 = vmatmul.bf16.gmra.mxu0 %v2413
        %v3326 = vpop.f32.mrf.mxu0
        %v3327 = vadd.f32 0.0, %v3326
        %v3328 = vpop.f32.mrf.mxu0
        %v3329 = vadd.f32 0.0, %v3328
        %3330 = vmatmul.bf16.gmra.mxu0 %v2415
        %v3331 = vpop.f32.mrf.mxu0
        %v3332 = vadd.f32 0.0, %v3331
        %v3333 = vpop.f32.mrf.mxu0
        %v3334 = vadd.f32 0.0, %v3333
        %3335 = vmatmul.bf16.gmra.mxu0 %v2417
        %v3336 = vpop.f32.mrf.mxu0
        %v3337 = vadd.f32 0.0, %v3336
        %v3338 = vpop.f32.mrf.mxu0
        %v3339 = vadd.f32 0.0, %v3338
        %3340 = vmatmul.bf16.gmra.mxu0 %v2419
        %v3341 = vpop.f32.mrf.mxu0
        %v3342 = vadd.f32 0.0, %v3341
        %v3343 = vpop.f32.mrf.mxu0
        %v3344 = vadd.f32 0.0, %v3343
        %3345 = vmatmul.bf16.gmra.mxu0 %v2421
        %v3346 = vpop.f32.mrf.mxu0
        %v3347 = vadd.f32 0.0, %v3346
        %v3348 = vpop.f32.mrf.mxu0
        %v3349 = vadd.f32 0.0, %v3348
        %3350 = vmatmul.bf16.gmra.mxu0 %v2423
        %v3351 = vpop.f32.mrf.mxu0
        %v3352 = vadd.f32 0.0, %v3351
        %v3353 = vpop.f32.mrf.mxu0
        %v3354 = vadd.f32 0.0, %v3353
        %3355 = vmatmul.bf16.gmra.mxu0 %v2425
        %v3356 = vpop.f32.mrf.mxu0
        %v3357 = vadd.f32 0.0, %v3356
        %v3358 = vpop.f32.mrf.mxu0
        %v3359 = vadd.f32 0.0, %v3358
        %3360 = vmatmul.bf16.gmra.mxu0 %v2427
        %v3361 = vpop.f32.mrf.mxu0
        %v3362 = vadd.f32 0.0, %v3361
        %v3363 = vpop.f32.mrf.mxu0
        %v3364 = vadd.f32 0.0, %v3363
        %3365 = vdwg.mxu0
        %3366 = vmatpush.bf16.msra.mxu0 %v3061
        %3367 = vmatpush.bf16.msra.mxu0 %v3053
        %3368 = vmatpush.bf16.msra.mxu0 %v3045
        %3369 = vmatpush.bf16.msra.mxu0 %v3037
        %3370 = vmatpush.bf16.msra.mxu0 %v3029
        %3371 = vmatpush.bf16.msra.mxu0 %v3021
        %3372 = vmatpush.bf16.msra.mxu0 %v3013
        %3373 = vmatpush.bf16.msra.mxu0 %v3005
        %3374 = vmatmul.bf16.gmra.mxu0 %v2366
        %v3375 = vpop.f32.mrf.mxu0
        %v3376 = vadd.f32 %v3207, %v3375
        %v3377 = vpop.f32.mrf.mxu0
        %v3378 = vadd.f32 %v3209, %v3377
        %3379 = vmatmul.bf16.gmra.mxu0 %v2368
        %v3380 = vpop.f32.mrf.mxu0
        %v3381 = vadd.f32 %v3212, %v3380
        %v3382 = vpop.f32.mrf.mxu0
        %v3383 = vadd.f32 %v3214, %v3382
        %3384 = vmatmul.bf16.gmra.mxu0 %v2370
        %v3385 = vpop.f32.mrf.mxu0
        %v3386 = vadd.f32 %v3217, %v3385
        %v3387 = vpop.f32.mrf.mxu0
        %v3388 = vadd.f32 %v3219, %v3387
        %3389 = vmatmul.bf16.gmra.mxu0 %v2372
        %v3390 = vpop.f32.mrf.mxu0
        %v3391 = vadd.f32 %v3222, %v3390
        %v3392 = vpop.f32.mrf.mxu0
        %v3393 = vadd.f32 %v3224, %v3392
        %3394 = vmatmul.bf16.gmra.mxu0 %v2374
        %v3395 = vpop.f32.mrf.mxu0
        %v3396 = vadd.f32 %v3227, %v3395
        %v3397 = vpop.f32.mrf.mxu0
        %v3398 = vadd.f32 %v3229, %v3397
        %3399 = vmatmul.bf16.gmra.mxu0 %v2376
        %v3400 = vpop.f32.mrf.mxu0
        %v3401 = vadd.f32 %v3232, %v3400
        %v3402 = vpop.f32.mrf.mxu0
        %v3403 = vadd.f32 %v3234, %v3402
        %3404 = vmatmul.bf16.gmra.mxu0 %v2378
        %v3405 = vpop.f32.mrf.mxu0
        %v3406 = vadd.f32 %v3237, %v3405
        %v3407 = vpop.f32.mrf.mxu0
        %v3408 = vadd.f32 %v3239, %v3407
        %3409 = vmatmul.bf16.gmra.mxu0 %v2380
        %v3410 = vpop.f32.mrf.mxu0
        %v3411 = vadd.f32 %v3242, %v3410
        %v3412 = vpop.f32.mrf.mxu0
        %v3413 = vadd.f32 %v3244, %v3412
        %3414 = vmatmul.bf16.gmra.mxu0 %v2382
        %v3415 = vpop.f32.mrf.mxu0
        %v3416 = vadd.f32 %v3247, %v3415
        %v3417 = vpop.f32.mrf.mxu0
        %v3418 = vadd.f32 %v3249, %v3417
        %3419 = vmatmul.bf16.gmra.mxu0 %v2384
        %v3420 = vpop.f32.mrf.mxu0
        %v3421 = vadd.f32 %v3252, %v3420
        %v3422 = vpop.f32.mrf.mxu0
        %v3423 = vadd.f32 %v3254, %v3422
        %3424 = vmatmul.bf16.gmra.mxu0 %v2386
        %v3425 = vpop.f32.mrf.mxu0
        %v3426 = vadd.f32 %v3257, %v3425
        %v3427 = vpop.f32.mrf.mxu0
        %v3428 = vadd.f32 %v3259, %v3427
        %3429 = vmatmul.bf16.gmra.mxu0 %v2388
        %v3430 = vpop.f32.mrf.mxu0
        %v3431 = vadd.f32 %v3262, %v3430
        %v3432 = vpop.f32.mrf.mxu0
        %v3433 = vadd.f32 %v3264, %v3432
        %3434 = vmatmul.bf16.gmra.mxu0 %v2390
        %v3435 = vpop.f32.mrf.mxu0
        %v3436 = vadd.f32 %v3267, %v3435
        %v3437 = vpop.f32.mrf.mxu0
        %v3438 = vadd.f32 %v3269, %v3437
        %3439 = vmatmul.bf16.gmra.mxu0 %v2392
        %v3440 = vpop.f32.mrf.mxu0
        %v3441 = vadd.f32 %v3272, %v3440
        %v3442 = vpop.f32.mrf.mxu0
        %v3443 = vadd.f32 %v3274, %v3442
        %3444 = vmatmul.bf16.gmra.mxu0 %v2394
        %v3445 = vpop.f32.mrf.mxu0
        %v3446 = vadd.f32 %v3277, %v3445
        %v3447 = vpop.f32.mrf.mxu0
        %v3448 = vadd.f32 %v3279, %v3447
        %3449 = vmatmul.bf16.gmra.mxu0 %v2396
        %v3450 = vpop.f32.mrf.mxu0
        %v3451 = vadd.f32 %v3282, %v3450
        %v3452 = vpop.f32.mrf.mxu0
        %v3453 = vadd.f32 %v3284, %v3452
        %3454 = vmatmul.bf16.gmra.mxu0 %v2398
        %v3455 = vpop.f32.mrf.mxu0
        %v3456 = vadd.f32 %v3287, %v3455
        %v3457 = vpop.f32.mrf.mxu0
        %v3458 = vadd.f32 %v3289, %v3457
        %3459 = vmatmul.bf16.gmra.mxu0 %v2400
        %v3460 = vpop.f32.mrf.mxu0
        %v3461 = vadd.f32 %v3292, %v3460
        %v3462 = vpop.f32.mrf.mxu0
        %v3463 = vadd.f32 %v3294, %v3462
        %3464 = vmatmul.bf16.gmra.mxu0 %v2402
        %v3465 = vpop.f32.mrf.mxu0
        %v3466 = vadd.f32 %v3297, %v3465
        %v3467 = vpop.f32.mrf.mxu0
        %v3468 = vadd.f32 %v3299, %v3467
        %3469 = vmatmul.bf16.gmra.mxu0 %v2404
        %v3470 = vpop.f32.mrf.mxu0
        %v3471 = vadd.f32 %v3302, %v3470
        %v3472 = vpop.f32.mrf.mxu0
        %v3473 = vadd.f32 %v3304, %v3472
        %3474 = vmatmul.bf16.gmra.mxu0 %v2406
        %v3475 = vpop.f32.mrf.mxu0
        %v3476 = vadd.f32 %v3307, %v3475
        %v3477 = vpop.f32.mrf.mxu0
        %v3478 = vadd.f32 %v3309, %v3477
        %3479 = vmatmul.bf16.gmra.mxu0 %v2408
        %v3480 = vpop.f32.mrf.mxu0
        %v3481 = vadd.f32 %v3312, %v3480
        %v3482 = vpop.f32.mrf.mxu0
        %v3483 = vadd.f32 %v3314, %v3482
        %3484 = vmatmul.bf16.gmra.mxu0 %v2410
        %v3485 = vpop.f32.mrf.mxu0
        %v3486 = vadd.f32 %v3317, %v3485
        %v3487 = vpop.f32.mrf.mxu0
        %v3488 = vadd.f32 %v3319, %v3487
        %3489 = vmatmul.bf16.gmra.mxu0 %v2412
        %v3490 = vpop.f32.mrf.mxu0
        %v3491 = vadd.f32 %v3322, %v3490
        %v3492 = vpop.f32.mrf.mxu0
        %v3493 = vadd.f32 %v3324, %v3492
        %3494 = vmatmul.bf16.gmra.mxu0 %v2414
        %v3495 = vpop.f32.mrf.mxu0
        %v3496 = vadd.f32 %v3327, %v3495
        %v3497 = vpop.f32.mrf.mxu0
        %v3498 = vadd.f32 %v3329, %v3497
        %3499 = vmatmul.bf16.gmra.mxu0 %v2416
        %v3500 = vpop.f32.mrf.mxu0
        %v3501 = vadd.f32 %v3332, %v3500
        %v3502 = vpop.f32.mrf.mxu0
        %v3503 = vadd.f32 %v3334, %v3502
        %3504 = vmatmul.bf16.gmra.mxu0 %v2418
        %v3505 = vpop.f32.mrf.mxu0
        %v3506 = vadd.f32 %v3337, %v3505
        %v3507 = vpop.f32.mrf.mxu0
        %v3508 = vadd.f32 %v3339, %v3507
        %3509 = vmatmul.bf16.gmra.mxu0 %v2420
        %v3510 = vpop.f32.mrf.mxu0
        %v3511 = vadd.f32 %v3342, %v3510
        %v3512 = vpop.f32.mrf.mxu0
        %v3513 = vadd.f32 %v3344, %v3512
        %3514 = vmatmul.bf16.gmra.mxu0 %v2422
        %v3515 = vpop.f32.mrf.mxu0
        %v3516 = vadd.f32 %v3347, %v3515
        %v3517 = vpop.f32.mrf.mxu0
        %v3518 = vadd.f32 %v3349, %v3517
        %3519 = vmatmul.bf16.gmra.mxu0 %v2424
        %v3520 = vpop.f32.mrf.mxu0
        %v3521 = vadd.f32 %v3352, %v3520
        %v3522 = vpop.f32.mrf.mxu0
        %v3523 = vadd.f32 %v3354, %v3522
        %3524 = vmatmul.bf16.gmra.mxu0 %v2426
        %v3525 = vpop.f32.mrf.mxu0
        %v3526 = vadd.f32 %v3357, %v3525
        %v3527 = vpop.f32.mrf.mxu0
        %v3528 = vadd.f32 %v3359, %v3527
        %3529 = vmatmul.bf16.gmra.mxu0 %v2428
        %v3530 = vpop.f32.mrf.mxu0
        %v3531 = vadd.f32 %v3362, %v3530
        %v3532 = vpop.f32.mrf.mxu0
        %v3533 = vadd.f32 %v3364, %v3532
        %3534 = vdwg.mxu0
        %3535 = vmatpush.bf16.msra.mxu0 %v2998
        %3536 = vmatpush.bf16.msra.mxu0 %v2990
        %3537 = vmatpush.bf16.msra.mxu0 %v2982
        %3538 = vmatpush.bf16.msra.mxu0 %v2974
        %3539 = vmatpush.bf16.msra.mxu0 %v2966
        %3540 = vmatpush.bf16.msra.mxu0 %v2958
        %3541 = vmatpush.bf16.msra.mxu0 %v2950
        %3542 = vmatpush.bf16.msra.mxu0 %v2942
        %3543 = vmatmul.bf16.gmra.mxu0 %v2365
        %v3544 = vpop.f32.mrf.mxu0
        %v3545 = vadd.f32 0.0, %v3544
        %v3546 = vpop.f32.mrf.mxu0
        %v3547 = vadd.f32 0.0, %v3546
        %3548 = vmatmul.bf16.gmra.mxu0 %v2367
        %v3549 = vpop.f32.mrf.mxu0
        %v3550 = vadd.f32 0.0, %v3549
        %v3551 = vpop.f32.mrf.mxu0
        %v3552 = vadd.f32 0.0, %v3551
        %3553 = vmatmul.bf16.gmra.mxu0 %v2369
        %v3554 = vpop.f32.mrf.mxu0
        %v3555 = vadd.f32 0.0, %v3554
        %v3556 = vpop.f32.mrf.mxu0
        %v3557 = vadd.f32 0.0, %v3556
        %3558 = vmatmul.bf16.gmra.mxu0 %v2371
        %v3559 = vpop.f32.mrf.mxu0
        %v3560 = vadd.f32 0.0, %v3559
        %v3561 = vpop.f32.mrf.mxu0
        %v3562 = vadd.f32 0.0, %v3561
        %3563 = vmatmul.bf16.gmra.mxu0 %v2373
        %v3564 = vpop.f32.mrf.mxu0
        %v3565 = vadd.f32 0.0, %v3564
        %v3566 = vpop.f32.mrf.mxu0
        %v3567 = vadd.f32 0.0, %v3566
        %3568 = vmatmul.bf16.gmra.mxu0 %v2375
        %v3569 = vpop.f32.mrf.mxu0
        %v3570 = vadd.f32 0.0, %v3569
        %v3571 = vpop.f32.mrf.mxu0
        %v3572 = vadd.f32 0.0, %v3571
        %3573 = vmatmul.bf16.gmra.mxu0 %v2377
        %v3574 = vpop.f32.mrf.mxu0
        %v3575 = vadd.f32 0.0, %v3574
        %v3576 = vpop.f32.mrf.mxu0
        %v3577 = vadd.f32 0.0, %v3576
        %3578 = vmatmul.bf16.gmra.mxu0 %v2379
        %v3579 = vpop.f32.mrf.mxu0
        %v3580 = vadd.f32 0.0, %v3579
        %v3581 = vpop.f32.mrf.mxu0
        %v3582 = vadd.f32 0.0, %v3581
        %3583 = vmatmul.bf16.gmra.mxu0 %v2381
        %v3584 = vpop.f32.mrf.mxu0
        %v3585 = vadd.f32 0.0, %v3584
        %v3586 = vpop.f32.mrf.mxu0
        %v3587 = vadd.f32 0.0, %v3586
        %3588 = vmatmul.bf16.gmra.mxu0 %v2383
        %v3589 = vpop.f32.mrf.mxu0
        %v3590 = vadd.f32 0.0, %v3589
        %v3591 = vpop.f32.mrf.mxu0
        %v3592 = vadd.f32 0.0, %v3591
        %3593 = vmatmul.bf16.gmra.mxu0 %v2385
        %v3594 = vpop.f32.mrf.mxu0
        %v3595 = vadd.f32 0.0, %v3594
        %v3596 = vpop.f32.mrf.mxu0
        %v3597 = vadd.f32 0.0, %v3596
        %3598 = vmatmul.bf16.gmra.mxu0 %v2387
        %v3599 = vpop.f32.mrf.mxu0
        %v3600 = vadd.f32 0.0, %v3599
        %v3601 = vpop.f32.mrf.mxu0
        %v3602 = vadd.f32 0.0, %v3601
        %3603 = vmatmul.bf16.gmra.mxu0 %v2389
        %v3604 = vpop.f32.mrf.mxu0
        %v3605 = vadd.f32 0.0, %v3604
        %v3606 = vpop.f32.mrf.mxu0
        %v3607 = vadd.f32 0.0, %v3606
        %3608 = vmatmul.bf16.gmra.mxu0 %v2391
        %v3609 = vpop.f32.mrf.mxu0
        %v3610 = vadd.f32 0.0, %v3609
        %v3611 = vpop.f32.mrf.mxu0
        %v3612 = vadd.f32 0.0, %v3611
        %3613 = vmatmul.bf16.gmra.mxu0 %v2393
        %v3614 = vpop.f32.mrf.mxu0
        %v3615 = vadd.f32 0.0, %v3614
        %v3616 = vpop.f32.mrf.mxu0
        %v3617 = vadd.f32 0.0, %v3616
        %3618 = vmatmul.bf16.gmra.mxu0 %v2395
        %v3619 = vpop.f32.mrf.mxu0
        %v3620 = vadd.f32 0.0, %v3619
        %v3621 = vpop.f32.mrf.mxu0
        %v3622 = vadd.f32 0.0, %v3621
        %3623 = vmatmul.bf16.gmra.mxu0 %v2397
        %v3624 = vpop.f32.mrf.mxu0
        %v3625 = vadd.f32 0.0, %v3624
        %v3626 = vpop.f32.mrf.mxu0
        %v3627 = vadd.f32 0.0, %v3626
        %3628 = vmatmul.bf16.gmra.mxu0 %v2399
        %v3629 = vpop.f32.mrf.mxu0
        %v3630 = vadd.f32 0.0, %v3629
        %v3631 = vpop.f32.mrf.mxu0
        %v3632 = vadd.f32 0.0, %v3631
        %3633 = vmatmul.bf16.gmra.mxu0 %v2401
        %v3634 = vpop.f32.mrf.mxu0
        %v3635 = vadd.f32 0.0, %v3634
        %v3636 = vpop.f32.mrf.mxu0
        %v3637 = vadd.f32 0.0, %v3636
        %3638 = vmatmul.bf16.gmra.mxu0 %v2403
        %v3639 = vpop.f32.mrf.mxu0
        %v3640 = vadd.f32 0.0, %v3639
        %v3641 = vpop.f32.mrf.mxu0
        %v3642 = vadd.f32 0.0, %v3641
        %3643 = vmatmul.bf16.gmra.mxu0 %v2405
        %v3644 = vpop.f32.mrf.mxu0
        %v3645 = vadd.f32 0.0, %v3644
        %v3646 = vpop.f32.mrf.mxu0
        %v3647 = vadd.f32 0.0, %v3646
        %3648 = vmatmul.bf16.gmra.mxu0 %v2407
        %v3649 = vpop.f32.mrf.mxu0
        %v3650 = vadd.f32 0.0, %v3649
        %v3651 = vpop.f32.mrf.mxu0
        %v3652 = vadd.f32 0.0, %v3651
        %3653 = vmatmul.bf16.gmra.mxu0 %v2409
        %v3654 = vpop.f32.mrf.mxu0
        %v3655 = vadd.f32 0.0, %v3654
        %v3656 = vpop.f32.mrf.mxu0
        %v3657 = vadd.f32 0.0, %v3656
        %3658 = vmatmul.bf16.gmra.mxu0 %v2411
        %v3659 = vpop.f32.mrf.mxu0
        %v3660 = vadd.f32 0.0, %v3659
        %v3661 = vpop.f32.mrf.mxu0
        %v3662 = vadd.f32 0.0, %v3661
        %3663 = vmatmul.bf16.gmra.mxu0 %v2413
        %v3664 = vpop.f32.mrf.mxu0
        %v3665 = vadd.f32 0.0, %v3664
        %v3666 = vpop.f32.mrf.mxu0
        %v3667 = vadd.f32 0.0, %v3666
        %3668 = vmatmul.bf16.gmra.mxu0 %v2415
        %v3669 = vpop.f32.mrf.mxu0
        %v3670 = vadd.f32 0.0, %v3669
        %v3671 = vpop.f32.mrf.mxu0
        %v3672 = vadd.f32 0.0, %v3671
        %3673 = vmatmul.bf16.gmra.mxu0 %v2417
        %v3674 = vpop.f32.mrf.mxu0
        %v3675 = vadd.f32 0.0, %v3674
        %v3676 = vpop.f32.mrf.mxu0
        %v3677 = vadd.f32 0.0, %v3676
        %3678 = vmatmul.bf16.gmra.mxu0 %v2419
        %v3679 = vpop.f32.mrf.mxu0
        %v3680 = vadd.f32 0.0, %v3679
        %v3681 = vpop.f32.mrf.mxu0
        %v3682 = vadd.f32 0.0, %v3681
        %3683 = vmatmul.bf16.gmra.mxu0 %v2421
        %v3684 = vpop.f32.mrf.mxu0
        %v3685 = vadd.f32 0.0, %v3684
        %v3686 = vpop.f32.mrf.mxu0
        %v3687 = vadd.f32 0.0, %v3686
        %3688 = vmatmul.bf16.gmra.mxu0 %v2423
        %v3689 = vpop.f32.mrf.mxu0
        %v3690 = vadd.f32 0.0, %v3689
        %v3691 = vpop.f32.mrf.mxu0
        %v3692 = vadd.f32 0.0, %v3691
        %3693 = vmatmul.bf16.gmra.mxu0 %v2425
        %v3694 = vpop.f32.mrf.mxu0
        %v3695 = vadd.f32 0.0, %v3694
        %v3696 = vpop.f32.mrf.mxu0
        %v3697 = vadd.f32 0.0, %v3696
        %3698 = vmatmul.bf16.gmra.mxu0 %v2427
        %v3699 = vpop.f32.mrf.mxu0
        %v3700 = vadd.f32 0.0, %v3699
        %v3701 = vpop.f32.mrf.mxu0
        %v3702 = vadd.f32 0.0, %v3701
        %3703 = vdwg.mxu0
        %3704 = vmatpush.bf16.msra.mxu0 %v3062
        %3705 = vmatpush.bf16.msra.mxu0 %v3054
        %3706 = vmatpush.bf16.msra.mxu0 %v3046
        %3707 = vmatpush.bf16.msra.mxu0 %v3038
        %3708 = vmatpush.bf16.msra.mxu0 %v3030
        %3709 = vmatpush.bf16.msra.mxu0 %v3022
        %3710 = vmatpush.bf16.msra.mxu0 %v3014
        %3711 = vmatpush.bf16.msra.mxu0 %v3006
        %3712 = vmatmul.bf16.gmra.mxu0 %v2366
        %v3713 = vpop.f32.mrf.mxu0
        %v3714 = vadd.f32 %v3545, %v3713
        %v3715 = vpop.f32.mrf.mxu0
        %v3716 = vadd.f32 %v3547, %v3715
        %3717 = vmatmul.bf16.gmra.mxu0 %v2368
        %v3718 = vpop.f32.mrf.mxu0
        %v3719 = vadd.f32 %v3550, %v3718
        %v3720 = vpop.f32.mrf.mxu0
        %v3721 = vadd.f32 %v3552, %v3720
        %3722 = vmatmul.bf16.gmra.mxu0 %v2370
        %v3723 = vpop.f32.mrf.mxu0
        %v3724 = vadd.f32 %v3555, %v3723
        %v3725 = vpop.f32.mrf.mxu0
        %v3726 = vadd.f32 %v3557, %v3725
        %3727 = vmatmul.bf16.gmra.mxu0 %v2372
        %v3728 = vpop.f32.mrf.mxu0
        %v3729 = vadd.f32 %v3560, %v3728
        %v3730 = vpop.f32.mrf.mxu0
        %v3731 = vadd.f32 %v3562, %v3730
        %3732 = vmatmul.bf16.gmra.mxu0 %v2374
        %v3733 = vpop.f32.mrf.mxu0
        %v3734 = vadd.f32 %v3565, %v3733
        %v3735 = vpop.f32.mrf.mxu0
        %v3736 = vadd.f32 %v3567, %v3735
        %3737 = vmatmul.bf16.gmra.mxu0 %v2376
        %v3738 = vpop.f32.mrf.mxu0
        %v3739 = vadd.f32 %v3570, %v3738
        %v3740 = vpop.f32.mrf.mxu0
        %v3741 = vadd.f32 %v3572, %v3740
        %3742 = vmatmul.bf16.gmra.mxu0 %v2378
        %v3743 = vpop.f32.mrf.mxu0
        %v3744 = vadd.f32 %v3575, %v3743
        %v3745 = vpop.f32.mrf.mxu0
        %v3746 = vadd.f32 %v3577, %v3745
        %3747 = vmatmul.bf16.gmra.mxu0 %v2380
        %v3748 = vpop.f32.mrf.mxu0
        %v3749 = vadd.f32 %v3580, %v3748
        %v3750 = vpop.f32.mrf.mxu0
        %v3751 = vadd.f32 %v3582, %v3750
        %3752 = vmatmul.bf16.gmra.mxu0 %v2382
        %v3753 = vpop.f32.mrf.mxu0
        %v3754 = vadd.f32 %v3585, %v3753
        %v3755 = vpop.f32.mrf.mxu0
        %v3756 = vadd.f32 %v3587, %v3755
        %3757 = vmatmul.bf16.gmra.mxu0 %v2384
        %v3758 = vpop.f32.mrf.mxu0
        %v3759 = vadd.f32 %v3590, %v3758
        %v3760 = vpop.f32.mrf.mxu0
        %v3761 = vadd.f32 %v3592, %v3760
        %3762 = vmatmul.bf16.gmra.mxu0 %v2386
        %v3763 = vpop.f32.mrf.mxu0
        %v3764 = vadd.f32 %v3595, %v3763
        %v3765 = vpop.f32.mrf.mxu0
        %v3766 = vadd.f32 %v3597, %v3765
        %3767 = vmatmul.bf16.gmra.mxu0 %v2388
        %v3768 = vpop.f32.mrf.mxu0
        %v3769 = vadd.f32 %v3600, %v3768
        %v3770 = vpop.f32.mrf.mxu0
        %v3771 = vadd.f32 %v3602, %v3770
        %3772 = vmatmul.bf16.gmra.mxu0 %v2390
        %v3773 = vpop.f32.mrf.mxu0
        %v3774 = vadd.f32 %v3605, %v3773
        %v3775 = vpop.f32.mrf.mxu0
        %v3776 = vadd.f32 %v3607, %v3775
        %3777 = vmatmul.bf16.gmra.mxu0 %v2392
        %v3778 = vpop.f32.mrf.mxu0
        %v3779 = vadd.f32 %v3610, %v3778
        %v3780 = vpop.f32.mrf.mxu0
        %v3781 = vadd.f32 %v3612, %v3780
        %3782 = vmatmul.bf16.gmra.mxu0 %v2394
        %v3783 = vpop.f32.mrf.mxu0
        %v3784 = vadd.f32 %v3615, %v3783
        %v3785 = vpop.f32.mrf.mxu0
        %v3786 = vadd.f32 %v3617, %v3785
        %3787 = vmatmul.bf16.gmra.mxu0 %v2396
        %v3788 = vpop.f32.mrf.mxu0
        %v3789 = vadd.f32 %v3620, %v3788
        %v3790 = vpop.f32.mrf.mxu0
        %v3791 = vadd.f32 %v3622, %v3790
        %3792 = vmatmul.bf16.gmra.mxu0 %v2398
        %v3793 = vpop.f32.mrf.mxu0
        %v3794 = vadd.f32 %v3625, %v3793
        %v3795 = vpop.f32.mrf.mxu0
        %v3796 = vadd.f32 %v3627, %v3795
        %3797 = vmatmul.bf16.gmra.mxu0 %v2400
        %v3798 = vpop.f32.mrf.mxu0
        %v3799 = vadd.f32 %v3630, %v3798
        %v3800 = vpop.f32.mrf.mxu0
        %v3801 = vadd.f32 %v3632, %v3800
        %3802 = vmatmul.bf16.gmra.mxu0 %v2402
        %v3803 = vpop.f32.mrf.mxu0
        %v3804 = vadd.f32 %v3635, %v3803
        %v3805 = vpop.f32.mrf.mxu0
        %v3806 = vadd.f32 %v3637, %v3805
        %3807 = vmatmul.bf16.gmra.mxu0 %v2404
        %v3808 = vpop.f32.mrf.mxu0
        %v3809 = vadd.f32 %v3640, %v3808
        %v3810 = vpop.f32.mrf.mxu0
        %v3811 = vadd.f32 %v3642, %v3810
        %3812 = vmatmul.bf16.gmra.mxu0 %v2406
        %v3813 = vpop.f32.mrf.mxu0
        %v3814 = vadd.f32 %v3645, %v3813
        %v3815 = vpop.f32.mrf.mxu0
        %v3816 = vadd.f32 %v3647, %v3815
        %3817 = vmatmul.bf16.gmra.mxu0 %v2408
        %v3818 = vpop.f32.mrf.mxu0
        %v3819 = vadd.f32 %v3650, %v3818
        %v3820 = vpop.f32.mrf.mxu0
        %v3821 = vadd.f32 %v3652, %v3820
        %3822 = vmatmul.bf16.gmra.mxu0 %v2410
        %v3823 = vpop.f32.mrf.mxu0
        %v3824 = vadd.f32 %v3655, %v3823
        %v3825 = vpop.f32.mrf.mxu0
        %v3826 = vadd.f32 %v3657, %v3825
        %3827 = vmatmul.bf16.gmra.mxu0 %v2412
        %v3828 = vpop.f32.mrf.mxu0
        %v3829 = vadd.f32 %v3660, %v3828
        %v3830 = vpop.f32.mrf.mxu0
        %v3831 = vadd.f32 %v3662, %v3830
        %3832 = vmatmul.bf16.gmra.mxu0 %v2414
        %v3833 = vpop.f32.mrf.mxu0
        %v3834 = vadd.f32 %v3665, %v3833
        %v3835 = vpop.f32.mrf.mxu0
        %v3836 = vadd.f32 %v3667, %v3835
        %3837 = vmatmul.bf16.gmra.mxu0 %v2416
        %v3838 = vpop.f32.mrf.mxu0
        %v3839 = vadd.f32 %v3670, %v3838
        %v3840 = vpop.f32.mrf.mxu0
        %v3841 = vadd.f32 %v3672, %v3840
        %3842 = vmatmul.bf16.gmra.mxu0 %v2418
        %v3843 = vpop.f32.mrf.mxu0
        %v3844 = vadd.f32 %v3675, %v3843
        %v3845 = vpop.f32.mrf.mxu0
        %v3846 = vadd.f32 %v3677, %v3845
        %3847 = vmatmul.bf16.gmra.mxu0 %v2420
        %v3848 = vpop.f32.mrf.mxu0
        %v3849 = vadd.f32 %v3680, %v3848
        %v3850 = vpop.f32.mrf.mxu0
        %v3851 = vadd.f32 %v3682, %v3850
        %3852 = vmatmul.bf16.gmra.mxu0 %v2422
        %v3853 = vpop.f32.mrf.mxu0
        %v3854 = vadd.f32 %v3685, %v3853
        %v3855 = vpop.f32.mrf.mxu0
        %v3856 = vadd.f32 %v3687, %v3855
        %3857 = vmatmul.bf16.gmra.mxu0 %v2424
        %v3858 = vpop.f32.mrf.mxu0
        %v3859 = vadd.f32 %v3690, %v3858
        %v3860 = vpop.f32.mrf.mxu0
        %v3861 = vadd.f32 %v3692, %v3860
        %3862 = vmatmul.bf16.gmra.mxu0 %v2426
        %v3863 = vpop.f32.mrf.mxu0
        %v3864 = vadd.f32 %v3695, %v3863
        %v3865 = vpop.f32.mrf.mxu0
        %v3866 = vadd.f32 %v3697, %v3865
        %3867 = vmatmul.bf16.gmra.mxu0 %v2428
        %v3868 = vpop.f32.mrf.mxu0
        %v3869 = vadd.f32 %v3700, %v3868
        %v3870 = vpop.f32.mrf.mxu0
        %v3871 = vadd.f32 %v3702, %v3870
        %3872 = vdwg.mxu0
        %3873 = vmatpush.bf16.msra.mxu0 %v2999
        %3874 = vmatpush.bf16.msra.mxu0 %v2991
        %3875 = vmatpush.bf16.msra.mxu0 %v2983
        %3876 = vmatpush.bf16.msra.mxu0 %v2975
        %3877 = vmatpush.bf16.msra.mxu0 %v2967
        %3878 = vmatpush.bf16.msra.mxu0 %v2959
        %3879 = vmatpush.bf16.msra.mxu0 %v2951
        %3880 = vmatpush.bf16.msra.mxu0 %v2943
        %3881 = vmatmul.bf16.gmra.mxu0 %v2365
        %v3882 = vpop.f32.mrf.mxu0
        %v3883 = vadd.f32 0.0, %v3882
        %v3884 = vpop.f32.mrf.mxu0
        %v3885 = vadd.f32 0.0, %v3884
        %3886 = vmatmul.bf16.gmra.mxu0 %v2367
        %v3887 = vpop.f32.mrf.mxu0
        %v3888 = vadd.f32 0.0, %v3887
        %v3889 = vpop.f32.mrf.mxu0
        %v3890 = vadd.f32 0.0, %v3889
        %3891 = vmatmul.bf16.gmra.mxu0 %v2369
        %v3892 = vpop.f32.mrf.mxu0
        %v3893 = vadd.f32 0.0, %v3892
        %v3894 = vpop.f32.mrf.mxu0
        %v3895 = vadd.f32 0.0, %v3894
        %3896 = vmatmul.bf16.gmra.mxu0 %v2371
        %v3897 = vpop.f32.mrf.mxu0
        %v3898 = vadd.f32 0.0, %v3897
        %v3899 = vpop.f32.mrf.mxu0
        %v3900 = vadd.f32 0.0, %v3899
        %3901 = vmatmul.bf16.gmra.mxu0 %v2373
        %v3902 = vpop.f32.mrf.mxu0
        %v3903 = vadd.f32 0.0, %v3902
        %v3904 = vpop.f32.mrf.mxu0
        %v3905 = vadd.f32 0.0, %v3904
        %3906 = vmatmul.bf16.gmra.mxu0 %v2375
        %v3907 = vpop.f32.mrf.mxu0
        %v3908 = vadd.f32 0.0, %v3907
        %v3909 = vpop.f32.mrf.mxu0
        %v3910 = vadd.f32 0.0, %v3909
        %3911 = vmatmul.bf16.gmra.mxu0 %v2377
        %v3912 = vpop.f32.mrf.mxu0
        %v3913 = vadd.f32 0.0, %v3912
        %v3914 = vpop.f32.mrf.mxu0
        %v3915 = vadd.f32 0.0, %v3914
        %3916 = vmatmul.bf16.gmra.mxu0 %v2379
        %v3917 = vpop.f32.mrf.mxu0
        %v3918 = vadd.f32 0.0, %v3917
        %v3919 = vpop.f32.mrf.mxu0
        %v3920 = vadd.f32 0.0, %v3919
        %3921 = vmatmul.bf16.gmra.mxu0 %v2381
        %v3922 = vpop.f32.mrf.mxu0
        %v3923 = vadd.f32 0.0, %v3922
        %v3924 = vpop.f32.mrf.mxu0
        %v3925 = vadd.f32 0.0, %v3924
        %3926 = vmatmul.bf16.gmra.mxu0 %v2383
        %v3927 = vpop.f32.mrf.mxu0
        %v3928 = vadd.f32 0.0, %v3927
        %v3929 = vpop.f32.mrf.mxu0
        %v3930 = vadd.f32 0.0, %v3929
        %3931 = vmatmul.bf16.gmra.mxu0 %v2385
        %v3932 = vpop.f32.mrf.mxu0
        %v3933 = vadd.f32 0.0, %v3932
        %v3934 = vpop.f32.mrf.mxu0
        %v3935 = vadd.f32 0.0, %v3934
        %3936 = vmatmul.bf16.gmra.mxu0 %v2387
        %v3937 = vpop.f32.mrf.mxu0
        %v3938 = vadd.f32 0.0, %v3937
        %v3939 = vpop.f32.mrf.mxu0
        %v3940 = vadd.f32 0.0, %v3939
        %3941 = vmatmul.bf16.gmra.mxu0 %v2389
        %v3942 = vpop.f32.mrf.mxu0
        %v3943 = vadd.f32 0.0, %v3942
        %v3944 = vpop.f32.mrf.mxu0
        %v3945 = vadd.f32 0.0, %v3944
        %3946 = vmatmul.bf16.gmra.mxu0 %v2391
        %v3947 = vpop.f32.mrf.mxu0
        %v3948 = vadd.f32 0.0, %v3947
        %v3949 = vpop.f32.mrf.mxu0
        %v3950 = vadd.f32 0.0, %v3949
        %3951 = vmatmul.bf16.gmra.mxu0 %v2393
        %v3952 = vpop.f32.mrf.mxu0
        %v3953 = vadd.f32 0.0, %v3952
        %v3954 = vpop.f32.mrf.mxu0
        %v3955 = vadd.f32 0.0, %v3954
        %3956 = vmatmul.bf16.gmra.mxu0 %v2395
        %v3957 = vpop.f32.mrf.mxu0
        %v3958 = vadd.f32 0.0, %v3957
        %v3959 = vpop.f32.mrf.mxu0
        %v3960 = vadd.f32 0.0, %v3959
        %3961 = vmatmul.bf16.gmra.mxu0 %v2397
        %v3962 = vpop.f32.mrf.mxu0
        %v3963 = vadd.f32 0.0, %v3962
        %v3964 = vpop.f32.mrf.mxu0
        %v3965 = vadd.f32 0.0, %v3964
        %3966 = vmatmul.bf16.gmra.mxu0 %v2399
        %v3967 = vpop.f32.mrf.mxu0
        %v3968 = vadd.f32 0.0, %v3967
        %v3969 = vpop.f32.mrf.mxu0
        %v3970 = vadd.f32 0.0, %v3969
        %3971 = vmatmul.bf16.gmra.mxu0 %v2401
        %v3972 = vpop.f32.mrf.mxu0
        %v3973 = vadd.f32 0.0, %v3972
        %v3974 = vpop.f32.mrf.mxu0
        %v3975 = vadd.f32 0.0, %v3974
        %3976 = vmatmul.bf16.gmra.mxu0 %v2403
        %v3977 = vpop.f32.mrf.mxu0
        %v3978 = vadd.f32 0.0, %v3977
        %v3979 = vpop.f32.mrf.mxu0
        %v3980 = vadd.f32 0.0, %v3979
        %3981 = vmatmul.bf16.gmra.mxu0 %v2405
        %v3982 = vpop.f32.mrf.mxu0
        %v3983 = vadd.f32 0.0, %v3982
        %v3984 = vpop.f32.mrf.mxu0
        %v3985 = vadd.f32 0.0, %v3984
        %3986 = vmatmul.bf16.gmra.mxu0 %v2407
        %v3987 = vpop.f32.mrf.mxu0
        %v3988 = vadd.f32 0.0, %v3987
        %v3989 = vpop.f32.mrf.mxu0
        %v3990 = vadd.f32 0.0, %v3989
        %3991 = vmatmul.bf16.gmra.mxu0 %v2409
        %v3992 = vpop.f32.mrf.mxu0
        %v3993 = vadd.f32 0.0, %v3992
        %v3994 = vpop.f32.mrf.mxu0
        %v3995 = vadd.f32 0.0, %v3994
        %3996 = vmatmul.bf16.gmra.mxu0 %v2411
        %v3997 = vpop.f32.mrf.mxu0
        %v3998 = vadd.f32 0.0, %v3997
        %v3999 = vpop.f32.mrf.mxu0
        %v4000 = vadd.f32 0.0, %v3999
        %4001 = vmatmul.bf16.gmra.mxu0 %v2413
        %v4002 = vpop.f32.mrf.mxu0
        %v4003 = vadd.f32 0.0, %v4002
        %v4004 = vpop.f32.mrf.mxu0
        %v4005 = vadd.f32 0.0, %v4004
        %4006 = vmatmul.bf16.gmra.mxu0 %v2415
        %v4007 = vpop.f32.mrf.mxu0
        %v4008 = vadd.f32 0.0, %v4007
        %v4009 = vpop.f32.mrf.mxu0
        %v4010 = vadd.f32 0.0, %v4009
        %4011 = vmatmul.bf16.gmra.mxu0 %v2417
        %v4012 = vpop.f32.mrf.mxu0
        %v4013 = vadd.f32 0.0, %v4012
        %v4014 = vpop.f32.mrf.mxu0
        %v4015 = vadd.f32 0.0, %v4014
        %4016 = vmatmul.bf16.gmra.mxu0 %v2419
        %v4017 = vpop.f32.mrf.mxu0
        %v4018 = vadd.f32 0.0, %v4017
        %v4019 = vpop.f32.mrf.mxu0
        %v4020 = vadd.f32 0.0, %v4019
        %4021 = vmatmul.bf16.gmra.mxu0 %v2421
        %v4022 = vpop.f32.mrf.mxu0
        %v4023 = vadd.f32 0.0, %v4022
        %v4024 = vpop.f32.mrf.mxu0
        %v4025 = vadd.f32 0.0, %v4024
        %4026 = vmatmul.bf16.gmra.mxu0 %v2423
        %v4027 = vpop.f32.mrf.mxu0
        %v4028 = vadd.f32 0.0, %v4027
        %v4029 = vpop.f32.mrf.mxu0
        %v4030 = vadd.f32 0.0, %v4029
        %4031 = vmatmul.bf16.gmra.mxu0 %v2425
        %v4032 = vpop.f32.mrf.mxu0
        %v4033 = vadd.f32 0.0, %v4032
        %v4034 = vpop.f32.mrf.mxu0
        %v4035 = vadd.f32 0.0, %v4034
        %4036 = vmatmul.bf16.gmra.mxu0 %v2427
        %v4037 = vpop.f32.mrf.mxu0
        %v4038 = vadd.f32 0.0, %v4037
        %v4039 = vpop.f32.mrf.mxu0
        %v4040 = vadd.f32 0.0, %v4039
        %4041 = vdwg.mxu0
        %4042 = vmatpush.bf16.msra.mxu0 %v3063
        %4043 = vmatpush.bf16.msra.mxu0 %v3055
        %4044 = vmatpush.bf16.msra.mxu0 %v3047
        %4045 = vmatpush.bf16.msra.mxu0 %v3039
        %4046 = vmatpush.bf16.msra.mxu0 %v3031
        %4047 = vmatpush.bf16.msra.mxu0 %v3023
        %4048 = vmatpush.bf16.msra.mxu0 %v3015
        %4049 = vmatpush.bf16.msra.mxu0 %v3007
        %4050 = vmatmul.bf16.gmra.mxu0 %v2366
        %v4051 = vpop.f32.mrf.mxu0
        %v4052 = vadd.f32 %v3883, %v4051
        %v4053 = vpop.f32.mrf.mxu0
        %v4054 = vadd.f32 %v3885, %v4053
        %4055 = vmatmul.bf16.gmra.mxu0 %v2368
        %v4056 = vpop.f32.mrf.mxu0
        %v4057 = vadd.f32 %v3888, %v4056
        %v4058 = vpop.f32.mrf.mxu0
        %v4059 = vadd.f32 %v3890, %v4058
        %4060 = vmatmul.bf16.gmra.mxu0 %v2370
        %v4061 = vpop.f32.mrf.mxu0
        %v4062 = vadd.f32 %v3893, %v4061
        %v4063 = vpop.f32.mrf.mxu0
        %v4064 = vadd.f32 %v3895, %v4063
        %4065 = vmatmul.bf16.gmra.mxu0 %v2372
        %v4066 = vpop.f32.mrf.mxu0
        %v4067 = vadd.f32 %v3898, %v4066
        %v4068 = vpop.f32.mrf.mxu0
        %v4069 = vadd.f32 %v3900, %v4068
        %4070 = vmatmul.bf16.gmra.mxu0 %v2374
        %v4071 = vpop.f32.mrf.mxu0
        %v4072 = vadd.f32 %v3903, %v4071
        %v4073 = vpop.f32.mrf.mxu0
        %v4074 = vadd.f32 %v3905, %v4073
        %4075 = vmatmul.bf16.gmra.mxu0 %v2376
        %v4076 = vpop.f32.mrf.mxu0
        %v4077 = vadd.f32 %v3908, %v4076
        %v4078 = vpop.f32.mrf.mxu0
        %v4079 = vadd.f32 %v3910, %v4078
        %4080 = vmatmul.bf16.gmra.mxu0 %v2378
        %v4081 = vpop.f32.mrf.mxu0
        %v4082 = vadd.f32 %v3913, %v4081
        %v4083 = vpop.f32.mrf.mxu0
        %v4084 = vadd.f32 %v3915, %v4083
        %4085 = vmatmul.bf16.gmra.mxu0 %v2380
        %v4086 = vpop.f32.mrf.mxu0
        %v4087 = vadd.f32 %v3918, %v4086
        %v4088 = vpop.f32.mrf.mxu0
        %v4089 = vadd.f32 %v3920, %v4088
        %4090 = vmatmul.bf16.gmra.mxu0 %v2382
        %v4091 = vpop.f32.mrf.mxu0
        %v4092 = vadd.f32 %v3923, %v4091
        %v4093 = vpop.f32.mrf.mxu0
        %v4094 = vadd.f32 %v3925, %v4093
        %4095 = vmatmul.bf16.gmra.mxu0 %v2384
        %v4096 = vpop.f32.mrf.mxu0
        %v4097 = vadd.f32 %v3928, %v4096
        %v4098 = vpop.f32.mrf.mxu0
        %v4099 = vadd.f32 %v3930, %v4098
        %4100 = vmatmul.bf16.gmra.mxu0 %v2386
        %v4101 = vpop.f32.mrf.mxu0
        %v4102 = vadd.f32 %v3933, %v4101
        %v4103 = vpop.f32.mrf.mxu0
        %v4104 = vadd.f32 %v3935, %v4103
        %4105 = vmatmul.bf16.gmra.mxu0 %v2388
        %v4106 = vpop.f32.mrf.mxu0
        %v4107 = vadd.f32 %v3938, %v4106
        %v4108 = vpop.f32.mrf.mxu0
        %v4109 = vadd.f32 %v3940, %v4108
        %4110 = vmatmul.bf16.gmra.mxu0 %v2390
        %v4111 = vpop.f32.mrf.mxu0
        %v4112 = vadd.f32 %v3943, %v4111
        %v4113 = vpop.f32.mrf.mxu0
        %v4114 = vadd.f32 %v3945, %v4113
        %4115 = vmatmul.bf16.gmra.mxu0 %v2392
        %v4116 = vpop.f32.mrf.mxu0
        %v4117 = vadd.f32 %v3948, %v4116
        %v4118 = vpop.f32.mrf.mxu0
        %v4119 = vadd.f32 %v3950, %v4118
        %4120 = vmatmul.bf16.gmra.mxu0 %v2394
        %v4121 = vpop.f32.mrf.mxu0
        %v4122 = vadd.f32 %v3953, %v4121
        %v4123 = vpop.f32.mrf.mxu0
        %v4124 = vadd.f32 %v3955, %v4123
        %4125 = vmatmul.bf16.gmra.mxu0 %v2396
        %v4126 = vpop.f32.mrf.mxu0
        %v4127 = vadd.f32 %v3958, %v4126
        %v4128 = vpop.f32.mrf.mxu0
        %v4129 = vadd.f32 %v3960, %v4128
        %4130 = vmatmul.bf16.gmra.mxu0 %v2398
        %v4131 = vpop.f32.mrf.mxu0
        %v4132 = vadd.f32 %v3963, %v4131
        %v4133 = vpop.f32.mrf.mxu0
        %v4134 = vadd.f32 %v3965, %v4133
        %4135 = vmatmul.bf16.gmra.mxu0 %v2400
        %v4136 = vpop.f32.mrf.mxu0
        %v4137 = vadd.f32 %v3968, %v4136
        %v4138 = vpop.f32.mrf.mxu0
        %v4139 = vadd.f32 %v3970, %v4138
        %4140 = vmatmul.bf16.gmra.mxu0 %v2402
        %v4141 = vpop.f32.mrf.mxu0
        %v4142 = vadd.f32 %v3973, %v4141
        %v4143 = vpop.f32.mrf.mxu0
        %v4144 = vadd.f32 %v3975, %v4143
        %4145 = vmatmul.bf16.gmra.mxu0 %v2404
        %v4146 = vpop.f32.mrf.mxu0
        %v4147 = vadd.f32 %v3978, %v4146
        %v4148 = vpop.f32.mrf.mxu0
        %v4149 = vadd.f32 %v3980, %v4148
        %4150 = vmatmul.bf16.gmra.mxu0 %v2406
        %v4151 = vpop.f32.mrf.mxu0
        %v4152 = vadd.f32 %v3983, %v4151
        %v4153 = vpop.f32.mrf.mxu0
        %v4154 = vadd.f32 %v3985, %v4153
        %4155 = vmatmul.bf16.gmra.mxu0 %v2408
        %v4156 = vpop.f32.mrf.mxu0
        %v4157 = vadd.f32 %v3988, %v4156
        %v4158 = vpop.f32.mrf.mxu0
        %v4159 = vadd.f32 %v3990, %v4158
        %4160 = vmatmul.bf16.gmra.mxu0 %v2410
        %v4161 = vpop.f32.mrf.mxu0
        %v4162 = vadd.f32 %v3993, %v4161
        %v4163 = vpop.f32.mrf.mxu0
        %v4164 = vadd.f32 %v3995, %v4163
        %4165 = vmatmul.bf16.gmra.mxu0 %v2412
        %v4166 = vpop.f32.mrf.mxu0
        %v4167 = vadd.f32 %v3998, %v4166
        %v4168 = vpop.f32.mrf.mxu0
        %v4169 = vadd.f32 %v4000, %v4168
        %4170 = vmatmul.bf16.gmra.mxu0 %v2414
        %v4171 = vpop.f32.mrf.mxu0
        %v4172 = vadd.f32 %v4003, %v4171
        %v4173 = vpop.f32.mrf.mxu0
        %v4174 = vadd.f32 %v4005, %v4173
        %4175 = vmatmul.bf16.gmra.mxu0 %v2416
        %v4176 = vpop.f32.mrf.mxu0
        %v4177 = vadd.f32 %v4008, %v4176
        %v4178 = vpop.f32.mrf.mxu0
        %v4179 = vadd.f32 %v4010, %v4178
        %4180 = vmatmul.bf16.gmra.mxu0 %v2418
        %v4181 = vpop.f32.mrf.mxu0
        %v4182 = vadd.f32 %v4013, %v4181
        %v4183 = vpop.f32.mrf.mxu0
        %v4184 = vadd.f32 %v4015, %v4183
        %4185 = vmatmul.bf16.gmra.mxu0 %v2420
        %v4186 = vpop.f32.mrf.mxu0
        %v4187 = vadd.f32 %v4018, %v4186
        %v4188 = vpop.f32.mrf.mxu0
        %v4189 = vadd.f32 %v4020, %v4188
        %4190 = vmatmul.bf16.gmra.mxu0 %v2422
        %v4191 = vpop.f32.mrf.mxu0
        %v4192 = vadd.f32 %v4023, %v4191
        %v4193 = vpop.f32.mrf.mxu0
        %v4194 = vadd.f32 %v4025, %v4193
        %4195 = vmatmul.bf16.gmra.mxu0 %v2424
        %v4196 = vpop.f32.mrf.mxu0
        %v4197 = vadd.f32 %v4028, %v4196
        %v4198 = vpop.f32.mrf.mxu0
        %v4199 = vadd.f32 %v4030, %v4198
        %4200 = vmatmul.bf16.gmra.mxu0 %v2426
        %v4201 = vpop.f32.mrf.mxu0
        %v4202 = vadd.f32 %v4033, %v4201
        %v4203 = vpop.f32.mrf.mxu0
        %v4204 = vadd.f32 %v4035, %v4203
        %4205 = vmatmul.bf16.gmra.mxu0 %v2428
        %v4206 = vpop.f32.mrf.mxu0
        %v4207 = vadd.f32 %v4038, %v4206
        %v4208 = vpop.f32.mrf.mxu0
        %v4209 = vadd.f32 %v4040, %v4208
        %4210 = vdwg.mxu0
        %4211 = vmatpush.bf16.msra.mxu0 %v3000
        %4212 = vmatpush.bf16.msra.mxu0 %v2992
        %4213 = vmatpush.bf16.msra.mxu0 %v2984
        %4214 = vmatpush.bf16.msra.mxu0 %v2976
        %4215 = vmatpush.bf16.msra.mxu0 %v2968
        %4216 = vmatpush.bf16.msra.mxu0 %v2960
        %4217 = vmatpush.bf16.msra.mxu0 %v2952
        %4218 = vmatpush.bf16.msra.mxu0 %v2944
        %4219 = vmatmul.bf16.gmra.mxu0 %v2365
        %v4220 = vpop.f32.mrf.mxu0
        %v4221 = vadd.f32 0.0, %v4220
        %v4222 = vpop.f32.mrf.mxu0
        %v4223 = vadd.f32 0.0, %v4222
        %4224 = vmatmul.bf16.gmra.mxu0 %v2367
        %v4225 = vpop.f32.mrf.mxu0
        %v4226 = vadd.f32 0.0, %v4225
        %v4227 = vpop.f32.mrf.mxu0
        %v4228 = vadd.f32 0.0, %v4227
        %4229 = vmatmul.bf16.gmra.mxu0 %v2369
        %v4230 = vpop.f32.mrf.mxu0
        %v4231 = vadd.f32 0.0, %v4230
        %v4232 = vpop.f32.mrf.mxu0
        %v4233 = vadd.f32 0.0, %v4232
        %4234 = vmatmul.bf16.gmra.mxu0 %v2371
        %v4235 = vpop.f32.mrf.mxu0
        %v4236 = vadd.f32 0.0, %v4235
        %v4237 = vpop.f32.mrf.mxu0
        %v4238 = vadd.f32 0.0, %v4237
        %4239 = vmatmul.bf16.gmra.mxu0 %v2373
        %v4240 = vpop.f32.mrf.mxu0
        %v4241 = vadd.f32 0.0, %v4240
        %v4242 = vpop.f32.mrf.mxu0
        %v4243 = vadd.f32 0.0, %v4242
        %4244 = vmatmul.bf16.gmra.mxu0 %v2375
        %v4245 = vpop.f32.mrf.mxu0
        %v4246 = vadd.f32 0.0, %v4245
        %v4247 = vpop.f32.mrf.mxu0
        %v4248 = vadd.f32 0.0, %v4247
        %4249 = vmatmul.bf16.gmra.mxu0 %v2377
        %v4250 = vpop.f32.mrf.mxu0
        %v4251 = vadd.f32 0.0, %v4250
        %v4252 = vpop.f32.mrf.mxu0
        %v4253 = vadd.f32 0.0, %v4252
        %4254 = vmatmul.bf16.gmra.mxu0 %v2379
        %v4255 = vpop.f32.mrf.mxu0
        %v4256 = vadd.f32 0.0, %v4255
        %v4257 = vpop.f32.mrf.mxu0
        %v4258 = vadd.f32 0.0, %v4257
        %4259 = vmatmul.bf16.gmra.mxu0 %v2381
        %v4260 = vpop.f32.mrf.mxu0
        %v4261 = vadd.f32 0.0, %v4260
        %v4262 = vpop.f32.mrf.mxu0
        %v4263 = vadd.f32 0.0, %v4262
        %4264 = vmatmul.bf16.gmra.mxu0 %v2383
        %v4265 = vpop.f32.mrf.mxu0
        %v4266 = vadd.f32 0.0, %v4265
        %v4267 = vpop.f32.mrf.mxu0
        %v4268 = vadd.f32 0.0, %v4267
        %4269 = vmatmul.bf16.gmra.mxu0 %v2385
        %v4270 = vpop.f32.mrf.mxu0
        %v4271 = vadd.f32 0.0, %v4270
        %v4272 = vpop.f32.mrf.mxu0
        %v4273 = vadd.f32 0.0, %v4272
        %4274 = vmatmul.bf16.gmra.mxu0 %v2387
        %v4275 = vpop.f32.mrf.mxu0
        %v4276 = vadd.f32 0.0, %v4275
        %v4277 = vpop.f32.mrf.mxu0
        %v4278 = vadd.f32 0.0, %v4277
        %4279 = vmatmul.bf16.gmra.mxu0 %v2389
        %v4280 = vpop.f32.mrf.mxu0
        %v4281 = vadd.f32 0.0, %v4280
        %v4282 = vpop.f32.mrf.mxu0
        %v4283 = vadd.f32 0.0, %v4282
        %4284 = vmatmul.bf16.gmra.mxu0 %v2391
        %v4285 = vpop.f32.mrf.mxu0
        %v4286 = vadd.f32 0.0, %v4285
        %v4287 = vpop.f32.mrf.mxu0
        %v4288 = vadd.f32 0.0, %v4287
        %4289 = vmatmul.bf16.gmra.mxu0 %v2393
        %v4290 = vpop.f32.mrf.mxu0
        %v4291 = vadd.f32 0.0, %v4290
        %v4292 = vpop.f32.mrf.mxu0
        %v4293 = vadd.f32 0.0, %v4292
        %4294 = vmatmul.bf16.gmra.mxu0 %v2395
        %v4295 = vpop.f32.mrf.mxu0
        %v4296 = vadd.f32 0.0, %v4295
        %v4297 = vpop.f32.mrf.mxu0
        %v4298 = vadd.f32 0.0, %v4297
        %4299 = vmatmul.bf16.gmra.mxu0 %v2397
        %v4300 = vpop.f32.mrf.mxu0
        %v4301 = vadd.f32 0.0, %v4300
        %v4302 = vpop.f32.mrf.mxu0
        %v4303 = vadd.f32 0.0, %v4302
        %4304 = vmatmul.bf16.gmra.mxu0 %v2399
        %v4305 = vpop.f32.mrf.mxu0
        %v4306 = vadd.f32 0.0, %v4305
        %v4307 = vpop.f32.mrf.mxu0
        %v4308 = vadd.f32 0.0, %v4307
        %4309 = vmatmul.bf16.gmra.mxu0 %v2401
        %v4310 = vpop.f32.mrf.mxu0
        %v4311 = vadd.f32 0.0, %v4310
        %v4312 = vpop.f32.mrf.mxu0
        %v4313 = vadd.f32 0.0, %v4312
        %4314 = vmatmul.bf16.gmra.mxu0 %v2403
        %v4315 = vpop.f32.mrf.mxu0
        %v4316 = vadd.f32 0.0, %v4315
        %v4317 = vpop.f32.mrf.mxu0
        %v4318 = vadd.f32 0.0, %v4317
        %4319 = vmatmul.bf16.gmra.mxu0 %v2405
        %v4320 = vpop.f32.mrf.mxu0
        %v4321 = vadd.f32 0.0, %v4320
        %v4322 = vpop.f32.mrf.mxu0
        %v4323 = vadd.f32 0.0, %v4322
        %4324 = vmatmul.bf16.gmra.mxu0 %v2407
        %v4325 = vpop.f32.mrf.mxu0
        %v4326 = vadd.f32 0.0, %v4325
        %v4327 = vpop.f32.mrf.mxu0
        %v4328 = vadd.f32 0.0, %v4327
        %4329 = vmatmul.bf16.gmra.mxu0 %v2409
        %v4330 = vpop.f32.mrf.mxu0
        %v4331 = vadd.f32 0.0, %v4330
        %v4332 = vpop.f32.mrf.mxu0
        %v4333 = vadd.f32 0.0, %v4332
        %4334 = vmatmul.bf16.gmra.mxu0 %v2411
        %v4335 = vpop.f32.mrf.mxu0
        %v4336 = vadd.f32 0.0, %v4335
        %v4337 = vpop.f32.mrf.mxu0
        %v4338 = vadd.f32 0.0, %v4337
        %4339 = vmatmul.bf16.gmra.mxu0 %v2413
        %v4340 = vpop.f32.mrf.mxu0
        %v4341 = vadd.f32 0.0, %v4340
        %v4342 = vpop.f32.mrf.mxu0
        %v4343 = vadd.f32 0.0, %v4342
        %4344 = vmatmul.bf16.gmra.mxu0 %v2415
        %v4345 = vpop.f32.mrf.mxu0
        %v4346 = vadd.f32 0.0, %v4345
        %v4347 = vpop.f32.mrf.mxu0
        %v4348 = vadd.f32 0.0, %v4347
        %4349 = vmatmul.bf16.gmra.mxu0 %v2417
        %v4350 = vpop.f32.mrf.mxu0
        %v4351 = vadd.f32 0.0, %v4350
        %v4352 = vpop.f32.mrf.mxu0
        %v4353 = vadd.f32 0.0, %v4352
        %4354 = vmatmul.bf16.gmra.mxu0 %v2419
        %v4355 = vpop.f32.mrf.mxu0
        %v4356 = vadd.f32 0.0, %v4355
        %v4357 = vpop.f32.mrf.mxu0
        %v4358 = vadd.f32 0.0, %v4357
        %4359 = vmatmul.bf16.gmra.mxu0 %v2421
        %v4360 = vpop.f32.mrf.mxu0
        %v4361 = vadd.f32 0.0, %v4360
        %v4362 = vpop.f32.mrf.mxu0
        %v4363 = vadd.f32 0.0, %v4362
        %4364 = vmatmul.bf16.gmra.mxu0 %v2423
        %v4365 = vpop.f32.mrf.mxu0
        %v4366 = vadd.f32 0.0, %v4365
        %v4367 = vpop.f32.mrf.mxu0
        %v4368 = vadd.f32 0.0, %v4367
        %4369 = vmatmul.bf16.gmra.mxu0 %v2425
        %v4370 = vpop.f32.mrf.mxu0
        %v4371 = vadd.f32 0.0, %v4370
        %v4372 = vpop.f32.mrf.mxu0
        %v4373 = vadd.f32 0.0, %v4372
        %4374 = vmatmul.bf16.gmra.mxu0 %v2427
        %v4375 = vpop.f32.mrf.mxu0
        %v4376 = vadd.f32 0.0, %v4375
        %v4377 = vpop.f32.mrf.mxu0
        %v4378 = vadd.f32 0.0, %v4377
        %4379 = vdwg.mxu0
        %4380 = vmatpush.bf16.msra.mxu0 %v3064
        %4381 = vmatpush.bf16.msra.mxu0 %v3056
        %4382 = vmatpush.bf16.msra.mxu0 %v3048
        %4383 = vmatpush.bf16.msra.mxu0 %v3040
        %4384 = vmatpush.bf16.msra.mxu0 %v3032
        %4385 = vmatpush.bf16.msra.mxu0 %v3024
        %4386 = vmatpush.bf16.msra.mxu0 %v3016
        %4387 = vmatpush.bf16.msra.mxu0 %v3008
        %4388 = vmatmul.bf16.gmra.mxu0 %v2366
        %v4389 = vpop.f32.mrf.mxu0
        %v4390 = vadd.f32 %v4221, %v4389
        %v4391 = vpop.f32.mrf.mxu0
        %v4392 = vadd.f32 %v4223, %v4391
        %4393 = vmatmul.bf16.gmra.mxu0 %v2368
        %v4394 = vpop.f32.mrf.mxu0
        %v4395 = vadd.f32 %v4226, %v4394
        %v4396 = vpop.f32.mrf.mxu0
        %v4397 = vadd.f32 %v4228, %v4396
        %4398 = vmatmul.bf16.gmra.mxu0 %v2370
        %v4399 = vpop.f32.mrf.mxu0
        %v4400 = vadd.f32 %v4231, %v4399
        %v4401 = vpop.f32.mrf.mxu0
        %v4402 = vadd.f32 %v4233, %v4401
        %4403 = vmatmul.bf16.gmra.mxu0 %v2372
        %v4404 = vpop.f32.mrf.mxu0
        %v4405 = vadd.f32 %v4236, %v4404
        %v4406 = vpop.f32.mrf.mxu0
        %v4407 = vadd.f32 %v4238, %v4406
        %4408 = vmatmul.bf16.gmra.mxu0 %v2374
        %v4409 = vpop.f32.mrf.mxu0
        %v4410 = vadd.f32 %v4241, %v4409
        %v4411 = vpop.f32.mrf.mxu0
        %v4412 = vadd.f32 %v4243, %v4411
        %4413 = vmatmul.bf16.gmra.mxu0 %v2376
        %v4414 = vpop.f32.mrf.mxu0
        %v4415 = vadd.f32 %v4246, %v4414
        %v4416 = vpop.f32.mrf.mxu0
        %v4417 = vadd.f32 %v4248, %v4416
        %4418 = vmatmul.bf16.gmra.mxu0 %v2378
        %v4419 = vpop.f32.mrf.mxu0
        %v4420 = vadd.f32 %v4251, %v4419
        %v4421 = vpop.f32.mrf.mxu0
        %v4422 = vadd.f32 %v4253, %v4421
        %4423 = vmatmul.bf16.gmra.mxu0 %v2380
        %v4424 = vpop.f32.mrf.mxu0
        %v4425 = vadd.f32 %v4256, %v4424
        %v4426 = vpop.f32.mrf.mxu0
        %v4427 = vadd.f32 %v4258, %v4426
        %4428 = vmatmul.bf16.gmra.mxu0 %v2382
        %v4429 = vpop.f32.mrf.mxu0
        %v4430 = vadd.f32 %v4261, %v4429
        %v4431 = vpop.f32.mrf.mxu0
        %v4432 = vadd.f32 %v4263, %v4431
        %4433 = vmatmul.bf16.gmra.mxu0 %v2384
        %v4434 = vpop.f32.mrf.mxu0
        %v4435 = vadd.f32 %v4266, %v4434
        %v4436 = vpop.f32.mrf.mxu0
        %v4437 = vadd.f32 %v4268, %v4436
        %4438 = vmatmul.bf16.gmra.mxu0 %v2386
        %v4439 = vpop.f32.mrf.mxu0
        %v4440 = vadd.f32 %v4271, %v4439
        %v4441 = vpop.f32.mrf.mxu0
        %v4442 = vadd.f32 %v4273, %v4441
        %4443 = vmatmul.bf16.gmra.mxu0 %v2388
        %v4444 = vpop.f32.mrf.mxu0
        %v4445 = vadd.f32 %v4276, %v4444
        %v4446 = vpop.f32.mrf.mxu0
        %v4447 = vadd.f32 %v4278, %v4446
        %4448 = vmatmul.bf16.gmra.mxu0 %v2390
        %v4449 = vpop.f32.mrf.mxu0
        %v4450 = vadd.f32 %v4281, %v4449
        %v4451 = vpop.f32.mrf.mxu0
        %v4452 = vadd.f32 %v4283, %v4451
        %4453 = vmatmul.bf16.gmra.mxu0 %v2392
        %v4454 = vpop.f32.mrf.mxu0
        %v4455 = vadd.f32 %v4286, %v4454
        %v4456 = vpop.f32.mrf.mxu0
        %v4457 = vadd.f32 %v4288, %v4456
        %4458 = vmatmul.bf16.gmra.mxu0 %v2394
        %v4459 = vpop.f32.mrf.mxu0
        %v4460 = vadd.f32 %v4291, %v4459
        %v4461 = vpop.f32.mrf.mxu0
        %v4462 = vadd.f32 %v4293, %v4461
        %4463 = vmatmul.bf16.gmra.mxu0 %v2396
        %v4464 = vpop.f32.mrf.mxu0
        %v4465 = vadd.f32 %v4296, %v4464
        %v4466 = vpop.f32.mrf.mxu0
        %v4467 = vadd.f32 %v4298, %v4466
        %4468 = vmatmul.bf16.gmra.mxu0 %v2398
        %v4469 = vpop.f32.mrf.mxu0
        %v4470 = vadd.f32 %v4301, %v4469
        %v4471 = vpop.f32.mrf.mxu0
        %v4472 = vadd.f32 %v4303, %v4471
        %4473 = vmatmul.bf16.gmra.mxu0 %v2400
        %v4474 = vpop.f32.mrf.mxu0
        %v4475 = vadd.f32 %v4306, %v4474
        %v4476 = vpop.f32.mrf.mxu0
        %v4477 = vadd.f32 %v4308, %v4476
        %4478 = vmatmul.bf16.gmra.mxu0 %v2402
        %v4479 = vpop.f32.mrf.mxu0
        %v4480 = vadd.f32 %v4311, %v4479
        %v4481 = vpop.f32.mrf.mxu0
        %v4482 = vadd.f32 %v4313, %v4481
        %4483 = vmatmul.bf16.gmra.mxu0 %v2404
        %v4484 = vpop.f32.mrf.mxu0
        %v4485 = vadd.f32 %v4316, %v4484
        %v4486 = vpop.f32.mrf.mxu0
        %v4487 = vadd.f32 %v4318, %v4486
        %4488 = vmatmul.bf16.gmra.mxu0 %v2406
        %v4489 = vpop.f32.mrf.mxu0
        %v4490 = vadd.f32 %v4321, %v4489
        %v4491 = vpop.f32.mrf.mxu0
        %v4492 = vadd.f32 %v4323, %v4491
        %4493 = vmatmul.bf16.gmra.mxu0 %v2408
        %v4494 = vpop.f32.mrf.mxu0
        %v4495 = vadd.f32 %v4326, %v4494
        %v4496 = vpop.f32.mrf.mxu0
        %v4497 = vadd.f32 %v4328, %v4496
        %4498 = vmatmul.bf16.gmra.mxu0 %v2410
        %v4499 = vpop.f32.mrf.mxu0
        %v4500 = vadd.f32 %v4331, %v4499
        %v4501 = vpop.f32.mrf.mxu0
        %v4502 = vadd.f32 %v4333, %v4501
        %4503 = vmatmul.bf16.gmra.mxu0 %v2412
        %v4504 = vpop.f32.mrf.mxu0
        %v4505 = vadd.f32 %v4336, %v4504
        %v4506 = vpop.f32.mrf.mxu0
        %v4507 = vadd.f32 %v4338, %v4506
        %4508 = vmatmul.bf16.gmra.mxu0 %v2414
        %v4509 = vpop.f32.mrf.mxu0
        %v4510 = vadd.f32 %v4341, %v4509
        %v4511 = vpop.f32.mrf.mxu0
        %v4512 = vadd.f32 %v4343, %v4511
        %4513 = vmatmul.bf16.gmra.mxu0 %v2416
        %v4514 = vpop.f32.mrf.mxu0
        %v4515 = vadd.f32 %v4346, %v4514
        %v4516 = vpop.f32.mrf.mxu0
        %v4517 = vadd.f32 %v4348, %v4516
        %4518 = vmatmul.bf16.gmra.mxu0 %v2418
        %v4519 = vpop.f32.mrf.mxu0
        %v4520 = vadd.f32 %v4351, %v4519
        %v4521 = vpop.f32.mrf.mxu0
        %v4522 = vadd.f32 %v4353, %v4521
        %4523 = vmatmul.bf16.gmra.mxu0 %v2420
        %v4524 = vpop.f32.mrf.mxu0
        %v4525 = vadd.f32 %v4356, %v4524
        %v4526 = vpop.f32.mrf.mxu0
        %v4527 = vadd.f32 %v4358, %v4526
        %4528 = vmatmul.bf16.gmra.mxu0 %v2422
        %v4529 = vpop.f32.mrf.mxu0
        %v4530 = vadd.f32 %v4361, %v4529
        %v4531 = vpop.f32.mrf.mxu0
        %v4532 = vadd.f32 %v4363, %v4531
        %4533 = vmatmul.bf16.gmra.mxu0 %v2424
        %v4534 = vpop.f32.mrf.mxu0
        %v4535 = vadd.f32 %v4366, %v4534
        %v4536 = vpop.f32.mrf.mxu0
        %v4537 = vadd.f32 %v4368, %v4536
        %4538 = vmatmul.bf16.gmra.mxu0 %v2426
        %v4539 = vpop.f32.mrf.mxu0
        %v4540 = vadd.f32 %v4371, %v4539
        %v4541 = vpop.f32.mrf.mxu0
        %v4542 = vadd.f32 %v4373, %v4541
        %4543 = vmatmul.bf16.gmra.mxu0 %v2428
        %v4544 = vpop.f32.mrf.mxu0
        %v4545 = vadd.f32 %v4376, %v4544
        %v4546 = vpop.f32.mrf.mxu0
        %v4547 = vadd.f32 %v4378, %v4546
        %4548 = vdwg.mxu0
        %4549 = vmatpush.bf16.msra.mxu0 %v3001
        %4550 = vmatpush.bf16.msra.mxu0 %v2993
        %4551 = vmatpush.bf16.msra.mxu0 %v2985
        %4552 = vmatpush.bf16.msra.mxu0 %v2977
        %4553 = vmatpush.bf16.msra.mxu0 %v2969
        %4554 = vmatpush.bf16.msra.mxu0 %v2961
        %4555 = vmatpush.bf16.msra.mxu0 %v2953
        %4556 = vmatpush.bf16.msra.mxu0 %v2945
        %4557 = vmatmul.bf16.gmra.mxu0 %v2365
        %v4558 = vpop.f32.mrf.mxu0
        %v4559 = vadd.f32 0.0, %v4558
        %v4560 = vpop.f32.mrf.mxu0
        %v4561 = vadd.f32 0.0, %v4560
        %4562 = vmatmul.bf16.gmra.mxu0 %v2367
        %v4563 = vpop.f32.mrf.mxu0
        %v4564 = vadd.f32 0.0, %v4563
        %v4565 = vpop.f32.mrf.mxu0
        %v4566 = vadd.f32 0.0, %v4565
        %4567 = vmatmul.bf16.gmra.mxu0 %v2369
        %v4568 = vpop.f32.mrf.mxu0
        %v4569 = vadd.f32 0.0, %v4568
        %v4570 = vpop.f32.mrf.mxu0
        %v4571 = vadd.f32 0.0, %v4570
        %4572 = vmatmul.bf16.gmra.mxu0 %v2371
        %v4573 = vpop.f32.mrf.mxu0
        %v4574 = vadd.f32 0.0, %v4573
        %v4575 = vpop.f32.mrf.mxu0
        %v4576 = vadd.f32 0.0, %v4575
        %4577 = vmatmul.bf16.gmra.mxu0 %v2373
        %v4578 = vpop.f32.mrf.mxu0
        %v4579 = vadd.f32 0.0, %v4578
        %v4580 = vpop.f32.mrf.mxu0
        %v4581 = vadd.f32 0.0, %v4580
        %4582 = vmatmul.bf16.gmra.mxu0 %v2375
        %v4583 = vpop.f32.mrf.mxu0
        %v4584 = vadd.f32 0.0, %v4583
        %v4585 = vpop.f32.mrf.mxu0
        %v4586 = vadd.f32 0.0, %v4585
        %4587 = vmatmul.bf16.gmra.mxu0 %v2377
        %v4588 = vpop.f32.mrf.mxu0
        %v4589 = vadd.f32 0.0, %v4588
        %v4590 = vpop.f32.mrf.mxu0
        %v4591 = vadd.f32 0.0, %v4590
        %4592 = vmatmul.bf16.gmra.mxu0 %v2379
        %v4593 = vpop.f32.mrf.mxu0
        %v4594 = vadd.f32 0.0, %v4593
        %v4595 = vpop.f32.mrf.mxu0
        %v4596 = vadd.f32 0.0, %v4595
        %4597 = vmatmul.bf16.gmra.mxu0 %v2381
        %v4598 = vpop.f32.mrf.mxu0
        %v4599 = vadd.f32 0.0, %v4598
        %v4600 = vpop.f32.mrf.mxu0
        %v4601 = vadd.f32 0.0, %v4600
        %4602 = vmatmul.bf16.gmra.mxu0 %v2383
        %v4603 = vpop.f32.mrf.mxu0
        %v4604 = vadd.f32 0.0, %v4603
        %v4605 = vpop.f32.mrf.mxu0
        %v4606 = vadd.f32 0.0, %v4605
        %4607 = vmatmul.bf16.gmra.mxu0 %v2385
        %v4608 = vpop.f32.mrf.mxu0
        %v4609 = vadd.f32 0.0, %v4608
        %v4610 = vpop.f32.mrf.mxu0
        %v4611 = vadd.f32 0.0, %v4610
        %4612 = vmatmul.bf16.gmra.mxu0 %v2387
        %v4613 = vpop.f32.mrf.mxu0
        %v4614 = vadd.f32 0.0, %v4613
        %v4615 = vpop.f32.mrf.mxu0
        %v4616 = vadd.f32 0.0, %v4615
        %4617 = vmatmul.bf16.gmra.mxu0 %v2389
        %v4618 = vpop.f32.mrf.mxu0
        %v4619 = vadd.f32 0.0, %v4618
        %v4620 = vpop.f32.mrf.mxu0
        %v4621 = vadd.f32 0.0, %v4620
        %4622 = vmatmul.bf16.gmra.mxu0 %v2391
        %v4623 = vpop.f32.mrf.mxu0
        %v4624 = vadd.f32 0.0, %v4623
        %v4625 = vpop.f32.mrf.mxu0
        %v4626 = vadd.f32 0.0, %v4625
        %4627 = vmatmul.bf16.gmra.mxu0 %v2393
        %v4628 = vpop.f32.mrf.mxu0
        %v4629 = vadd.f32 0.0, %v4628
        %v4630 = vpop.f32.mrf.mxu0
        %v4631 = vadd.f32 0.0, %v4630
        %4632 = vmatmul.bf16.gmra.mxu0 %v2395
        %v4633 = vpop.f32.mrf.mxu0
        %v4634 = vadd.f32 0.0, %v4633
        %v4635 = vpop.f32.mrf.mxu0
        %v4636 = vadd.f32 0.0, %v4635
        %4637 = vmatmul.bf16.gmra.mxu0 %v2397
        %v4638 = vpop.f32.mrf.mxu0
        %v4639 = vadd.f32 0.0, %v4638
        %v4640 = vpop.f32.mrf.mxu0
        %v4641 = vadd.f32 0.0, %v4640
        %4642 = vmatmul.bf16.gmra.mxu0 %v2399
        %v4643 = vpop.f32.mrf.mxu0
        %v4644 = vadd.f32 0.0, %v4643
        %v4645 = vpop.f32.mrf.mxu0
        %v4646 = vadd.f32 0.0, %v4645
        %4647 = vmatmul.bf16.gmra.mxu0 %v2401
        %v4648 = vpop.f32.mrf.mxu0
        %v4649 = vadd.f32 0.0, %v4648
        %v4650 = vpop.f32.mrf.mxu0
        %v4651 = vadd.f32 0.0, %v4650
        %4652 = vmatmul.bf16.gmra.mxu0 %v2403
        %v4653 = vpop.f32.mrf.mxu0
        %v4654 = vadd.f32 0.0, %v4653
        %v4655 = vpop.f32.mrf.mxu0
        %v4656 = vadd.f32 0.0, %v4655
        %4657 = vmatmul.bf16.gmra.mxu0 %v2405
        %v4658 = vpop.f32.mrf.mxu0
        %v4659 = vadd.f32 0.0, %v4658
        %v4660 = vpop.f32.mrf.mxu0
        %v4661 = vadd.f32 0.0, %v4660
        %4662 = vmatmul.bf16.gmra.mxu0 %v2407
        %v4663 = vpop.f32.mrf.mxu0
        %v4664 = vadd.f32 0.0, %v4663
        %v4665 = vpop.f32.mrf.mxu0
        %v4666 = vadd.f32 0.0, %v4665
        %4667 = vmatmul.bf16.gmra.mxu0 %v2409
        %v4668 = vpop.f32.mrf.mxu0
        %v4669 = vadd.f32 0.0, %v4668
        %v4670 = vpop.f32.mrf.mxu0
        %v4671 = vadd.f32 0.0, %v4670
        %4672 = vmatmul.bf16.gmra.mxu0 %v2411
        %v4673 = vpop.f32.mrf.mxu0
        %v4674 = vadd.f32 0.0, %v4673
        %v4675 = vpop.f32.mrf.mxu0
        %v4676 = vadd.f32 0.0, %v4675
        %4677 = vmatmul.bf16.gmra.mxu0 %v2413
        %v4678 = vpop.f32.mrf.mxu0
        %v4679 = vadd.f32 0.0, %v4678
        %v4680 = vpop.f32.mrf.mxu0
        %v4681 = vadd.f32 0.0, %v4680
        %4682 = vmatmul.bf16.gmra.mxu0 %v2415
        %v4683 = vpop.f32.mrf.mxu0
        %v4684 = vadd.f32 0.0, %v4683
        %v4685 = vpop.f32.mrf.mxu0
        %v4686 = vadd.f32 0.0, %v4685
        %4687 = vmatmul.bf16.gmra.mxu0 %v2417
        %v4688 = vpop.f32.mrf.mxu0
        %v4689 = vadd.f32 0.0, %v4688
        %v4690 = vpop.f32.mrf.mxu0
        %v4691 = vadd.f32 0.0, %v4690
        %4692 = vmatmul.bf16.gmra.mxu0 %v2419
        %v4693 = vpop.f32.mrf.mxu0
        %v4694 = vadd.f32 0.0, %v4693
        %v4695 = vpop.f32.mrf.mxu0
        %v4696 = vadd.f32 0.0, %v4695
        %4697 = vmatmul.bf16.gmra.mxu0 %v2421
        %v4698 = vpop.f32.mrf.mxu0
        %v4699 = vadd.f32 0.0, %v4698
        %v4700 = vpop.f32.mrf.mxu0
        %v4701 = vadd.f32 0.0, %v4700
        %4702 = vmatmul.bf16.gmra.mxu0 %v2423
        %v4703 = vpop.f32.mrf.mxu0
        %v4704 = vadd.f32 0.0, %v4703
        %v4705 = vpop.f32.mrf.mxu0
        %v4706 = vadd.f32 0.0, %v4705
        %4707 = vmatmul.bf16.gmra.mxu0 %v2425
        %v4708 = vpop.f32.mrf.mxu0
        %v4709 = vadd.f32 0.0, %v4708
        %v4710 = vpop.f32.mrf.mxu0
        %v4711 = vadd.f32 0.0, %v4710
        %4712 = vmatmul.bf16.gmra.mxu0 %v2427
        %v4713 = vpop.f32.mrf.mxu0
        %v4714 = vadd.f32 0.0, %v4713
        %v4715 = vpop.f32.mrf.mxu0
        %v4716 = vadd.f32 0.0, %v4715
        %4717 = vdwg.mxu0
        %4718 = vmatpush.bf16.msra.mxu0 %v3065
        %4719 = vmatpush.bf16.msra.mxu0 %v3057
        %4720 = vmatpush.bf16.msra.mxu0 %v3049
        %4721 = vmatpush.bf16.msra.mxu0 %v3041
        %4722 = vmatpush.bf16.msra.mxu0 %v3033
        %4723 = vmatpush.bf16.msra.mxu0 %v3025
        %4724 = vmatpush.bf16.msra.mxu0 %v3017
        %4725 = vmatpush.bf16.msra.mxu0 %v3009
        %4726 = vmatmul.bf16.gmra.mxu0 %v2366
        %v4727 = vpop.f32.mrf.mxu0
        %v4728 = vadd.f32 %v4559, %v4727
        %v4729 = vpop.f32.mrf.mxu0
        %v4730 = vadd.f32 %v4561, %v4729
        %4731 = vmatmul.bf16.gmra.mxu0 %v2368
        %v4732 = vpop.f32.mrf.mxu0
        %v4733 = vadd.f32 %v4564, %v4732
        %v4734 = vpop.f32.mrf.mxu0
        %v4735 = vadd.f32 %v4566, %v4734
        %4736 = vmatmul.bf16.gmra.mxu0 %v2370
        %v4737 = vpop.f32.mrf.mxu0
        %v4738 = vadd.f32 %v4569, %v4737
        %v4739 = vpop.f32.mrf.mxu0
        %v4740 = vadd.f32 %v4571, %v4739
        %4741 = vmatmul.bf16.gmra.mxu0 %v2372
        %v4742 = vpop.f32.mrf.mxu0
        %v4743 = vadd.f32 %v4574, %v4742
        %v4744 = vpop.f32.mrf.mxu0
        %v4745 = vadd.f32 %v4576, %v4744
        %4746 = vmatmul.bf16.gmra.mxu0 %v2374
        %v4747 = vpop.f32.mrf.mxu0
        %v4748 = vadd.f32 %v4579, %v4747
        %v4749 = vpop.f32.mrf.mxu0
        %v4750 = vadd.f32 %v4581, %v4749
        %4751 = vmatmul.bf16.gmra.mxu0 %v2376
        %v4752 = vpop.f32.mrf.mxu0
        %v4753 = vadd.f32 %v4584, %v4752
        %v4754 = vpop.f32.mrf.mxu0
        %v4755 = vadd.f32 %v4586, %v4754
        %4756 = vmatmul.bf16.gmra.mxu0 %v2378
        %v4757 = vpop.f32.mrf.mxu0
        %v4758 = vadd.f32 %v4589, %v4757
        %v4759 = vpop.f32.mrf.mxu0
        %v4760 = vadd.f32 %v4591, %v4759
        %4761 = vmatmul.bf16.gmra.mxu0 %v2380
        %v4762 = vpop.f32.mrf.mxu0
        %v4763 = vadd.f32 %v4594, %v4762
        %v4764 = vpop.f32.mrf.mxu0
        %v4765 = vadd.f32 %v4596, %v4764
        %4766 = vmatmul.bf16.gmra.mxu0 %v2382
        %v4767 = vpop.f32.mrf.mxu0
        %v4768 = vadd.f32 %v4599, %v4767
        %v4769 = vpop.f32.mrf.mxu0
        %v4770 = vadd.f32 %v4601, %v4769
        %4771 = vmatmul.bf16.gmra.mxu0 %v2384
        %v4772 = vpop.f32.mrf.mxu0
        %v4773 = vadd.f32 %v4604, %v4772
        %v4774 = vpop.f32.mrf.mxu0
        %v4775 = vadd.f32 %v4606, %v4774
        %4776 = vmatmul.bf16.gmra.mxu0 %v2386
        %v4777 = vpop.f32.mrf.mxu0
        %v4778 = vadd.f32 %v4609, %v4777
        %v4779 = vpop.f32.mrf.mxu0
        %v4780 = vadd.f32 %v4611, %v4779
        %4781 = vmatmul.bf16.gmra.mxu0 %v2388
        %v4782 = vpop.f32.mrf.mxu0
        %v4783 = vadd.f32 %v4614, %v4782
        %v4784 = vpop.f32.mrf.mxu0
        %v4785 = vadd.f32 %v4616, %v4784
        %4786 = vmatmul.bf16.gmra.mxu0 %v2390
        %v4787 = vpop.f32.mrf.mxu0
        %v4788 = vadd.f32 %v4619, %v4787
        %v4789 = vpop.f32.mrf.mxu0
        %v4790 = vadd.f32 %v4621, %v4789
        %4791 = vmatmul.bf16.gmra.mxu0 %v2392
        %v4792 = vpop.f32.mrf.mxu0
        %v4793 = vadd.f32 %v4624, %v4792
        %v4794 = vpop.f32.mrf.mxu0
        %v4795 = vadd.f32 %v4626, %v4794
        %4796 = vmatmul.bf16.gmra.mxu0 %v2394
        %v4797 = vpop.f32.mrf.mxu0
        %v4798 = vadd.f32 %v4629, %v4797
        %v4799 = vpop.f32.mrf.mxu0
        %v4800 = vadd.f32 %v4631, %v4799
        %4801 = vmatmul.bf16.gmra.mxu0 %v2396
        %v4802 = vpop.f32.mrf.mxu0
        %v4803 = vadd.f32 %v4634, %v4802
        %v4804 = vpop.f32.mrf.mxu0
        %v4805 = vadd.f32 %v4636, %v4804
        %4806 = vmatmul.bf16.gmra.mxu0 %v2398
        %v4807 = vpop.f32.mrf.mxu0
        %v4808 = vadd.f32 %v4639, %v4807
        %v4809 = vpop.f32.mrf.mxu0
        %v4810 = vadd.f32 %v4641, %v4809
        %4811 = vmatmul.bf16.gmra.mxu0 %v2400
        %v4812 = vpop.f32.mrf.mxu0
        %v4813 = vadd.f32 %v4644, %v4812
        %v4814 = vpop.f32.mrf.mxu0
        %v4815 = vadd.f32 %v4646, %v4814
        %4816 = vmatmul.bf16.gmra.mxu0 %v2402
        %v4817 = vpop.f32.mrf.mxu0
        %v4818 = vadd.f32 %v4649, %v4817
        %v4819 = vpop.f32.mrf.mxu0
        %v4820 = vadd.f32 %v4651, %v4819
        %4821 = vmatmul.bf16.gmra.mxu0 %v2404
        %v4822 = vpop.f32.mrf.mxu0
        %v4823 = vadd.f32 %v4654, %v4822
        %v4824 = vpop.f32.mrf.mxu0
        %v4825 = vadd.f32 %v4656, %v4824
        %4826 = vmatmul.bf16.gmra.mxu0 %v2406
        %v4827 = vpop.f32.mrf.mxu0
        %v4828 = vadd.f32 %v4659, %v4827
        %v4829 = vpop.f32.mrf.mxu0
        %v4830 = vadd.f32 %v4661, %v4829
        %4831 = vmatmul.bf16.gmra.mxu0 %v2408
        %v4832 = vpop.f32.mrf.mxu0
        %v4833 = vadd.f32 %v4664, %v4832
        %v4834 = vpop.f32.mrf.mxu0
        %v4835 = vadd.f32 %v4666, %v4834
        %4836 = vmatmul.bf16.gmra.mxu0 %v2410
        %v4837 = vpop.f32.mrf.mxu0
        %v4838 = vadd.f32 %v4669, %v4837
        %v4839 = vpop.f32.mrf.mxu0
        %v4840 = vadd.f32 %v4671, %v4839
        %4841 = vmatmul.bf16.gmra.mxu0 %v2412
        %v4842 = vpop.f32.mrf.mxu0
        %v4843 = vadd.f32 %v4674, %v4842
        %v4844 = vpop.f32.mrf.mxu0
        %v4845 = vadd.f32 %v4676, %v4844
        %4846 = vmatmul.bf16.gmra.mxu0 %v2414
        %v4847 = vpop.f32.mrf.mxu0
        %v4848 = vadd.f32 %v4679, %v4847
        %v4849 = vpop.f32.mrf.mxu0
        %v4850 = vadd.f32 %v4681, %v4849
        %4851 = vmatmul.bf16.gmra.mxu0 %v2416
        %v4852 = vpop.f32.mrf.mxu0
        %v4853 = vadd.f32 %v4684, %v4852
        %v4854 = vpop.f32.mrf.mxu0
        %v4855 = vadd.f32 %v4686, %v4854
        %4856 = vmatmul.bf16.gmra.mxu0 %v2418
        %v4857 = vpop.f32.mrf.mxu0
        %v4858 = vadd.f32 %v4689, %v4857
        %v4859 = vpop.f32.mrf.mxu0
        %v4860 = vadd.f32 %v4691, %v4859
        %4861 = vmatmul.bf16.gmra.mxu0 %v2420
        %v4862 = vpop.f32.mrf.mxu0
        %v4863 = vadd.f32 %v4694, %v4862
        %v4864 = vpop.f32.mrf.mxu0
        %v4865 = vadd.f32 %v4696, %v4864
        %4866 = vmatmul.bf16.gmra.mxu0 %v2422
        %v4867 = vpop.f32.mrf.mxu0
        %v4868 = vadd.f32 %v4699, %v4867
        %v4869 = vpop.f32.mrf.mxu0
        %v4870 = vadd.f32 %v4701, %v4869
        %4871 = vmatmul.bf16.gmra.mxu0 %v2424
        %v4872 = vpop.f32.mrf.mxu0
        %v4873 = vadd.f32 %v4704, %v4872
        %v4874 = vpop.f32.mrf.mxu0
        %v4875 = vadd.f32 %v4706, %v4874
        %4876 = vmatmul.bf16.gmra.mxu0 %v2426
        %v4877 = vpop.f32.mrf.mxu0
        %v4878 = vadd.f32 %v4709, %v4877
        %v4879 = vpop.f32.mrf.mxu0
        %v4880 = vadd.f32 %v4711, %v4879
        %4881 = vmatmul.bf16.gmra.mxu0 %v2428
        %v4882 = vpop.f32.mrf.mxu0
        %v4883 = vadd.f32 %v4714, %v4882
        %v4884 = vpop.f32.mrf.mxu0
        %v4885 = vadd.f32 %v4716, %v4884
        %4886 = vdwg.mxu0
        %4887 = vmatpush.bf16.msra.mxu0 %v3002
        %4888 = vmatpush.bf16.msra.mxu0 %v2994
        %4889 = vmatpush.bf16.msra.mxu0 %v2986
        %4890 = vmatpush.bf16.msra.mxu0 %v2978
        %4891 = vmatpush.bf16.msra.mxu0 %v2970
        %4892 = vmatpush.bf16.msra.mxu0 %v2962
        %4893 = vmatpush.bf16.msra.mxu0 %v2954
        %4894 = vmatpush.bf16.msra.mxu0 %v2946
        %4895 = vmatmul.bf16.gmra.mxu0 %v2365
        %v4896 = vpop.f32.mrf.mxu0
        %v4897 = vadd.f32 0.0, %v4896
        %v4898 = vpop.f32.mrf.mxu0
        %v4899 = vadd.f32 0.0, %v4898
        %4900 = vmatmul.bf16.gmra.mxu0 %v2367
        %v4901 = vpop.f32.mrf.mxu0
        %v4902 = vadd.f32 0.0, %v4901
        %v4903 = vpop.f32.mrf.mxu0
        %v4904 = vadd.f32 0.0, %v4903
        %4905 = vmatmul.bf16.gmra.mxu0 %v2369
        %v4906 = vpop.f32.mrf.mxu0
        %v4907 = vadd.f32 0.0, %v4906
        %v4908 = vpop.f32.mrf.mxu0
        %v4909 = vadd.f32 0.0, %v4908
        %4910 = vmatmul.bf16.gmra.mxu0 %v2371
        %v4911 = vpop.f32.mrf.mxu0
        %v4912 = vadd.f32 0.0, %v4911
        %v4913 = vpop.f32.mrf.mxu0
        %v4914 = vadd.f32 0.0, %v4913
        %4915 = vmatmul.bf16.gmra.mxu0 %v2373
        %v4916 = vpop.f32.mrf.mxu0
        %v4917 = vadd.f32 0.0, %v4916
        %v4918 = vpop.f32.mrf.mxu0
        %v4919 = vadd.f32 0.0, %v4918
        %4920 = vmatmul.bf16.gmra.mxu0 %v2375
        %v4921 = vpop.f32.mrf.mxu0
        %v4922 = vadd.f32 0.0, %v4921
        %v4923 = vpop.f32.mrf.mxu0
        %v4924 = vadd.f32 0.0, %v4923
        %4925 = vmatmul.bf16.gmra.mxu0 %v2377
        %v4926 = vpop.f32.mrf.mxu0
        %v4927 = vadd.f32 0.0, %v4926
        %v4928 = vpop.f32.mrf.mxu0
        %v4929 = vadd.f32 0.0, %v4928
        %4930 = vmatmul.bf16.gmra.mxu0 %v2379
        %v4931 = vpop.f32.mrf.mxu0
        %v4932 = vadd.f32 0.0, %v4931
        %v4933 = vpop.f32.mrf.mxu0
        %v4934 = vadd.f32 0.0, %v4933
        %4935 = vmatmul.bf16.gmra.mxu0 %v2381
        %v4936 = vpop.f32.mrf.mxu0
        %v4937 = vadd.f32 0.0, %v4936
        %v4938 = vpop.f32.mrf.mxu0
        %v4939 = vadd.f32 0.0, %v4938
        %4940 = vmatmul.bf16.gmra.mxu0 %v2383
        %v4941 = vpop.f32.mrf.mxu0
        %v4942 = vadd.f32 0.0, %v4941
        %v4943 = vpop.f32.mrf.mxu0
        %v4944 = vadd.f32 0.0, %v4943
        %4945 = vmatmul.bf16.gmra.mxu0 %v2385
        %v4946 = vpop.f32.mrf.mxu0
        %v4947 = vadd.f32 0.0, %v4946
        %v4948 = vpop.f32.mrf.mxu0
        %v4949 = vadd.f32 0.0, %v4948
        %4950 = vmatmul.bf16.gmra.mxu0 %v2387
        %v4951 = vpop.f32.mrf.mxu0
        %v4952 = vadd.f32 0.0, %v4951
        %v4953 = vpop.f32.mrf.mxu0
        %v4954 = vadd.f32 0.0, %v4953
        %4955 = vmatmul.bf16.gmra.mxu0 %v2389
        %v4956 = vpop.f32.mrf.mxu0
        %v4957 = vadd.f32 0.0, %v4956
        %v4958 = vpop.f32.mrf.mxu0
        %v4959 = vadd.f32 0.0, %v4958
        %4960 = vmatmul.bf16.gmra.mxu0 %v2391
        %v4961 = vpop.f32.mrf.mxu0
        %v4962 = vadd.f32 0.0, %v4961
        %v4963 = vpop.f32.mrf.mxu0
        %v4964 = vadd.f32 0.0, %v4963
        %4965 = vmatmul.bf16.gmra.mxu0 %v2393
        %v4966 = vpop.f32.mrf.mxu0
        %v4967 = vadd.f32 0.0, %v4966
        %v4968 = vpop.f32.mrf.mxu0
        %v4969 = vadd.f32 0.0, %v4968
        %4970 = vmatmul.bf16.gmra.mxu0 %v2395
        %v4971 = vpop.f32.mrf.mxu0
        %v4972 = vadd.f32 0.0, %v4971
        %v4973 = vpop.f32.mrf.mxu0
        %v4974 = vadd.f32 0.0, %v4973
        %4975 = vmatmul.bf16.gmra.mxu0 %v2397
        %v4976 = vpop.f32.mrf.mxu0
        %v4977 = vadd.f32 0.0, %v4976
        %v4978 = vpop.f32.mrf.mxu0
        %v4979 = vadd.f32 0.0, %v4978
        %4980 = vmatmul.bf16.gmra.mxu0 %v2399
        %v4981 = vpop.f32.mrf.mxu0
        %v4982 = vadd.f32 0.0, %v4981
        %v4983 = vpop.f32.mrf.mxu0
        %v4984 = vadd.f32 0.0, %v4983
        %4985 = vmatmul.bf16.gmra.mxu0 %v2401
        %v4986 = vpop.f32.mrf.mxu0
        %v4987 = vadd.f32 0.0, %v4986
        %v4988 = vpop.f32.mrf.mxu0
        %v4989 = vadd.f32 0.0, %v4988
        %4990 = vmatmul.bf16.gmra.mxu0 %v2403
        %v4991 = vpop.f32.mrf.mxu0
        %v4992 = vadd.f32 0.0, %v4991
        %v4993 = vpop.f32.mrf.mxu0
        %v4994 = vadd.f32 0.0, %v4993
        %4995 = vmatmul.bf16.gmra.mxu0 %v2405
        %v4996 = vpop.f32.mrf.mxu0
        %v4997 = vadd.f32 0.0, %v4996
        %v4998 = vpop.f32.mrf.mxu0
        %v4999 = vadd.f32 0.0, %v4998
        %5000 = vmatmul.bf16.gmra.mxu0 %v2407
        %v5001 = vpop.f32.mrf.mxu0
        %v5002 = vadd.f32 0.0, %v5001
        %v5003 = vpop.f32.mrf.mxu0
        %v5004 = vadd.f32 0.0, %v5003
        %5005 = vmatmul.bf16.gmra.mxu0 %v2409
        %v5006 = vpop.f32.mrf.mxu0
        %v5007 = vadd.f32 0.0, %v5006
        %v5008 = vpop.f32.mrf.mxu0
        %v5009 = vadd.f32 0.0, %v5008
        %5010 = vmatmul.bf16.gmra.mxu0 %v2411
        %v5011 = vpop.f32.mrf.mxu0
        %v5012 = vadd.f32 0.0, %v5011
        %v5013 = vpop.f32.mrf.mxu0
        %v5014 = vadd.f32 0.0, %v5013
        %5015 = vmatmul.bf16.gmra.mxu0 %v2413
        %v5016 = vpop.f32.mrf.mxu0
        %v5017 = vadd.f32 0.0, %v5016
        %v5018 = vpop.f32.mrf.mxu0
        %v5019 = vadd.f32 0.0, %v5018
        %5020 = vmatmul.bf16.gmra.mxu0 %v2415
        %v5021 = vpop.f32.mrf.mxu0
        %v5022 = vadd.f32 0.0, %v5021
        %v5023 = vpop.f32.mrf.mxu0
        %v5024 = vadd.f32 0.0, %v5023
        %5025 = vmatmul.bf16.gmra.mxu0 %v2417
        %v5026 = vpop.f32.mrf.mxu0
        %v5027 = vadd.f32 0.0, %v5026
        %v5028 = vpop.f32.mrf.mxu0
        %v5029 = vadd.f32 0.0, %v5028
        %5030 = vmatmul.bf16.gmra.mxu0 %v2419
        %v5031 = vpop.f32.mrf.mxu0
        %v5032 = vadd.f32 0.0, %v5031
        %v5033 = vpop.f32.mrf.mxu0
        %v5034 = vadd.f32 0.0, %v5033
        %5035 = vmatmul.bf16.gmra.mxu0 %v2421
        %v5036 = vpop.f32.mrf.mxu0
        %v5037 = vadd.f32 0.0, %v5036
        %v5038 = vpop.f32.mrf.mxu0
        %v5039 = vadd.f32 0.0, %v5038
        %5040 = vmatmul.bf16.gmra.mxu0 %v2423
        %v5041 = vpop.f32.mrf.mxu0
        %v5042 = vadd.f32 0.0, %v5041
        %v5043 = vpop.f32.mrf.mxu0
        %v5044 = vadd.f32 0.0, %v5043
        %5045 = vmatmul.bf16.gmra.mxu0 %v2425
        %v5046 = vpop.f32.mrf.mxu0
        %v5047 = vadd.f32 0.0, %v5046
        %v5048 = vpop.f32.mrf.mxu0
        %v5049 = vadd.f32 0.0, %v5048
        %5050 = vmatmul.bf16.gmra.mxu0 %v2427
        %v5051 = vpop.f32.mrf.mxu0
        %v5052 = vadd.f32 0.0, %v5051
        %v5053 = vpop.f32.mrf.mxu0
        %v5054 = vadd.f32 0.0, %v5053
        %5055 = vdwg.mxu0
        %5056 = vmatpush.bf16.msra.mxu0 %v3066
        %5057 = vmatpush.bf16.msra.mxu0 %v3058
        %5058 = vmatpush.bf16.msra.mxu0 %v3050
        %5059 = vmatpush.bf16.msra.mxu0 %v3042
        %5060 = vmatpush.bf16.msra.mxu0 %v3034
        %5061 = vmatpush.bf16.msra.mxu0 %v3026
        %5062 = vmatpush.bf16.msra.mxu0 %v3018
        %5063 = vmatpush.bf16.msra.mxu0 %v3010
        %5064 = vmatmul.bf16.gmra.mxu0 %v2366
        %v5065 = vpop.f32.mrf.mxu0
        %v5066 = vadd.f32 %v4897, %v5065
        %v5067 = vpop.f32.mrf.mxu0
        %v5068 = vadd.f32 %v4899, %v5067
        %5069 = vmatmul.bf16.gmra.mxu0 %v2368
        %v5070 = vpop.f32.mrf.mxu0
        %v5071 = vadd.f32 %v4902, %v5070
        %v5072 = vpop.f32.mrf.mxu0
        %v5073 = vadd.f32 %v4904, %v5072
        %5074 = vmatmul.bf16.gmra.mxu0 %v2370
        %v5075 = vpop.f32.mrf.mxu0
        %v5076 = vadd.f32 %v4907, %v5075
        %v5077 = vpop.f32.mrf.mxu0
        %v5078 = vadd.f32 %v4909, %v5077
        %5079 = vmatmul.bf16.gmra.mxu0 %v2372
        %v5080 = vpop.f32.mrf.mxu0
        %v5081 = vadd.f32 %v4912, %v5080
        %v5082 = vpop.f32.mrf.mxu0
        %v5083 = vadd.f32 %v4914, %v5082
        %5084 = vmatmul.bf16.gmra.mxu0 %v2374
        %v5085 = vpop.f32.mrf.mxu0
        %v5086 = vadd.f32 %v4917, %v5085
        %v5087 = vpop.f32.mrf.mxu0
        %v5088 = vadd.f32 %v4919, %v5087
        %5089 = vmatmul.bf16.gmra.mxu0 %v2376
        %v5090 = vpop.f32.mrf.mxu0
        %v5091 = vadd.f32 %v4922, %v5090
        %v5092 = vpop.f32.mrf.mxu0
        %v5093 = vadd.f32 %v4924, %v5092
        %5094 = vmatmul.bf16.gmra.mxu0 %v2378
        %v5095 = vpop.f32.mrf.mxu0
        %v5096 = vadd.f32 %v4927, %v5095
        %v5097 = vpop.f32.mrf.mxu0
        %v5098 = vadd.f32 %v4929, %v5097
        %5099 = vmatmul.bf16.gmra.mxu0 %v2380
        %v5100 = vpop.f32.mrf.mxu0
        %v5101 = vadd.f32 %v4932, %v5100
        %v5102 = vpop.f32.mrf.mxu0
        %v5103 = vadd.f32 %v4934, %v5102
        %5104 = vmatmul.bf16.gmra.mxu0 %v2382
        %v5105 = vpop.f32.mrf.mxu0
        %v5106 = vadd.f32 %v4937, %v5105
        %v5107 = vpop.f32.mrf.mxu0
        %v5108 = vadd.f32 %v4939, %v5107
        %5109 = vmatmul.bf16.gmra.mxu0 %v2384
        %v5110 = vpop.f32.mrf.mxu0
        %v5111 = vadd.f32 %v4942, %v5110
        %v5112 = vpop.f32.mrf.mxu0
        %v5113 = vadd.f32 %v4944, %v5112
        %5114 = vmatmul.bf16.gmra.mxu0 %v2386
        %v5115 = vpop.f32.mrf.mxu0
        %v5116 = vadd.f32 %v4947, %v5115
        %v5117 = vpop.f32.mrf.mxu0
        %v5118 = vadd.f32 %v4949, %v5117
        %5119 = vmatmul.bf16.gmra.mxu0 %v2388
        %v5120 = vpop.f32.mrf.mxu0
        %v5121 = vadd.f32 %v4952, %v5120
        %v5122 = vpop.f32.mrf.mxu0
        %v5123 = vadd.f32 %v4954, %v5122
        %5124 = vmatmul.bf16.gmra.mxu0 %v2390
        %v5125 = vpop.f32.mrf.mxu0
        %v5126 = vadd.f32 %v4957, %v5125
        %v5127 = vpop.f32.mrf.mxu0
        %v5128 = vadd.f32 %v4959, %v5127
        %5129 = vmatmul.bf16.gmra.mxu0 %v2392
        %v5130 = vpop.f32.mrf.mxu0
        %v5131 = vadd.f32 %v4962, %v5130
        %v5132 = vpop.f32.mrf.mxu0
        %v5133 = vadd.f32 %v4964, %v5132
        %5134 = vmatmul.bf16.gmra.mxu0 %v2394
        %v5135 = vpop.f32.mrf.mxu0
        %v5136 = vadd.f32 %v4967, %v5135
        %v5137 = vpop.f32.mrf.mxu0
        %v5138 = vadd.f32 %v4969, %v5137
        %5139 = vmatmul.bf16.gmra.mxu0 %v2396
        %v5140 = vpop.f32.mrf.mxu0
        %v5141 = vadd.f32 %v4972, %v5140
        %v5142 = vpop.f32.mrf.mxu0
        %v5143 = vadd.f32 %v4974, %v5142
        %5144 = vmatmul.bf16.gmra.mxu0 %v2398
        %v5145 = vpop.f32.mrf.mxu0
        %v5146 = vadd.f32 %v4977, %v5145
        %v5147 = vpop.f32.mrf.mxu0
        %v5148 = vadd.f32 %v4979, %v5147
        %5149 = vmatmul.bf16.gmra.mxu0 %v2400
        %v5150 = vpop.f32.mrf.mxu0
        %v5151 = vadd.f32 %v4982, %v5150
        %v5152 = vpop.f32.mrf.mxu0
        %v5153 = vadd.f32 %v4984, %v5152
        %5154 = vmatmul.bf16.gmra.mxu0 %v2402
        %v5155 = vpop.f32.mrf.mxu0
        %v5156 = vadd.f32 %v4987, %v5155
        %v5157 = vpop.f32.mrf.mxu0
        %v5158 = vadd.f32 %v4989, %v5157
        %5159 = vmatmul.bf16.gmra.mxu0 %v2404
        %v5160 = vpop.f32.mrf.mxu0
        %v5161 = vadd.f32 %v4992, %v5160
        %v5162 = vpop.f32.mrf.mxu0
        %v5163 = vadd.f32 %v4994, %v5162
        %5164 = vmatmul.bf16.gmra.mxu0 %v2406
        %v5165 = vpop.f32.mrf.mxu0
        %v5166 = vadd.f32 %v4997, %v5165
        %v5167 = vpop.f32.mrf.mxu0
        %v5168 = vadd.f32 %v4999, %v5167
        %5169 = vmatmul.bf16.gmra.mxu0 %v2408
        %v5170 = vpop.f32.mrf.mxu0
        %v5171 = vadd.f32 %v5002, %v5170
        %v5172 = vpop.f32.mrf.mxu0
        %v5173 = vadd.f32 %v5004, %v5172
        %5174 = vmatmul.bf16.gmra.mxu0 %v2410
        %v5175 = vpop.f32.mrf.mxu0
        %v5176 = vadd.f32 %v5007, %v5175
        %v5177 = vpop.f32.mrf.mxu0
        %v5178 = vadd.f32 %v5009, %v5177
        %5179 = vmatmul.bf16.gmra.mxu0 %v2412
        %v5180 = vpop.f32.mrf.mxu0
        %v5181 = vadd.f32 %v5012, %v5180
        %v5182 = vpop.f32.mrf.mxu0
        %v5183 = vadd.f32 %v5014, %v5182
        %5184 = vmatmul.bf16.gmra.mxu0 %v2414
        %v5185 = vpop.f32.mrf.mxu0
        %v5186 = vadd.f32 %v5017, %v5185
        %v5187 = vpop.f32.mrf.mxu0
        %v5188 = vadd.f32 %v5019, %v5187
        %5189 = vmatmul.bf16.gmra.mxu0 %v2416
        %v5190 = vpop.f32.mrf.mxu0
        %v5191 = vadd.f32 %v5022, %v5190
        %v5192 = vpop.f32.mrf.mxu0
        %v5193 = vadd.f32 %v5024, %v5192
        %5194 = vmatmul.bf16.gmra.mxu0 %v2418
        %v5195 = vpop.f32.mrf.mxu0
        %v5196 = vadd.f32 %v5027, %v5195
        %v5197 = vpop.f32.mrf.mxu0
        %v5198 = vadd.f32 %v5029, %v5197
        %5199 = vmatmul.bf16.gmra.mxu0 %v2420
        %v5200 = vpop.f32.mrf.mxu0
        %v5201 = vadd.f32 %v5032, %v5200
        %v5202 = vpop.f32.mrf.mxu0
        %v5203 = vadd.f32 %v5034, %v5202
        %5204 = vmatmul.bf16.gmra.mxu0 %v2422
        %v5205 = vpop.f32.mrf.mxu0
        %v5206 = vadd.f32 %v5037, %v5205
        %v5207 = vpop.f32.mrf.mxu0
        %v5208 = vadd.f32 %v5039, %v5207
        %5209 = vmatmul.bf16.gmra.mxu0 %v2424
        %v5210 = vpop.f32.mrf.mxu0
        %v5211 = vadd.f32 %v5042, %v5210
        %v5212 = vpop.f32.mrf.mxu0
        %v5213 = vadd.f32 %v5044, %v5212
        %5214 = vmatmul.bf16.gmra.mxu0 %v2426
        %v5215 = vpop.f32.mrf.mxu0
        %v5216 = vadd.f32 %v5047, %v5215
        %v5217 = vpop.f32.mrf.mxu0
        %v5218 = vadd.f32 %v5049, %v5217
        %5219 = vmatmul.bf16.gmra.mxu0 %v2428
        %v5220 = vpop.f32.mrf.mxu0
        %v5221 = vadd.f32 %v5052, %v5220
        %v5222 = vpop.f32.mrf.mxu0
        %v5223 = vadd.f32 %v5054, %v5222
        %5224 = vdwg.mxu0
        %5225 = vmatpush.bf16.msra.mxu0 %v3003
        %5226 = vmatpush.bf16.msra.mxu0 %v2995
        %5227 = vmatpush.bf16.msra.mxu0 %v2987
        %5228 = vmatpush.bf16.msra.mxu0 %v2979
        %5229 = vmatpush.bf16.msra.mxu0 %v2971
        %5230 = vmatpush.bf16.msra.mxu0 %v2963
        %5231 = vmatpush.bf16.msra.mxu0 %v2955
        %5232 = vmatpush.bf16.msra.mxu0 %v2947
        %5233 = vmatmul.bf16.gmra.mxu0 %v2365
        %v5234 = vpop.f32.mrf.mxu0
        %v5235 = vadd.f32 0.0, %v5234
        %v5236 = vpop.f32.mrf.mxu0
        %v5237 = vadd.f32 0.0, %v5236
        %5238 = vmatmul.bf16.gmra.mxu0 %v2367
        %v5239 = vpop.f32.mrf.mxu0
        %v5240 = vadd.f32 0.0, %v5239
        %v5241 = vpop.f32.mrf.mxu0
        %v5242 = vadd.f32 0.0, %v5241
        %5243 = vmatmul.bf16.gmra.mxu0 %v2369
        %v5244 = vpop.f32.mrf.mxu0
        %v5245 = vadd.f32 0.0, %v5244
        %v5246 = vpop.f32.mrf.mxu0
        %v5247 = vadd.f32 0.0, %v5246
        %5248 = vmatmul.bf16.gmra.mxu0 %v2371
        %v5249 = vpop.f32.mrf.mxu0
        %v5250 = vadd.f32 0.0, %v5249
        %v5251 = vpop.f32.mrf.mxu0
        %v5252 = vadd.f32 0.0, %v5251
        %5253 = vmatmul.bf16.gmra.mxu0 %v2373
        %v5254 = vpop.f32.mrf.mxu0
        %v5255 = vadd.f32 0.0, %v5254
        %v5256 = vpop.f32.mrf.mxu0
        %v5257 = vadd.f32 0.0, %v5256
        %5258 = vmatmul.bf16.gmra.mxu0 %v2375
        %v5259 = vpop.f32.mrf.mxu0
        %v5260 = vadd.f32 0.0, %v5259
        %v5261 = vpop.f32.mrf.mxu0
        %v5262 = vadd.f32 0.0, %v5261
        %5263 = vmatmul.bf16.gmra.mxu0 %v2377
        %v5264 = vpop.f32.mrf.mxu0
        %v5265 = vadd.f32 0.0, %v5264
        %v5266 = vpop.f32.mrf.mxu0
        %v5267 = vadd.f32 0.0, %v5266
        %5268 = vmatmul.bf16.gmra.mxu0 %v2379
        %v5269 = vpop.f32.mrf.mxu0
        %v5270 = vadd.f32 0.0, %v5269
        %v5271 = vpop.f32.mrf.mxu0
        %v5272 = vadd.f32 0.0, %v5271
        %5273 = vmatmul.bf16.gmra.mxu0 %v2381
        %v5274 = vpop.f32.mrf.mxu0
        %v5275 = vadd.f32 0.0, %v5274
        %v5276 = vpop.f32.mrf.mxu0
        %v5277 = vadd.f32 0.0, %v5276
        %5278 = vmatmul.bf16.gmra.mxu0 %v2383
        %v5279 = vpop.f32.mrf.mxu0
        %v5280 = vadd.f32 0.0, %v5279
        %v5281 = vpop.f32.mrf.mxu0
        %v5282 = vadd.f32 0.0, %v5281
        %5283 = vmatmul.bf16.gmra.mxu0 %v2385
        %v5284 = vpop.f32.mrf.mxu0
        %v5285 = vadd.f32 0.0, %v5284
        %v5286 = vpop.f32.mrf.mxu0
        %v5287 = vadd.f32 0.0, %v5286
        %5288 = vmatmul.bf16.gmra.mxu0 %v2387
        %v5289 = vpop.f32.mrf.mxu0
        %v5290 = vadd.f32 0.0, %v5289
        %v5291 = vpop.f32.mrf.mxu0
        %v5292 = vadd.f32 0.0, %v5291
        %5293 = vmatmul.bf16.gmra.mxu0 %v2389
        %v5294 = vpop.f32.mrf.mxu0
        %v5295 = vadd.f32 0.0, %v5294
        %v5296 = vpop.f32.mrf.mxu0
        %v5297 = vadd.f32 0.0, %v5296
        %5298 = vmatmul.bf16.gmra.mxu0 %v2391
        %v5299 = vpop.f32.mrf.mxu0
        %v5300 = vadd.f32 0.0, %v5299
        %v5301 = vpop.f32.mrf.mxu0
        %v5302 = vadd.f32 0.0, %v5301
        %5303 = vmatmul.bf16.gmra.mxu0 %v2393
        %v5304 = vpop.f32.mrf.mxu0
        %v5305 = vadd.f32 0.0, %v5304
        %v5306 = vpop.f32.mrf.mxu0
        %v5307 = vadd.f32 0.0, %v5306
        %5308 = vmatmul.bf16.gmra.mxu0 %v2395
        %v5309 = vpop.f32.mrf.mxu0
        %v5310 = vadd.f32 0.0, %v5309
        %v5311 = vpop.f32.mrf.mxu0
        %v5312 = vadd.f32 0.0, %v5311
        %5313 = vmatmul.bf16.gmra.mxu0 %v2397
        %v5314 = vpop.f32.mrf.mxu0
        %v5315 = vadd.f32 0.0, %v5314
        %v5316 = vpop.f32.mrf.mxu0
        %v5317 = vadd.f32 0.0, %v5316
        %5318 = vmatmul.bf16.gmra.mxu0 %v2399
        %v5319 = vpop.f32.mrf.mxu0
        %v5320 = vadd.f32 0.0, %v5319
        %v5321 = vpop.f32.mrf.mxu0
        %v5322 = vadd.f32 0.0, %v5321
        %5323 = vmatmul.bf16.gmra.mxu0 %v2401
        %v5324 = vpop.f32.mrf.mxu0
        %v5325 = vadd.f32 0.0, %v5324
        %v5326 = vpop.f32.mrf.mxu0
        %v5327 = vadd.f32 0.0, %v5326
        %5328 = vmatmul.bf16.gmra.mxu0 %v2403
        %v5329 = vpop.f32.mrf.mxu0
        %v5330 = vadd.f32 0.0, %v5329
        %v5331 = vpop.f32.mrf.mxu0
        %v5332 = vadd.f32 0.0, %v5331
        %5333 = vmatmul.bf16.gmra.mxu0 %v2405
        %v5334 = vpop.f32.mrf.mxu0
        %v5335 = vadd.f32 0.0, %v5334
        %v5336 = vpop.f32.mrf.mxu0
        %v5337 = vadd.f32 0.0, %v5336
        %5338 = vmatmul.bf16.gmra.mxu0 %v2407
        %v5339 = vpop.f32.mrf.mxu0
        %v5340 = vadd.f32 0.0, %v5339
        %v5341 = vpop.f32.mrf.mxu0
        %v5342 = vadd.f32 0.0, %v5341
        %5343 = vmatmul.bf16.gmra.mxu0 %v2409
        %v5344 = vpop.f32.mrf.mxu0
        %v5345 = vadd.f32 0.0, %v5344
        %v5346 = vpop.f32.mrf.mxu0
        %v5347 = vadd.f32 0.0, %v5346
        %5348 = vmatmul.bf16.gmra.mxu0 %v2411
        %v5349 = vpop.f32.mrf.mxu0
        %v5350 = vadd.f32 0.0, %v5349
        %v5351 = vpop.f32.mrf.mxu0
        %v5352 = vadd.f32 0.0, %v5351
        %5353 = vmatmul.bf16.gmra.mxu0 %v2413
        %v5354 = vpop.f32.mrf.mxu0
        %v5355 = vadd.f32 0.0, %v5354
        %v5356 = vpop.f32.mrf.mxu0
        %v5357 = vadd.f32 0.0, %v5356
        %5358 = vmatmul.bf16.gmra.mxu0 %v2415
        %v5359 = vpop.f32.mrf.mxu0
        %v5360 = vadd.f32 0.0, %v5359
        %v5361 = vpop.f32.mrf.mxu0
        %v5362 = vadd.f32 0.0, %v5361
        %5363 = vmatmul.bf16.gmra.mxu0 %v2417
        %v5364 = vpop.f32.mrf.mxu0
        %v5365 = vadd.f32 0.0, %v5364
        %v5366 = vpop.f32.mrf.mxu0
        %v5367 = vadd.f32 0.0, %v5366
        %5368 = vmatmul.bf16.gmra.mxu0 %v2419
        %v5369 = vpop.f32.mrf.mxu0
        %v5370 = vadd.f32 0.0, %v5369
        %v5371 = vpop.f32.mrf.mxu0
        %v5372 = vadd.f32 0.0, %v5371
        %5373 = vmatmul.bf16.gmra.mxu0 %v2421
        %v5374 = vpop.f32.mrf.mxu0
        %v5375 = vadd.f32 0.0, %v5374
        %v5376 = vpop.f32.mrf.mxu0
        %v5377 = vadd.f32 0.0, %v5376
        %5378 = vmatmul.bf16.gmra.mxu0 %v2423
        %v5379 = vpop.f32.mrf.mxu0
        %v5380 = vadd.f32 0.0, %v5379
        %v5381 = vpop.f32.mrf.mxu0
        %v5382 = vadd.f32 0.0, %v5381
        %5383 = vmatmul.bf16.gmra.mxu0 %v2425
        %v5384 = vpop.f32.mrf.mxu0
        %v5385 = vadd.f32 0.0, %v5384
        %v5386 = vpop.f32.mrf.mxu0
        %v5387 = vadd.f32 0.0, %v5386
        %5388 = vmatmul.bf16.gmra.mxu0 %v2427
        %v5389 = vpop.f32.mrf.mxu0
        %v5390 = vadd.f32 0.0, %v5389
        %v5391 = vpop.f32.mrf.mxu0
        %v5392 = vadd.f32 0.0, %v5391
        %5393 = vdwg.mxu0
        %5394 = vmatpush.bf16.msra.mxu0 %v3067
        %5395 = vmatpush.bf16.msra.mxu0 %v3059
        %5396 = vmatpush.bf16.msra.mxu0 %v3051
        %5397 = vmatpush.bf16.msra.mxu0 %v3043
        %5398 = vmatpush.bf16.msra.mxu0 %v3035
        %5399 = vmatpush.bf16.msra.mxu0 %v3027
        %5400 = vmatpush.bf16.msra.mxu0 %v3019
        %5401 = vmatpush.bf16.msra.mxu0 %v3011
        %5402 = vmatmul.bf16.gmra.mxu0 %v2366
        %v5403 = vpop.f32.mrf.mxu0
        %v5404 = vadd.f32 %v5235, %v5403
        %v5405 = vpop.f32.mrf.mxu0
        %v5406 = vadd.f32 %v5237, %v5405
        %5407 = vmatmul.bf16.gmra.mxu0 %v2368
        %v5408 = vpop.f32.mrf.mxu0
        %v5409 = vadd.f32 %v5240, %v5408
        %v5410 = vpop.f32.mrf.mxu0
        %v5411 = vadd.f32 %v5242, %v5410
        %5412 = vmatmul.bf16.gmra.mxu0 %v2370
        %v5413 = vpop.f32.mrf.mxu0
        %v5414 = vadd.f32 %v5245, %v5413
        %v5415 = vpop.f32.mrf.mxu0
        %v5416 = vadd.f32 %v5247, %v5415
        %5417 = vmatmul.bf16.gmra.mxu0 %v2372
        %v5418 = vpop.f32.mrf.mxu0
        %v5419 = vadd.f32 %v5250, %v5418
        %v5420 = vpop.f32.mrf.mxu0
        %v5421 = vadd.f32 %v5252, %v5420
        %5422 = vmatmul.bf16.gmra.mxu0 %v2374
        %v5423 = vpop.f32.mrf.mxu0
        %v5424 = vadd.f32 %v5255, %v5423
        %v5425 = vpop.f32.mrf.mxu0
        %v5426 = vadd.f32 %v5257, %v5425
        %5427 = vmatmul.bf16.gmra.mxu0 %v2376
        %v5428 = vpop.f32.mrf.mxu0
        %v5429 = vadd.f32 %v5260, %v5428
        %v5430 = vpop.f32.mrf.mxu0
        %v5431 = vadd.f32 %v5262, %v5430
        %5432 = vmatmul.bf16.gmra.mxu0 %v2378
        %v5433 = vpop.f32.mrf.mxu0
        %v5434 = vadd.f32 %v5265, %v5433
        %v5435 = vpop.f32.mrf.mxu0
        %v5436 = vadd.f32 %v5267, %v5435
        %5437 = vmatmul.bf16.gmra.mxu0 %v2380
        %v5438 = vpop.f32.mrf.mxu0
        %v5439 = vadd.f32 %v5270, %v5438
        %v5440 = vpop.f32.mrf.mxu0
        %v5441 = vadd.f32 %v5272, %v5440
        %5442 = vmatmul.bf16.gmra.mxu0 %v2382
        %v5443 = vpop.f32.mrf.mxu0
        %v5444 = vadd.f32 %v5275, %v5443
        %v5445 = vpop.f32.mrf.mxu0
        %v5446 = vadd.f32 %v5277, %v5445
        %5447 = vmatmul.bf16.gmra.mxu0 %v2384
        %v5448 = vpop.f32.mrf.mxu0
        %v5449 = vadd.f32 %v5280, %v5448
        %v5450 = vpop.f32.mrf.mxu0
        %v5451 = vadd.f32 %v5282, %v5450
        %5452 = vmatmul.bf16.gmra.mxu0 %v2386
        %v5453 = vpop.f32.mrf.mxu0
        %v5454 = vadd.f32 %v5285, %v5453
        %v5455 = vpop.f32.mrf.mxu0
        %v5456 = vadd.f32 %v5287, %v5455
        %5457 = vmatmul.bf16.gmra.mxu0 %v2388
        %v5458 = vpop.f32.mrf.mxu0
        %v5459 = vadd.f32 %v5290, %v5458
        %v5460 = vpop.f32.mrf.mxu0
        %v5461 = vadd.f32 %v5292, %v5460
        %5462 = vmatmul.bf16.gmra.mxu0 %v2390
        %v5463 = vpop.f32.mrf.mxu0
        %v5464 = vadd.f32 %v5295, %v5463
        %v5465 = vpop.f32.mrf.mxu0
        %v5466 = vadd.f32 %v5297, %v5465
        %5467 = vmatmul.bf16.gmra.mxu0 %v2392
        %v5468 = vpop.f32.mrf.mxu0
        %v5469 = vadd.f32 %v5300, %v5468
        %v5470 = vpop.f32.mrf.mxu0
        %v5471 = vadd.f32 %v5302, %v5470
        %5472 = vmatmul.bf16.gmra.mxu0 %v2394
        %v5473 = vpop.f32.mrf.mxu0
        %v5474 = vadd.f32 %v5305, %v5473
        %v5475 = vpop.f32.mrf.mxu0
        %v5476 = vadd.f32 %v5307, %v5475
        %5477 = vmatmul.bf16.gmra.mxu0 %v2396
        %v5478 = vpop.f32.mrf.mxu0
        %v5479 = vadd.f32 %v5310, %v5478
        %v5480 = vpop.f32.mrf.mxu0
        %v5481 = vadd.f32 %v5312, %v5480
        %5482 = vmatmul.bf16.gmra.mxu0 %v2398
        %v5483 = vpop.f32.mrf.mxu0
        %v5484 = vadd.f32 %v5315, %v5483
        %v5485 = vpop.f32.mrf.mxu0
        %v5486 = vadd.f32 %v5317, %v5485
        %5487 = vmatmul.bf16.gmra.mxu0 %v2400
        %v5488 = vpop.f32.mrf.mxu0
        %v5489 = vadd.f32 %v5320, %v5488
        %v5490 = vpop.f32.mrf.mxu0
        %v5491 = vadd.f32 %v5322, %v5490
        %5492 = vmatmul.bf16.gmra.mxu0 %v2402
        %v5493 = vpop.f32.mrf.mxu0
        %v5494 = vadd.f32 %v5325, %v5493
        %v5495 = vpop.f32.mrf.mxu0
        %v5496 = vadd.f32 %v5327, %v5495
        %5497 = vmatmul.bf16.gmra.mxu0 %v2404
        %v5498 = vpop.f32.mrf.mxu0
        %v5499 = vadd.f32 %v5330, %v5498
        %v5500 = vpop.f32.mrf.mxu0
        %v5501 = vadd.f32 %v5332, %v5500
        %5502 = vmatmul.bf16.gmra.mxu0 %v2406
        %v5503 = vpop.f32.mrf.mxu0
        %v5504 = vadd.f32 %v5335, %v5503
        %v5505 = vpop.f32.mrf.mxu0
        %v5506 = vadd.f32 %v5337, %v5505
        %5507 = vmatmul.bf16.gmra.mxu0 %v2408
        %v5508 = vpop.f32.mrf.mxu0
        %v5509 = vadd.f32 %v5340, %v5508
        %v5510 = vpop.f32.mrf.mxu0
        %v5511 = vadd.f32 %v5342, %v5510
        %5512 = vmatmul.bf16.gmra.mxu0 %v2410
        %v5513 = vpop.f32.mrf.mxu0
        %v5514 = vadd.f32 %v5345, %v5513
        %v5515 = vpop.f32.mrf.mxu0
        %v5516 = vadd.f32 %v5347, %v5515
        %5517 = vmatmul.bf16.gmra.mxu0 %v2412
        %v5518 = vpop.f32.mrf.mxu0
        %v5519 = vadd.f32 %v5350, %v5518
        %v5520 = vpop.f32.mrf.mxu0
        %v5521 = vadd.f32 %v5352, %v5520
        %5522 = vmatmul.bf16.gmra.mxu0 %v2414
        %v5523 = vpop.f32.mrf.mxu0
        %v5524 = vadd.f32 %v5355, %v5523
        %v5525 = vpop.f32.mrf.mxu0
        %v5526 = vadd.f32 %v5357, %v5525
        %5527 = vmatmul.bf16.gmra.mxu0 %v2416
        %v5528 = vpop.f32.mrf.mxu0
        %v5529 = vadd.f32 %v5360, %v5528
        %v5530 = vpop.f32.mrf.mxu0
        %v5531 = vadd.f32 %v5362, %v5530
        %5532 = vmatmul.bf16.gmra.mxu0 %v2418
        %v5533 = vpop.f32.mrf.mxu0
        %v5534 = vadd.f32 %v5365, %v5533
        %v5535 = vpop.f32.mrf.mxu0
        %v5536 = vadd.f32 %v5367, %v5535
        %5537 = vmatmul.bf16.gmra.mxu0 %v2420
        %v5538 = vpop.f32.mrf.mxu0
        %v5539 = vadd.f32 %v5370, %v5538
        %v5540 = vpop.f32.mrf.mxu0
        %v5541 = vadd.f32 %v5372, %v5540
        %5542 = vmatmul.bf16.gmra.mxu0 %v2422
        %v5543 = vpop.f32.mrf.mxu0
        %v5544 = vadd.f32 %v5375, %v5543
        %v5545 = vpop.f32.mrf.mxu0
        %v5546 = vadd.f32 %v5377, %v5545
        %5547 = vmatmul.bf16.gmra.mxu0 %v2424
        %v5548 = vpop.f32.mrf.mxu0
        %v5549 = vadd.f32 %v5380, %v5548
        %v5550 = vpop.f32.mrf.mxu0
        %v5551 = vadd.f32 %v5382, %v5550
        %5552 = vmatmul.bf16.gmra.mxu0 %v2426
        %v5553 = vpop.f32.mrf.mxu0
        %v5554 = vadd.f32 %v5385, %v5553
        %v5555 = vpop.f32.mrf.mxu0
        %v5556 = vadd.f32 %v5387, %v5555
        %5557 = vmatmul.bf16.gmra.mxu0 %v2428
        %v5558 = vpop.f32.mrf.mxu0
        %v5559 = vadd.f32 %v5390, %v5558
        %v5560 = vpop.f32.mrf.mxu0
        %v5561 = vadd.f32 %v5392, %v5560
        %5562 = vdwg.mxu0
        %5563 = vmatpush.bf16.msra.mxu0 %v3004
        %5564 = vmatpush.bf16.msra.mxu0 %v2996
        %5565 = vmatpush.bf16.msra.mxu0 %v2988
        %5566 = vmatpush.bf16.msra.mxu0 %v2980
        %5567 = vmatpush.bf16.msra.mxu0 %v2972
        %5568 = vmatpush.bf16.msra.mxu0 %v2964
        %5569 = vmatpush.bf16.msra.mxu0 %v2956
        %5570 = vmatpush.bf16.msra.mxu0 %v2948
        %5571 = vmatmul.bf16.gmra.mxu0 %v2365
        %v5572 = vpop.f32.mrf.mxu0
        %v5573 = vadd.f32 0.0, %v5572
        %v5574 = vpop.f32.mrf.mxu0
        %v5575 = vadd.f32 0.0, %v5574
        %5576 = vmatmul.bf16.gmra.mxu0 %v2367
        %v5577 = vpop.f32.mrf.mxu0
        %v5578 = vadd.f32 0.0, %v5577
        %v5579 = vpop.f32.mrf.mxu0
        %v5580 = vadd.f32 0.0, %v5579
        %5581 = vmatmul.bf16.gmra.mxu0 %v2369
        %v5582 = vpop.f32.mrf.mxu0
        %v5583 = vadd.f32 0.0, %v5582
        %v5584 = vpop.f32.mrf.mxu0
        %v5585 = vadd.f32 0.0, %v5584
        %5586 = vmatmul.bf16.gmra.mxu0 %v2371
        %v5587 = vpop.f32.mrf.mxu0
        %v5588 = vadd.f32 0.0, %v5587
        %v5589 = vpop.f32.mrf.mxu0
        %v5590 = vadd.f32 0.0, %v5589
        %5591 = vmatmul.bf16.gmra.mxu0 %v2373
        %v5592 = vpop.f32.mrf.mxu0
        %v5593 = vadd.f32 0.0, %v5592
        %v5594 = vpop.f32.mrf.mxu0
        %v5595 = vadd.f32 0.0, %v5594
        %5596 = vmatmul.bf16.gmra.mxu0 %v2375
        %v5597 = vpop.f32.mrf.mxu0
        %v5598 = vadd.f32 0.0, %v5597
        %v5599 = vpop.f32.mrf.mxu0
        %v5600 = vadd.f32 0.0, %v5599
        %5601 = vmatmul.bf16.gmra.mxu0 %v2377
        %v5602 = vpop.f32.mrf.mxu0
        %v5603 = vadd.f32 0.0, %v5602
        %v5604 = vpop.f32.mrf.mxu0
        %v5605 = vadd.f32 0.0, %v5604
        %5606 = vmatmul.bf16.gmra.mxu0 %v2379
        %v5607 = vpop.f32.mrf.mxu0
        %v5608 = vadd.f32 0.0, %v5607
        %v5609 = vpop.f32.mrf.mxu0
        %v5610 = vadd.f32 0.0, %v5609
        %5611 = vmatmul.bf16.gmra.mxu0 %v2381
        %v5612 = vpop.f32.mrf.mxu0
        %v5613 = vadd.f32 0.0, %v5612
        %v5614 = vpop.f32.mrf.mxu0
        %v5615 = vadd.f32 0.0, %v5614
        %5616 = vmatmul.bf16.gmra.mxu0 %v2383
        %v5617 = vpop.f32.mrf.mxu0
        %v5618 = vadd.f32 0.0, %v5617
        %v5619 = vpop.f32.mrf.mxu0
        %v5620 = vadd.f32 0.0, %v5619
        %5621 = vmatmul.bf16.gmra.mxu0 %v2385
        %v5622 = vpop.f32.mrf.mxu0
        %v5623 = vadd.f32 0.0, %v5622
        %v5624 = vpop.f32.mrf.mxu0
        %v5625 = vadd.f32 0.0, %v5624
        %5626 = vmatmul.bf16.gmra.mxu0 %v2387
        %v5627 = vpop.f32.mrf.mxu0
        %v5628 = vadd.f32 0.0, %v5627
        %v5629 = vpop.f32.mrf.mxu0
        %v5630 = vadd.f32 0.0, %v5629
        %5631 = vmatmul.bf16.gmra.mxu0 %v2389
        %v5632 = vpop.f32.mrf.mxu0
        %v5633 = vadd.f32 0.0, %v5632
        %v5634 = vpop.f32.mrf.mxu0
        %v5635 = vadd.f32 0.0, %v5634
        %5636 = vmatmul.bf16.gmra.mxu0 %v2391
        %v5637 = vpop.f32.mrf.mxu0
        %v5638 = vadd.f32 0.0, %v5637
        %v5639 = vpop.f32.mrf.mxu0
        %v5640 = vadd.f32 0.0, %v5639
        %5641 = vmatmul.bf16.gmra.mxu0 %v2393
        %v5642 = vpop.f32.mrf.mxu0
        %v5643 = vadd.f32 0.0, %v5642
        %v5644 = vpop.f32.mrf.mxu0
        %v5645 = vadd.f32 0.0, %v5644
        %5646 = vmatmul.bf16.gmra.mxu0 %v2395
        %v5647 = vpop.f32.mrf.mxu0
        %v5648 = vadd.f32 0.0, %v5647
        %v5649 = vpop.f32.mrf.mxu0
        %v5650 = vadd.f32 0.0, %v5649
        %5651 = vmatmul.bf16.gmra.mxu0 %v2397
        %v5652 = vpop.f32.mrf.mxu0
        %v5653 = vadd.f32 0.0, %v5652
        %v5654 = vpop.f32.mrf.mxu0
        %v5655 = vadd.f32 0.0, %v5654
        %5656 = vmatmul.bf16.gmra.mxu0 %v2399
        %v5657 = vpop.f32.mrf.mxu0
        %v5658 = vadd.f32 0.0, %v5657
        %v5659 = vpop.f32.mrf.mxu0
        %v5660 = vadd.f32 0.0, %v5659
        %5661 = vmatmul.bf16.gmra.mxu0 %v2401
        %v5662 = vpop.f32.mrf.mxu0
        %v5663 = vadd.f32 0.0, %v5662
        %v5664 = vpop.f32.mrf.mxu0
        %v5665 = vadd.f32 0.0, %v5664
        %5666 = vmatmul.bf16.gmra.mxu0 %v2403
        %v5667 = vpop.f32.mrf.mxu0
        %v5668 = vadd.f32 0.0, %v5667
        %v5669 = vpop.f32.mrf.mxu0
        %v5670 = vadd.f32 0.0, %v5669
        %5671 = vmatmul.bf16.gmra.mxu0 %v2405
        %v5672 = vpop.f32.mrf.mxu0
        %v5673 = vadd.f32 0.0, %v5672
        %v5674 = vpop.f32.mrf.mxu0
        %v5675 = vadd.f32 0.0, %v5674
        %5676 = vmatmul.bf16.gmra.mxu0 %v2407
        %v5677 = vpop.f32.mrf.mxu0
        %v5678 = vadd.f32 0.0, %v5677
        %v5679 = vpop.f32.mrf.mxu0
        %v5680 = vadd.f32 0.0, %v5679
        %5681 = vmatmul.bf16.gmra.mxu0 %v2409
        %v5682 = vpop.f32.mrf.mxu0
        %v5683 = vadd.f32 0.0, %v5682
        %v5684 = vpop.f32.mrf.mxu0
        %v5685 = vadd.f32 0.0, %v5684
        %5686 = vmatmul.bf16.gmra.mxu0 %v2411
        %v5687 = vpop.f32.mrf.mxu0
        %v5688 = vadd.f32 0.0, %v5687
        %v5689 = vpop.f32.mrf.mxu0
        %v5690 = vadd.f32 0.0, %v5689
        %5691 = vmatmul.bf16.gmra.mxu0 %v2413
        %v5692 = vpop.f32.mrf.mxu0
        %v5693 = vadd.f32 0.0, %v5692
        %v5694 = vpop.f32.mrf.mxu0
        %v5695 = vadd.f32 0.0, %v5694
        %5696 = vmatmul.bf16.gmra.mxu0 %v2415
        %v5697 = vpop.f32.mrf.mxu0
        %v5698 = vadd.f32 0.0, %v5697
        %v5699 = vpop.f32.mrf.mxu0
        %v5700 = vadd.f32 0.0, %v5699
        %5701 = vmatmul.bf16.gmra.mxu0 %v2417
        %v5702 = vpop.f32.mrf.mxu0
        %v5703 = vadd.f32 0.0, %v5702
        %v5704 = vpop.f32.mrf.mxu0
        %v5705 = vadd.f32 0.0, %v5704
        %5706 = vmatmul.bf16.gmra.mxu0 %v2419
        %v5707 = vpop.f32.mrf.mxu0
        %v5708 = vadd.f32 0.0, %v5707
        %v5709 = vpop.f32.mrf.mxu0
        %v5710 = vadd.f32 0.0, %v5709
        %5711 = vmatmul.bf16.gmra.mxu0 %v2421
        %v5712 = vpop.f32.mrf.mxu0
        %v5713 = vadd.f32 0.0, %v5712
        %v5714 = vpop.f32.mrf.mxu0
        %v5715 = vadd.f32 0.0, %v5714
        %5716 = vmatmul.bf16.gmra.mxu0 %v2423
        %v5717 = vpop.f32.mrf.mxu0
        %v5718 = vadd.f32 0.0, %v5717
        %v5719 = vpop.f32.mrf.mxu0
        %v5720 = vadd.f32 0.0, %v5719
        %5721 = vmatmul.bf16.gmra.mxu0 %v2425
        %v5722 = vpop.f32.mrf.mxu0
        %v5723 = vadd.f32 0.0, %v5722
        %v5724 = vpop.f32.mrf.mxu0
        %v5725 = vadd.f32 0.0, %v5724
        %5726 = vmatmul.bf16.gmra.mxu0 %v2427
        %v5727 = vpop.f32.mrf.mxu0
        %v5728 = vadd.f32 0.0, %v5727
        %v5729 = vpop.f32.mrf.mxu0
        %v5730 = vadd.f32 0.0, %v5729
        %5731 = vdwg.mxu0
        %5732 = vmatpush.bf16.msra.mxu0 %v3068
        %5733 = vmatpush.bf16.msra.mxu0 %v3060
        %5734 = vmatpush.bf16.msra.mxu0 %v3052
        %5735 = vmatpush.bf16.msra.mxu0 %v3044
        %5736 = vmatpush.bf16.msra.mxu0 %v3036
        %5737 = vmatpush.bf16.msra.mxu0 %v3028
        %5738 = vmatpush.bf16.msra.mxu0 %v3020
        %5739 = vmatpush.bf16.msra.mxu0 %v3012
        %5740 = vmatmul.bf16.gmra.mxu0 %v2366
        %v5741 = vpop.f32.mrf.mxu0
        %v5742 = vadd.f32 %v5573, %v5741
        %v5743 = vpop.f32.mrf.mxu0
        %v5744 = vadd.f32 %v5575, %v5743
        %5745 = vmatmul.bf16.gmra.mxu0 %v2368
        %v5746 = vpop.f32.mrf.mxu0
        %v5747 = vadd.f32 %v5578, %v5746
        %v5748 = vpop.f32.mrf.mxu0
        %v5749 = vadd.f32 %v5580, %v5748
        %5750 = vmatmul.bf16.gmra.mxu0 %v2370
        %v5751 = vpop.f32.mrf.mxu0
        %v5752 = vadd.f32 %v5583, %v5751
        %v5753 = vpop.f32.mrf.mxu0
        %v5754 = vadd.f32 %v5585, %v5753
        %5755 = vmatmul.bf16.gmra.mxu0 %v2372
        %v5756 = vpop.f32.mrf.mxu0
        %v5757 = vadd.f32 %v5588, %v5756
        %v5758 = vpop.f32.mrf.mxu0
        %v5759 = vadd.f32 %v5590, %v5758
        %5760 = vmatmul.bf16.gmra.mxu0 %v2374
        %v5761 = vpop.f32.mrf.mxu0
        %v5762 = vadd.f32 %v5593, %v5761
        %v5763 = vpop.f32.mrf.mxu0
        %v5764 = vadd.f32 %v5595, %v5763
        %5765 = vmatmul.bf16.gmra.mxu0 %v2376
        %v5766 = vpop.f32.mrf.mxu0
        %v5767 = vadd.f32 %v5598, %v5766
        %v5768 = vpop.f32.mrf.mxu0
        %v5769 = vadd.f32 %v5600, %v5768
        %5770 = vmatmul.bf16.gmra.mxu0 %v2378
        %v5771 = vpop.f32.mrf.mxu0
        %v5772 = vadd.f32 %v5603, %v5771
        %v5773 = vpop.f32.mrf.mxu0
        %v5774 = vadd.f32 %v5605, %v5773
        %5775 = vmatmul.bf16.gmra.mxu0 %v2380
        %v5776 = vpop.f32.mrf.mxu0
        %v5777 = vadd.f32 %v5608, %v5776
        %v5778 = vpop.f32.mrf.mxu0
        %v5779 = vadd.f32 %v5610, %v5778
        %5780 = vmatmul.bf16.gmra.mxu0 %v2382
        %v5781 = vpop.f32.mrf.mxu0
        %v5782 = vadd.f32 %v5613, %v5781
        %v5783 = vpop.f32.mrf.mxu0
        %v5784 = vadd.f32 %v5615, %v5783
        %5785 = vmatmul.bf16.gmra.mxu0 %v2384
        %v5786 = vpop.f32.mrf.mxu0
        %v5787 = vadd.f32 %v5618, %v5786
        %v5788 = vpop.f32.mrf.mxu0
        %v5789 = vadd.f32 %v5620, %v5788
        %5790 = vmatmul.bf16.gmra.mxu0 %v2386
        %v5791 = vpop.f32.mrf.mxu0
        %v5792 = vadd.f32 %v5623, %v5791
        %v5793 = vpop.f32.mrf.mxu0
        %v5794 = vadd.f32 %v5625, %v5793
        %5795 = vmatmul.bf16.gmra.mxu0 %v2388
        %v5796 = vpop.f32.mrf.mxu0
        %v5797 = vadd.f32 %v5628, %v5796
        %v5798 = vpop.f32.mrf.mxu0
        %v5799 = vadd.f32 %v5630, %v5798
        %5800 = vmatmul.bf16.gmra.mxu0 %v2390
        %v5801 = vpop.f32.mrf.mxu0
        %v5802 = vadd.f32 %v5633, %v5801
        %v5803 = vpop.f32.mrf.mxu0
        %v5804 = vadd.f32 %v5635, %v5803
        %5805 = vmatmul.bf16.gmra.mxu0 %v2392
        %v5806 = vpop.f32.mrf.mxu0
        %v5807 = vadd.f32 %v5638, %v5806
        %v5808 = vpop.f32.mrf.mxu0
        %v5809 = vadd.f32 %v5640, %v5808
        %5810 = vmatmul.bf16.gmra.mxu0 %v2394
        %v5811 = vpop.f32.mrf.mxu0
        %v5812 = vadd.f32 %v5643, %v5811
        %v5813 = vpop.f32.mrf.mxu0
        %v5814 = vadd.f32 %v5645, %v5813
        %5815 = vmatmul.bf16.gmra.mxu0 %v2396
        %v5816 = vpop.f32.mrf.mxu0
        %v5817 = vadd.f32 %v5648, %v5816
        %v5818 = vpop.f32.mrf.mxu0
        %v5819 = vadd.f32 %v5650, %v5818
        %5820 = vmatmul.bf16.gmra.mxu0 %v2398
        %v5821 = vpop.f32.mrf.mxu0
        %v5822 = vadd.f32 %v5653, %v5821
        %v5823 = vpop.f32.mrf.mxu0
        %v5824 = vadd.f32 %v5655, %v5823
        %5825 = vmatmul.bf16.gmra.mxu0 %v2400
        %v5826 = vpop.f32.mrf.mxu0
        %v5827 = vadd.f32 %v5658, %v5826
        %v5828 = vpop.f32.mrf.mxu0
        %v5829 = vadd.f32 %v5660, %v5828
        %5830 = vmatmul.bf16.gmra.mxu0 %v2402
        %v5831 = vpop.f32.mrf.mxu0
        %v5832 = vadd.f32 %v5663, %v5831
        %v5833 = vpop.f32.mrf.mxu0
        %v5834 = vadd.f32 %v5665, %v5833
        %5835 = vmatmul.bf16.gmra.mxu0 %v2404
        %v5836 = vpop.f32.mrf.mxu0
        %v5837 = vadd.f32 %v5668, %v5836
        %v5838 = vpop.f32.mrf.mxu0
        %v5839 = vadd.f32 %v5670, %v5838
        %5840 = vmatmul.bf16.gmra.mxu0 %v2406
        %v5841 = vpop.f32.mrf.mxu0
        %v5842 = vadd.f32 %v5673, %v5841
        %v5843 = vpop.f32.mrf.mxu0
        %v5844 = vadd.f32 %v5675, %v5843
        %5845 = vmatmul.bf16.gmra.mxu0 %v2408
        %v5846 = vpop.f32.mrf.mxu0
        %v5847 = vadd.f32 %v5678, %v5846
        %v5848 = vpop.f32.mrf.mxu0
        %v5849 = vadd.f32 %v5680, %v5848
        %5850 = vmatmul.bf16.gmra.mxu0 %v2410
        %v5851 = vpop.f32.mrf.mxu0
        %v5852 = vadd.f32 %v5683, %v5851
        %v5853 = vpop.f32.mrf.mxu0
        %v5854 = vadd.f32 %v5685, %v5853
        %5855 = vmatmul.bf16.gmra.mxu0 %v2412
        %v5856 = vpop.f32.mrf.mxu0
        %v5857 = vadd.f32 %v5688, %v5856
        %v5858 = vpop.f32.mrf.mxu0
        %v5859 = vadd.f32 %v5690, %v5858
        %5860 = vmatmul.bf16.gmra.mxu0 %v2414
        %v5861 = vpop.f32.mrf.mxu0
        %v5862 = vadd.f32 %v5693, %v5861
        %v5863 = vpop.f32.mrf.mxu0
        %v5864 = vadd.f32 %v5695, %v5863
        %5865 = vmatmul.bf16.gmra.mxu0 %v2416
        %v5866 = vpop.f32.mrf.mxu0
        %v5867 = vadd.f32 %v5698, %v5866
        %v5868 = vpop.f32.mrf.mxu0
        %v5869 = vadd.f32 %v5700, %v5868
        %5870 = vmatmul.bf16.gmra.mxu0 %v2418
        %v5871 = vpop.f32.mrf.mxu0
        %v5872 = vadd.f32 %v5703, %v5871
        %v5873 = vpop.f32.mrf.mxu0
        %v5874 = vadd.f32 %v5705, %v5873
        %5875 = vmatmul.bf16.gmra.mxu0 %v2420
        %v5876 = vpop.f32.mrf.mxu0
        %v5877 = vadd.f32 %v5708, %v5876
        %v5878 = vpop.f32.mrf.mxu0
        %v5879 = vadd.f32 %v5710, %v5878
        %5880 = vmatmul.bf16.gmra.mxu0 %v2422
        %v5881 = vpop.f32.mrf.mxu0
        %v5882 = vadd.f32 %v5713, %v5881
        %v5883 = vpop.f32.mrf.mxu0
        %v5884 = vadd.f32 %v5715, %v5883
        %5885 = vmatmul.bf16.gmra.mxu0 %v2424
        %v5886 = vpop.f32.mrf.mxu0
        %v5887 = vadd.f32 %v5718, %v5886
        %v5888 = vpop.f32.mrf.mxu0
        %v5889 = vadd.f32 %v5720, %v5888
        %5890 = vmatmul.bf16.gmra.mxu0 %v2426
        %v5891 = vpop.f32.mrf.mxu0
        %v5892 = vadd.f32 %v5723, %v5891
        %v5893 = vpop.f32.mrf.mxu0
        %v5894 = vadd.f32 %v5725, %v5893
        %5895 = vmatmul.bf16.gmra.mxu0 %v2428
        %v5896 = vpop.f32.mrf.mxu0
        %v5897 = vadd.f32 %v5728, %v5896
        %v5898 = vpop.f32.mrf.mxu0
        %v5899 = vadd.f32 %v5730, %v5898
        %5900 = vdwg.mxu0
        %v5901 = vmax.f32 %v3376, %v3378
        %v5902 = vmax.f32 %v5901, %v3381
        %v5903 = vmax.f32 %v5902, %v3383
        %v5904 = vmax.f32 %v5903, %v3386
        %v5905 = vmax.f32 %v5904, %v3388
        %v5906 = vmax.f32 %v5905, %v3391
        %v5907 = vmax.f32 %v5906, %v3393
        %v5908 = vmax.f32 %v5907, %v3396
        %v5909 = vmax.f32 %v5908, %v3398
        %v5910 = vmax.f32 %v5909, %v3401
        %v5911 = vmax.f32 %v5910, %v3403
        %v5912 = vmax.f32 %v5911, %v3406
        %v5913 = vmax.f32 %v5912, %v3408
        %v5914 = vmax.f32 %v5913, %v3411
        %v5915 = vmax.f32 %v5914, %v3413
        %v5916 = vmax.f32 %v5915, %v3416
        %v5917 = vmax.f32 %v5916, %v3418
        %v5918 = vmax.f32 %v5917, %v3421
        %v5919 = vmax.f32 %v5918, %v3423
        %v5920 = vmax.f32 %v5919, %v3426
        %v5921 = vmax.f32 %v5920, %v3428
        %v5922 = vmax.f32 %v5921, %v3431
        %v5923 = vmax.f32 %v5922, %v3433
        %v5924 = vmax.f32 %v5923, %v3436
        %v5925 = vmax.f32 %v5924, %v3438
        %v5926 = vmax.f32 %v5925, %v3441
        %v5927 = vmax.f32 %v5926, %v3443
        %v5928 = vmax.f32 %v5927, %v3446
        %v5929 = vmax.f32 %v5928, %v3448
        %v5930 = vmax.f32 %v5929, %v3451
        %v5931 = vmax.f32 %v5930, %v3453
        %v5932 = vmax.f32 %v5931, %v3456
        %v5933 = vmax.f32 %v5932, %v3458
        %v5934 = vmax.f32 %v5933, %v3461
        %v5935 = vmax.f32 %v5934, %v3463
        %v5936 = vmax.f32 %v5935, %v3466
        %v5937 = vmax.f32 %v5936, %v3468
        %v5938 = vmax.f32 %v5937, %v3471
        %v5939 = vmax.f32 %v5938, %v3473
        %v5940 = vmax.f32 %v5939, %v3476
        %v5941 = vmax.f32 %v5940, %v3478
        %v5942 = vmax.f32 %v5941, %v3481
        %v5943 = vmax.f32 %v5942, %v3483
        %v5944 = vmax.f32 %v5943, %v3486
        %v5945 = vmax.f32 %v5944, %v3488
        %v5946 = vmax.f32 %v5945, %v3491
        %v5947 = vmax.f32 %v5946, %v3493
        %v5948 = vmax.f32 %v5947, %v3496
        %v5949 = vmax.f32 %v5948, %v3498
        %v5950 = vmax.f32 %v5949, %v3501
        %v5951 = vmax.f32 %v5950, %v3503
        %v5952 = vmax.f32 %v5951, %v3506
        %v5953 = vmax.f32 %v5952, %v3508
        %v5954 = vmax.f32 %v5953, %v3511
        %v5955 = vmax.f32 %v5954, %v3513
        %v5956 = vmax.f32 %v5955, %v3516
        %v5957 = vmax.f32 %v5956, %v3518
        %v5958 = vmax.f32 %v5957, %v3521
        %v5959 = vmax.f32 %v5958, %v3523
        %v5960 = vmax.f32 %v5959, %v3526
        %v5961 = vmax.f32 %v5960, %v3528
        %v5962 = vmax.f32 %v5961, %v3531
        %v5963 = vmax.f32 %v5962, %v3533
        %v5964 = vmax.f32 %v3714, %v3716
        %v5965 = vmax.f32 %v5964, %v3719
        %v5966 = vmax.f32 %v5965, %v3721
        %v5967 = vmax.f32 %v5966, %v3724
        %v5968 = vmax.f32 %v5967, %v3726
        %v5969 = vmax.f32 %v5968, %v3729
        %v5970 = vmax.f32 %v5969, %v3731
        %v5971 = vmax.f32 %v5970, %v3734
        %v5972 = vmax.f32 %v5971, %v3736
        %v5973 = vmax.f32 %v5972, %v3739
        %v5974 = vmax.f32 %v5973, %v3741
        %v5975 = vmax.f32 %v5974, %v3744
        %v5976 = vmax.f32 %v5975, %v3746
        %v5977 = vmax.f32 %v5976, %v3749
        %v5978 = vmax.f32 %v5977, %v3751
        %v5979 = vmax.f32 %v5978, %v3754
        %v5980 = vmax.f32 %v5979, %v3756
        %v5981 = vmax.f32 %v5980, %v3759
        %v5982 = vmax.f32 %v5981, %v3761
        %v5983 = vmax.f32 %v5982, %v3764
        %v5984 = vmax.f32 %v5983, %v3766
        %v5985 = vmax.f32 %v5984, %v3769
        %v5986 = vmax.f32 %v5985, %v3771
        %v5987 = vmax.f32 %v5986, %v3774
        %v5988 = vmax.f32 %v5987, %v3776
        %v5989 = vmax.f32 %v5988, %v3779
        %v5990 = vmax.f32 %v5989, %v3781
        %v5991 = vmax.f32 %v5990, %v3784
        %v5992 = vmax.f32 %v5991, %v3786
        %v5993 = vmax.f32 %v5992, %v3789
        %v5994 = vmax.f32 %v5993, %v3791
        %v5995 = vmax.f32 %v5994, %v3794
        %v5996 = vmax.f32 %v5995, %v3796
        %v5997 = vmax.f32 %v5996, %v3799
        %v5998 = vmax.f32 %v5997, %v3801
        %v5999 = vmax.f32 %v5998, %v3804
        %v6000 = vmax.f32 %v5999, %v3806
        %v6001 = vmax.f32 %v6000, %v3809
        %v6002 = vmax.f32 %v6001, %v3811
        %v6003 = vmax.f32 %v6002, %v3814
        %v6004 = vmax.f32 %v6003, %v3816
        %v6005 = vmax.f32 %v6004, %v3819
        %v6006 = vmax.f32 %v6005, %v3821
        %v6007 = vmax.f32 %v6006, %v3824
        %v6008 = vmax.f32 %v6007, %v3826
        %v6009 = vmax.f32 %v6008, %v3829
        %v6010 = vmax.f32 %v6009, %v3831
        %v6011 = vmax.f32 %v6010, %v3834
        %v6012 = vmax.f32 %v6011, %v3836
        %v6013 = vmax.f32 %v6012, %v3839
        %v6014 = vmax.f32 %v6013, %v3841
        %v6015 = vmax.f32 %v6014, %v3844
        %v6016 = vmax.f32 %v6015, %v3846
        %v6017 = vmax.f32 %v6016, %v3849
        %v6018 = vmax.f32 %v6017, %v3851
        %v6019 = vmax.f32 %v6018, %v3854
        %v6020 = vmax.f32 %v6019, %v3856
        %v6021 = vmax.f32 %v6020, %v3859
        %v6022 = vmax.f32 %v6021, %v3861
        %v6023 = vmax.f32 %v6022, %v3864
        %v6024 = vmax.f32 %v6023, %v3866
        %v6025 = vmax.f32 %v6024, %v3869
        %v6026 = vmax.f32 %v6025, %v3871
        %v6027 = vmax.f32 %v4052, %v4054
        %v6028 = vmax.f32 %v6027, %v4057
        %v6029 = vmax.f32 %v6028, %v4059
        %v6030 = vmax.f32 %v6029, %v4062
        %v6031 = vmax.f32 %v6030, %v4064
        %v6032 = vmax.f32 %v6031, %v4067
        %v6033 = vmax.f32 %v6032, %v4069
        %v6034 = vmax.f32 %v6033, %v4072
        %v6035 = vmax.f32 %v6034, %v4074
        %v6036 = vmax.f32 %v6035, %v4077
        %v6037 = vmax.f32 %v6036, %v4079
        %v6038 = vmax.f32 %v6037, %v4082
        %v6039 = vmax.f32 %v6038, %v4084
        %v6040 = vmax.f32 %v6039, %v4087
        %v6041 = vmax.f32 %v6040, %v4089
        %v6042 = vmax.f32 %v6041, %v4092
        %v6043 = vmax.f32 %v6042, %v4094
        %v6044 = vmax.f32 %v6043, %v4097
        %v6045 = vmax.f32 %v6044, %v4099
        %v6046 = vmax.f32 %v6045, %v4102
        %v6047 = vmax.f32 %v6046, %v4104
        %v6048 = vmax.f32 %v6047, %v4107
        %v6049 = vmax.f32 %v6048, %v4109
        %v6050 = vmax.f32 %v6049, %v4112
        %v6051 = vmax.f32 %v6050, %v4114
        %v6052 = vmax.f32 %v6051, %v4117
        %v6053 = vmax.f32 %v6052, %v4119
        %v6054 = vmax.f32 %v6053, %v4122
        %v6055 = vmax.f32 %v6054, %v4124
        %v6056 = vmax.f32 %v6055, %v4127
        %v6057 = vmax.f32 %v6056, %v4129
        %v6058 = vmax.f32 %v6057, %v4132
        %v6059 = vmax.f32 %v6058, %v4134
        %v6060 = vmax.f32 %v6059, %v4137
        %v6061 = vmax.f32 %v6060, %v4139
        %v6062 = vmax.f32 %v6061, %v4142
        %v6063 = vmax.f32 %v6062, %v4144
        %v6064 = vmax.f32 %v6063, %v4147
        %v6065 = vmax.f32 %v6064, %v4149
        %v6066 = vmax.f32 %v6065, %v4152
        %v6067 = vmax.f32 %v6066, %v4154
        %v6068 = vmax.f32 %v6067, %v4157
        %v6069 = vmax.f32 %v6068, %v4159
        %v6070 = vmax.f32 %v6069, %v4162
        %v6071 = vmax.f32 %v6070, %v4164
        %v6072 = vmax.f32 %v6071, %v4167
        %v6073 = vmax.f32 %v6072, %v4169
        %v6074 = vmax.f32 %v6073, %v4172
        %v6075 = vmax.f32 %v6074, %v4174
        %v6076 = vmax.f32 %v6075, %v4177
        %v6077 = vmax.f32 %v6076, %v4179
        %v6078 = vmax.f32 %v6077, %v4182
        %v6079 = vmax.f32 %v6078, %v4184
        %v6080 = vmax.f32 %v6079, %v4187
        %v6081 = vmax.f32 %v6080, %v4189
        %v6082 = vmax.f32 %v6081, %v4192
        %v6083 = vmax.f32 %v6082, %v4194
        %v6084 = vmax.f32 %v6083, %v4197
        %v6085 = vmax.f32 %v6084, %v4199
        %v6086 = vmax.f32 %v6085, %v4202
        %v6087 = vmax.f32 %v6086, %v4204
        %v6088 = vmax.f32 %v6087, %v4207
        %v6089 = vmax.f32 %v6088, %v4209
        %v6090 = vmax.f32 %v4390, %v4392
        %v6091 = vmax.f32 %v6090, %v4395
        %v6092 = vmax.f32 %v6091, %v4397
        %v6093 = vmax.f32 %v6092, %v4400
        %v6094 = vmax.f32 %v6093, %v4402
        %v6095 = vmax.f32 %v6094, %v4405
        %v6096 = vmax.f32 %v6095, %v4407
        %v6097 = vmax.f32 %v6096, %v4410
        %v6098 = vmax.f32 %v6097, %v4412
        %v6099 = vmax.f32 %v6098, %v4415
        %v6100 = vmax.f32 %v6099, %v4417
        %v6101 = vmax.f32 %v6100, %v4420
        %v6102 = vmax.f32 %v6101, %v4422
        %v6103 = vmax.f32 %v6102, %v4425
        %v6104 = vmax.f32 %v6103, %v4427
        %v6105 = vmax.f32 %v6104, %v4430
        %v6106 = vmax.f32 %v6105, %v4432
        %v6107 = vmax.f32 %v6106, %v4435
        %v6108 = vmax.f32 %v6107, %v4437
        %v6109 = vmax.f32 %v6108, %v4440
        %v6110 = vmax.f32 %v6109, %v4442
        %v6111 = vmax.f32 %v6110, %v4445
        %v6112 = vmax.f32 %v6111, %v4447
        %v6113 = vmax.f32 %v6112, %v4450
        %v6114 = vmax.f32 %v6113, %v4452
        %v6115 = vmax.f32 %v6114, %v4455
        %v6116 = vmax.f32 %v6115, %v4457
        %v6117 = vmax.f32 %v6116, %v4460
        %v6118 = vmax.f32 %v6117, %v4462
        %v6119 = vmax.f32 %v6118, %v4465
        %v6120 = vmax.f32 %v6119, %v4467
        %v6121 = vmax.f32 %v6120, %v4470
        %v6122 = vmax.f32 %v6121, %v4472
        %v6123 = vmax.f32 %v6122, %v4475
        %v6124 = vmax.f32 %v6123, %v4477
        %v6125 = vmax.f32 %v6124, %v4480
        %v6126 = vmax.f32 %v6125, %v4482
        %v6127 = vmax.f32 %v6126, %v4485
        %v6128 = vmax.f32 %v6127, %v4487
        %v6129 = vmax.f32 %v6128, %v4490
        %v6130 = vmax.f32 %v6129, %v4492
        %v6131 = vmax.f32 %v6130, %v4495
        %v6132 = vmax.f32 %v6131, %v4497
        %v6133 = vmax.f32 %v6132, %v4500
        %v6134 = vmax.f32 %v6133, %v4502
        %v6135 = vmax.f32 %v6134, %v4505
        %v6136 = vmax.f32 %v6135, %v4507
        %v6137 = vmax.f32 %v6136, %v4510
        %v6138 = vmax.f32 %v6137, %v4512
        %v6139 = vmax.f32 %v6138, %v4515
        %v6140 = vmax.f32 %v6139, %v4517
        %v6141 = vmax.f32 %v6140, %v4520
        %v6142 = vmax.f32 %v6141, %v4522
        %v6143 = vmax.f32 %v6142, %v4525
        %v6144 = vmax.f32 %v6143, %v4527
        %v6145 = vmax.f32 %v6144, %v4530
        %v6146 = vmax.f32 %v6145, %v4532
        %v6147 = vmax.f32 %v6146, %v4535
        %v6148 = vmax.f32 %v6147, %v4537
        %v6149 = vmax.f32 %v6148, %v4540
        %v6150 = vmax.f32 %v6149, %v4542
        %v6151 = vmax.f32 %v6150, %v4545
        %v6152 = vmax.f32 %v6151, %v4547
        %v6153 = vmax.f32 %v4728, %v4730
        %v6154 = vmax.f32 %v6153, %v4733
        %v6155 = vmax.f32 %v6154, %v4735
        %v6156 = vmax.f32 %v6155, %v4738
        %v6157 = vmax.f32 %v6156, %v4740
        %v6158 = vmax.f32 %v6157, %v4743
        %v6159 = vmax.f32 %v6158, %v4745
        %v6160 = vmax.f32 %v6159, %v4748
        %v6161 = vmax.f32 %v6160, %v4750
        %v6162 = vmax.f32 %v6161, %v4753
        %v6163 = vmax.f32 %v6162, %v4755
        %v6164 = vmax.f32 %v6163, %v4758
        %v6165 = vmax.f32 %v6164, %v4760
        %v6166 = vmax.f32 %v6165, %v4763
        %v6167 = vmax.f32 %v6166, %v4765
        %v6168 = vmax.f32 %v6167, %v4768
        %v6169 = vmax.f32 %v6168, %v4770
        %v6170 = vmax.f32 %v6169, %v4773
        %v6171 = vmax.f32 %v6170, %v4775
        %v6172 = vmax.f32 %v6171, %v4778
        %v6173 = vmax.f32 %v6172, %v4780
        %v6174 = vmax.f32 %v6173, %v4783
        %v6175 = vmax.f32 %v6174, %v4785
        %v6176 = vmax.f32 %v6175, %v4788
        %v6177 = vmax.f32 %v6176, %v4790
        %v6178 = vmax.f32 %v6177, %v4793
        %v6179 = vmax.f32 %v6178, %v4795
        %v6180 = vmax.f32 %v6179, %v4798
        %v6181 = vmax.f32 %v6180, %v4800
        %v6182 = vmax.f32 %v6181, %v4803
        %v6183 = vmax.f32 %v6182, %v4805
        %v6184 = vmax.f32 %v6183, %v4808
        %v6185 = vmax.f32 %v6184, %v4810
        %v6186 = vmax.f32 %v6185, %v4813
        %v6187 = vmax.f32 %v6186, %v4815
        %v6188 = vmax.f32 %v6187, %v4818
        %v6189 = vmax.f32 %v6188, %v4820
        %v6190 = vmax.f32 %v6189, %v4823
        %v6191 = vmax.f32 %v6190, %v4825
        %v6192 = vmax.f32 %v6191, %v4828
        %v6193 = vmax.f32 %v6192, %v4830
        %v6194 = vmax.f32 %v6193, %v4833
        %v6195 = vmax.f32 %v6194, %v4835
        %v6196 = vmax.f32 %v6195, %v4838
        %v6197 = vmax.f32 %v6196, %v4840
        %v6198 = vmax.f32 %v6197, %v4843
        %v6199 = vmax.f32 %v6198, %v4845
        %v6200 = vmax.f32 %v6199, %v4848
        %v6201 = vmax.f32 %v6200, %v4850
        %v6202 = vmax.f32 %v6201, %v4853
        %v6203 = vmax.f32 %v6202, %v4855
        %v6204 = vmax.f32 %v6203, %v4858
        %v6205 = vmax.f32 %v6204, %v4860
        %v6206 = vmax.f32 %v6205, %v4863
        %v6207 = vmax.f32 %v6206, %v4865
        %v6208 = vmax.f32 %v6207, %v4868
        %v6209 = vmax.f32 %v6208, %v4870
        %v6210 = vmax.f32 %v6209, %v4873
        %v6211 = vmax.f32 %v6210, %v4875
        %v6212 = vmax.f32 %v6211, %v4878
        %v6213 = vmax.f32 %v6212, %v4880
        %v6214 = vmax.f32 %v6213, %v4883
        %v6215 = vmax.f32 %v6214, %v4885
        %v6216 = vmax.f32 %v5066, %v5068
        %v6217 = vmax.f32 %v6216, %v5071
        %v6218 = vmax.f32 %v6217, %v5073
        %v6219 = vmax.f32 %v6218, %v5076
        %v6220 = vmax.f32 %v6219, %v5078
        %v6221 = vmax.f32 %v6220, %v5081
        %v6222 = vmax.f32 %v6221, %v5083
        %v6223 = vmax.f32 %v6222, %v5086
        %v6224 = vmax.f32 %v6223, %v5088
        %v6225 = vmax.f32 %v6224, %v5091
        %v6226 = vmax.f32 %v6225, %v5093
        %v6227 = vmax.f32 %v6226, %v5096
        %v6228 = vmax.f32 %v6227, %v5098
        %v6229 = vmax.f32 %v6228, %v5101
        %v6230 = vmax.f32 %v6229, %v5103
        %v6231 = vmax.f32 %v6230, %v5106
        %v6232 = vmax.f32 %v6231, %v5108
        %v6233 = vmax.f32 %v6232, %v5111
        %v6234 = vmax.f32 %v6233, %v5113
        %v6235 = vmax.f32 %v6234, %v5116
        %v6236 = vmax.f32 %v6235, %v5118
        %v6237 = vmax.f32 %v6236, %v5121
        %v6238 = vmax.f32 %v6237, %v5123
        %v6239 = vmax.f32 %v6238, %v5126
        %v6240 = vmax.f32 %v6239, %v5128
        %v6241 = vmax.f32 %v6240, %v5131
        %v6242 = vmax.f32 %v6241, %v5133
        %v6243 = vmax.f32 %v6242, %v5136
        %v6244 = vmax.f32 %v6243, %v5138
        %v6245 = vmax.f32 %v6244, %v5141
        %v6246 = vmax.f32 %v6245, %v5143
        %v6247 = vmax.f32 %v6246, %v5146
        %v6248 = vmax.f32 %v6247, %v5148
        %v6249 = vmax.f32 %v6248, %v5151
        %v6250 = vmax.f32 %v6249, %v5153
        %v6251 = vmax.f32 %v6250, %v5156
        %v6252 = vmax.f32 %v6251, %v5158
        %v6253 = vmax.f32 %v6252, %v5161
        %v6254 = vmax.f32 %v6253, %v5163
        %v6255 = vmax.f32 %v6254, %v5166
        %v6256 = vmax.f32 %v6255, %v5168
        %v6257 = vmax.f32 %v6256, %v5171
        %v6258 = vmax.f32 %v6257, %v5173
        %v6259 = vmax.f32 %v6258, %v5176
        %v6260 = vmax.f32 %v6259, %v5178
        %v6261 = vmax.f32 %v6260, %v5181
        %v6262 = vmax.f32 %v6261, %v5183
        %v6263 = vmax.f32 %v6262, %v5186
        %v6264 = vmax.f32 %v6263, %v5188
        %v6265 = vmax.f32 %v6264, %v5191
        %v6266 = vmax.f32 %v6265, %v5193
        %v6267 = vmax.f32 %v6266, %v5196
        %v6268 = vmax.f32 %v6267, %v5198
        %v6269 = vmax.f32 %v6268, %v5201
        %v6270 = vmax.f32 %v6269, %v5203
        %v6271 = vmax.f32 %v6270, %v5206
        %v6272 = vmax.f32 %v6271, %v5208
        %v6273 = vmax.f32 %v6272, %v5211
        %v6274 = vmax.f32 %v6273, %v5213
        %v6275 = vmax.f32 %v6274, %v5216
        %v6276 = vmax.f32 %v6275, %v5218
        %v6277 = vmax.f32 %v6276, %v5221
        %v6278 = vmax.f32 %v6277, %v5223
        %v6279 = vmax.f32 %v5404, %v5406
        %v6280 = vmax.f32 %v6279, %v5409
        %v6281 = vmax.f32 %v6280, %v5411
        %v6282 = vmax.f32 %v6281, %v5414
        %v6283 = vmax.f32 %v6282, %v5416
        %v6284 = vmax.f32 %v6283, %v5419
        %v6285 = vmax.f32 %v6284, %v5421
        %v6286 = vmax.f32 %v6285, %v5424
        %v6287 = vmax.f32 %v6286, %v5426
        %v6288 = vmax.f32 %v6287, %v5429
        %v6289 = vmax.f32 %v6288, %v5431
        %v6290 = vmax.f32 %v6289, %v5434
        %v6291 = vmax.f32 %v6290, %v5436
        %v6292 = vmax.f32 %v6291, %v5439
        %v6293 = vmax.f32 %v6292, %v5441
        %v6294 = vmax.f32 %v6293, %v5444
        %v6295 = vmax.f32 %v6294, %v5446
        %v6296 = vmax.f32 %v6295, %v5449
        %v6297 = vmax.f32 %v6296, %v5451
        %v6298 = vmax.f32 %v6297, %v5454
        %v6299 = vmax.f32 %v6298, %v5456
        %v6300 = vmax.f32 %v6299, %v5459
        %v6301 = vmax.f32 %v6300, %v5461
        %v6302 = vmax.f32 %v6301, %v5464
        %v6303 = vmax.f32 %v6302, %v5466
        %v6304 = vmax.f32 %v6303, %v5469
        %v6305 = vmax.f32 %v6304, %v5471
        %v6306 = vmax.f32 %v6305, %v5474
        %v6307 = vmax.f32 %v6306, %v5476
        %v6308 = vmax.f32 %v6307, %v5479
        %v6309 = vmax.f32 %v6308, %v5481
        %v6310 = vmax.f32 %v6309, %v5484
        %v6311 = vmax.f32 %v6310, %v5486
        %v6312 = vmax.f32 %v6311, %v5489
        %v6313 = vmax.f32 %v6312, %v5491
        %v6314 = vmax.f32 %v6313, %v5494
        %v6315 = vmax.f32 %v6314, %v5496
        %v6316 = vmax.f32 %v6315, %v5499
        %v6317 = vmax.f32 %v6316, %v5501
        %v6318 = vmax.f32 %v6317, %v5504
        %v6319 = vmax.f32 %v6318, %v5506
        %v6320 = vmax.f32 %v6319, %v5509
        %v6321 = vmax.f32 %v6320, %v5511
        %v6322 = vmax.f32 %v6321, %v5514
        %v6323 = vmax.f32 %v6322, %v5516
        %v6324 = vmax.f32 %v6323, %v5519
        %v6325 = vmax.f32 %v6324, %v5521
        %v6326 = vmax.f32 %v6325, %v5524
        %v6327 = vmax.f32 %v6326, %v5526
        %v6328 = vmax.f32 %v6327, %v5529
        %v6329 = vmax.f32 %v6328, %v5531
        %v6330 = vmax.f32 %v6329, %v5534
        %v6331 = vmax.f32 %v6330, %v5536
        %v6332 = vmax.f32 %v6331, %v5539
        %v6333 = vmax.f32 %v6332, %v5541
        %v6334 = vmax.f32 %v6333, %v5544
        %v6335 = vmax.f32 %v6334, %v5546
        %v6336 = vmax.f32 %v6335, %v5549
        %v6337 = vmax.f32 %v6336, %v5551
        %v6338 = vmax.f32 %v6337, %v5554
        %v6339 = vmax.f32 %v6338, %v5556
        %v6340 = vmax.f32 %v6339, %v5559
        %v6341 = vmax.f32 %v6340, %v5561
        %v6342 = vmax.f32 %v5742, %v5744
        %v6343 = vmax.f32 %v6342, %v5747
        %v6344 = vmax.f32 %v6343, %v5749
        %v6345 = vmax.f32 %v6344, %v5752
        %v6346 = vmax.f32 %v6345, %v5754
        %v6347 = vmax.f32 %v6346, %v5757
        %v6348 = vmax.f32 %v6347, %v5759
        %v6349 = vmax.f32 %v6348, %v5762
        %v6350 = vmax.f32 %v6349, %v5764
        %v6351 = vmax.f32 %v6350, %v5767
        %v6352 = vmax.f32 %v6351, %v5769
        %v6353 = vmax.f32 %v6352, %v5772
        %v6354 = vmax.f32 %v6353, %v5774
        %v6355 = vmax.f32 %v6354, %v5777
        %v6356 = vmax.f32 %v6355, %v5779
        %v6357 = vmax.f32 %v6356, %v5782
        %v6358 = vmax.f32 %v6357, %v5784
        %v6359 = vmax.f32 %v6358, %v5787
        %v6360 = vmax.f32 %v6359, %v5789
        %v6361 = vmax.f32 %v6360, %v5792
        %v6362 = vmax.f32 %v6361, %v5794
        %v6363 = vmax.f32 %v6362, %v5797
        %v6364 = vmax.f32 %v6363, %v5799
        %v6365 = vmax.f32 %v6364, %v5802
        %v6366 = vmax.f32 %v6365, %v5804
        %v6367 = vmax.f32 %v6366, %v5807
        %v6368 = vmax.f32 %v6367, %v5809
        %v6369 = vmax.f32 %v6368, %v5812
        %v6370 = vmax.f32 %v6369, %v5814
        %v6371 = vmax.f32 %v6370, %v5817
        %v6372 = vmax.f32 %v6371, %v5819
        %v6373 = vmax.f32 %v6372, %v5822
        %v6374 = vmax.f32 %v6373, %v5824
        %v6375 = vmax.f32 %v6374, %v5827
        %v6376 = vmax.f32 %v6375, %v5829
        %v6377 = vmax.f32 %v6376, %v5832
        %v6378 = vmax.f32 %v6377, %v5834
        %v6379 = vmax.f32 %v6378, %v5837
        %v6380 = vmax.f32 %v6379, %v5839
        %v6381 = vmax.f32 %v6380, %v5842
        %v6382 = vmax.f32 %v6381, %v5844
        %v6383 = vmax.f32 %v6382, %v5847
        %v6384 = vmax.f32 %v6383, %v5849
        %v6385 = vmax.f32 %v6384, %v5852
        %v6386 = vmax.f32 %v6385, %v5854
        %v6387 = vmax.f32 %v6386, %v5857
        %v6388 = vmax.f32 %v6387, %v5859
        %v6389 = vmax.f32 %v6388, %v5862
        %v6390 = vmax.f32 %v6389, %v5864
        %v6391 = vmax.f32 %v6390, %v5867
        %v6392 = vmax.f32 %v6391, %v5869
        %v6393 = vmax.f32 %v6392, %v5872
        %v6394 = vmax.f32 %v6393, %v5874
        %v6395 = vmax.f32 %v6394, %v5877
        %v6396 = vmax.f32 %v6395, %v5879
        %v6397 = vmax.f32 %v6396, %v5882
        %v6398 = vmax.f32 %v6397, %v5884
        %v6399 = vmax.f32 %v6398, %v5887
        %v6400 = vmax.f32 %v6399, %v5889
        %v6401 = vmax.f32 %v6400, %v5892
        %v6402 = vmax.f32 %v6401, %v5894
        %v6403 = vmax.f32 %v6402, %v5897
        %v6404 = vmax.f32 %v6403, %v5899
        %p6405 = scmp.eq.s32.totalorder %s29, 0
        // Predicated region
        $region53: #{tpu_custom_call.1} parent=51 // pred_check
          %p6406 = pneg %p6405
        $region54: #{tpu_custom_call.1} parent=51 // pred_check_branch
          %6408 = sbr.rel (%p6406) target = $region56
        $region55: #{tpu_custom_call.1} parent=51 // pred_region
          %6409 = vst [vmem:[%s340] sm:$0xff] %v5963
          %6410 = vst [vmem:[%s340 + $0x8] sm:$0xff] %v6026
          %6411 = vst [vmem:[%s340 + $0x10] sm:$0xff] %v6089
          %6412 = vst [vmem:[%s340 + $0x18] sm:$0xff] %v6152
          %6413 = vst [vmem:[%s340 + $0x20] sm:$0xff] %v6215
          %6414 = vst [vmem:[%s340 + $0x28] sm:$0xff] %v6278
          %6415 = vst [vmem:[%s340 + $0x30] sm:$0xff] %v6341
          %6416 = vst [vmem:[%s340 + $0x38] sm:$0xff] %v6404
        $region56: #{tpu_custom_call.1} parent=51 // pred_fallthru
          _
        %p6417 = scmp.gt.s32.totalorder %s29, 0
        // Predicated region
        $region57: #{tpu_custom_call.1} parent=51 // pred_check
          %p6418 = pneg %p6417
        $region58: #{tpu_custom_call.1} parent=51 // pred_check_branch
          %6420 = sbr.rel (%p6418) target = $region60
        $region59: #{tpu_custom_call.1} parent=51 // pred_region
          %v6421 = vld [vmem:[%s340] sm:$0xff]
          %v6422 = vld [vmem:[%s340 + $0x8] sm:$0xff]
          %v6423 = vld [vmem:[%s340 + $0x10] sm:$0xff]
          %v6424 = vld [vmem:[%s340 + $0x18] sm:$0xff]
          %v6425 = vld [vmem:[%s340 + $0x20] sm:$0xff]
          %v6426 = vld [vmem:[%s340 + $0x28] sm:$0xff]
          %v6427 = vld [vmem:[%s340 + $0x30] sm:$0xff]
          %v6428 = vld [vmem:[%s340 + $0x38] sm:$0xff]
          %v6429 = vmax.f32 %v6421, %v5963
          %v6430 = vmax.f32 %v6422, %v6026
          %v6431 = vmax.f32 %v6423, %v6089
          %v6432 = vmax.f32 %v6424, %v6152
          %v6433 = vmax.f32 %v6425, %v6215
          %v6434 = vmax.f32 %v6426, %v6278
          %v6435 = vmax.f32 %v6427, %v6341
          %v6436 = vmax.f32 %v6428, %v6404
          %6437 = vst [vmem:[%s340] sm:$0xff] %v6429
          %6438 = vst [vmem:[%s340 + $0x8] sm:$0xff] %v6430
          %6439 = vst [vmem:[%s340 + $0x10] sm:$0xff] %v6431
          %6440 = vst [vmem:[%s340 + $0x18] sm:$0xff] %v6432
          %6441 = vst [vmem:[%s340 + $0x20] sm:$0xff] %v6433
          %6442 = vst [vmem:[%s340 + $0x28] sm:$0xff] %v6434
          %6443 = vst [vmem:[%s340 + $0x30] sm:$0xff] %v6435
          %6444 = vst [vmem:[%s340 + $0x38] sm:$0xff] %v6436
        $region60: #{tpu_custom_call.1} parent=51 // pred_fallthru
          _
        %s6445 = sand.u32 %s230, 1
        %s6446 = scalar_lea.sflag [#allocation3], %s6445
        %s6447 = sand.u32 %s230, 1
        %s6448 = smul.addr %s6447, 64
        %s6449 = scalar_lea.vmem [#allocation2], %s6448
        // Predicated region
        $region61: #{tpu_custom_call.1} parent=51 // pred_check
          %p6450 = pneg %p240
        $region62: #{tpu_custom_call.1} parent=51 // pred_check_branch
          %6452 = sbr.rel (%p6450) target = $region64
        $region63: #{tpu_custom_call.1} parent=51 // pred_region
          %6454 = vsyncadd %s6446, 0
          %s6455 = smul.addr %s28, 8
          %s6456 = smul.addr %s27, 16
          %s6457 = sadd.s32 %s6455, %s6456
          %s6458 = smul.addr %s6457, 8
          %s6459 = scalar_lea.hbm %s8, %s6458
          %s6461 = sshll.u32 %s6449, 4
          %s6462 = int_to_ptr.vmem [resolvable:$true] %s6461
          %s6463 = sshll.u32 %s6459, 4
          %s6464 = int_to_ptr.hbm [resolvable:$true] %s6463
          %6466 = dma.vmem_to_hbm [thread:$0]  %s6462, 1024, %s6464, %s6446
        $region64: #{tpu_custom_call.1} parent=51 // pred_fallthru
          _
      $region52: #{tpu_custom_call.1} parent=5 // pred_fallthru
        _
      %p6467 = scmp.le.s32.totalorder 2, %s17
      // Predicated region
      $region65: #{tpu_custom_call.1} parent=5 // pred_check
        %p6468 = pneg %p6467
      $region66: #{tpu_custom_call.1} parent=5 // pred_check_branch
        %6470 = sbr.rel (%p6468) target = $region68
      $region67: #{tpu_custom_call.1} parent=5 // pred_region
        %s6471 = ssub.s32 %s17, 2
        // Predicated region
        $region69: #{tpu_custom_call.1} parent=67 // pred_check
          %p6472 = pneg %p246
        $region70: #{tpu_custom_call.1} parent=67 // pred_check_branch
          %6474 = sbr.rel (%p6472) target = $region72
        $region71: #{tpu_custom_call.1} parent=67 // pred_region
          %s6475 = sand.u32 %s231, 1
          %s6476 = scalar_lea.sflag [#allocation3], %s6475
          %s6477 = sand.u32 %s231, 1
          %s6478 = smul.addr %s6477, 64
          %s6479 = scalar_lea.vmem [#allocation2], %s6478
          %6481 = dma.done %s6476, 1024
        $region72: #{tpu_custom_call.1} parent=67 // pred_fallthru
          _
      $region68: #{tpu_custom_call.1} parent=5 // pred_fallthru
        _
    $region6: #{tpu_custom_call.1} parent=1 // loop_footer
      %s21 = sadd.s32 1, %s17
    $region7: #{tpu_custom_call.1} parent=1 // loop_footer_branch
      %16 = sbr.rel target = $region3
    $region8: #{tpu_custom_call.1} parent=1 // loop_exit
      _
    %6482 = vsyncpa [#allocation3], 1
    %s6483 = scalar_lea.sflag [#allocation3], 1
    %6484 = vsyncpa %s6483, 1

</llo_original>
